<compile_context>
chip_gen: v5e
topology: v5e:2x2
jax: 0.10.0
libtpu: 0.0.40
codegen_flags: <defaults>
</compile_context>

<pallas_src>
import math

import jax
import jax.numpy as jnp
from jax.experimental import pallas as pl
from jax.experimental.pallas import tpu as pltpu


def _round_up(x: int, m: int) -> int:
    return ((x + m - 1) // m) * m


def _pick_batch_tile(b: int, block_b: int, min_split_batch: int) -> int:
    """Largest legal batch tile; guarantees >=2 grid steps for large b (v7x)."""
    if b > block_b:
        # Tiled path: tile must be a multiple of 8 (sublane constraint); the
        # ragged last block is handled by Pallas edge-block masking.
        return max((block_b // 8) * 8, 8)
    if b >= min_split_batch:
        # Whole batch would fit in one tile, but split into (at least) two grid
        # steps so the second TensorCore on v7x participates.
        return _round_up((b + 1) // 2, 8)
    # Single block equal to the full array: always layout-legal, lowest overhead.
    return b


def sinusoidal_position_embeddings(
    time: jax.Array,
    dim: int,
    *,
    block_b: int = 2048,
    min_split_batch: int = 256,
    out_dtype: jnp.dtype = jnp.float32,
) -> jax.Array:
    """time: (B,) -> (B, dim) = [sin(t*f), cos(t*f)], matching the torch module."""
    assert dim % 2 == 0, "dim must be even"
    assert dim >= 4, "dim must be >= 4 (formula divides by half_dim - 1)"
    b = time.shape[0]
    assert b >= 1
    half = dim // 2
    neg_scale = -(math.log(10000.0) / (half - 1))

    def kernel(t_ref, out_ref):
        # t_ref: (tb, 1) f32, out_ref: (tb, dim).
        # Frequencies computed in-kernel: iota/mul on VALU, exp on the idle EUP.
        idx = jax.lax.broadcasted_iota(jnp.int32, (1, half), 1).astype(jnp.float32)
        freqs = jnp.exp(idx * neg_scale)                      # (1, half) f32
        angles = t_ref[...] * freqs                           # (tb, 1)*(1, half) -> (tb, half)
        # Two static slice stores -- no concatenate / lane relayout.  Unmasked
        # (lane-dense) when half % 128 == 0; otherwise correct but masked.
        out_ref[:, :half] = jnp.sin(angles).astype(out_ref.dtype)
        out_ref[:, half:] = jnp.cos(angles).astype(out_ref.dtype)

    tb = _pick_batch_tile(b, block_b, min_split_batch)
    grid = (pl.cdiv(b, tb),)

    t2d = time.astype(jnp.float32).reshape(b, 1)

    # Scoped-VMEM estimate: double-buffered output tile + the (tb, 1) timestep
    # block (lane-padded to 128 in VMEM) + 1 MiB headroom.  Only override the
    # default scoped limit (16 MiB on v5e) when we would actually exceed it.
    out_itemsize = jnp.dtype(out_dtype).itemsize
    vmem_need = 2 * tb * dim * out_itemsize + 2 * tb * 128 * 4 + (1 << 20)
    vmem_limit = (
        int(min(vmem_need * 5 // 4, 60 * 1024 * 1024)) if vmem_need > (16 << 20) else None
    )

    return pl.pallas_call(
        kernel,
        out_shape=jax.ShapeDtypeStruct((b, dim), out_dtype),
        grid_spec=pltpu.PrefetchScalarGridSpec(
            num_scalar_prefetch=0,
            grid=grid,
            in_specs=[pl.BlockSpec((tb, 1), lambda i: (i, 0))],      # timesteps (tiny)
            out_specs=pl.BlockSpec((tb, dim), lambda i: (i, 0)),     # lane-dense output tile
        ),
        compiler_params=pltpu.CompilerParams(
            dimension_semantics=("parallel",),   # megacore sharding on v7x; harmless on v5e/v6e
            vmem_limit_bytes=vmem_limit,
        ),
    )(t2d)


def _reference(time: jax.Array, dim: int) -> jax.Array:
    half = dim // 2
    scale = math.log(10000.0) / (half - 1)
    freqs = jnp.exp(jnp.arange(half, dtype=jnp.float32) * (-scale))
    angles = time.astype(jnp.float32)[:, None] * freqs[None, :]
    return jnp.concatenate([jnp.sin(angles), jnp.cos(angles)], axis=-1)


if __name__ == "__main__":
    key = jax.random.PRNGKey(0)

    # Case 1: typical diffusion time-embedding size.  batch=256 >= min_split_batch,
    # so the default path picks tb=128 and a 2-step "parallel" grid (exercises
    # tiling / double-buffering and the v7x core split).
    b1, d1 = 256, 256
    t1 = jax.random.randint(key, (b1,), 0, 1000).astype(jnp.float32)
    out1 = jax.block_until_ready(sinusoidal_position_embeddings(t1, d1))
    assert out1.shape == (b1, d1) and out1.dtype == jnp.float32
    assert jnp.allclose(out1, _reference(t1, d1), atol=1e-3, rtol=1e-3), "case1 mismatch"

    # Case 2: small dim (half=32 -> masked second store) and a ragged last batch
    # tile (grid = cdiv(100, 32) = 4), checking edge-block correctness.
    b2, d2 = 100, 64
    t2 = jax.random.uniform(jax.random.fold_in(key, 1), (b2,), minval=0.0, maxval=1000.0)
    out2 = jax.block_until_ready(
        sinusoidal_position_embeddings(t2, d2, block_b=32)
    )
    assert out2.shape == (b2, d2) and out2.dtype == jnp.float32
    assert jnp.allclose(out2, _reference(t2, d2), atol=1e-3, rtol=1e-3), "case2 mismatch"

    print("KERNEL_OK")
</pallas_src>

<mosaic_0001>
module attributes {stable_mosaic.version = 11 : i64} {
  func.func @kernel(%arg0: i32, %arg1: memref<128x1xf32, #tpu.memory_space<vmem>>, %arg2: memref<128x256xf32, #tpu.memory_space<vmem>>) attributes {dimension_semantics = [#tpu.dimension_semantics<parallel>], iteration_bounds = array<i64: 2>, scalar_prefetch = 0 : i64, scratch_operands = 0 : i64, tpu.core_type = #tpu.core_type<tc>, window_params = [{transform_indices = @transform_0, window_bounds = array<i64: 128, 1>}, {transform_indices = @transform_1, window_bounds = array<i64: 128, 256>}]} {
    %0 = tpu.iota {dimensions = array<i32: 1>} : vector<1x128xi32>
    %1 = arith.sitofp %0 : vector<1x128xi32> to vector<1x128xf32>
    %cst = arith.constant -0.0725223646 : f32
    %2 = vector.broadcast %cst : f32 to vector<1x128xf32>
    %3 = arith.mulf %1, %2 : vector<1x128xf32>
    %4 = math.exp %3 : vector<1x128xf32>
    %c0 = arith.constant 0 : index
    %c0_0 = arith.constant 0 : index
    %5 = vector.load %arg1[%c0, %c0_0] : memref<128x1xf32, #tpu.memory_space<vmem>>, vector<128x1xf32>
    %6 = vector.broadcast %5 : vector<128x1xf32> to vector<128x128xf32>
    %7 = vector.broadcast %4 : vector<1x128xf32> to vector<128x128xf32>
    %8 = arith.mulf %6, %7 : vector<128x128xf32>
    %9 = math.sin %8 : vector<128x128xf32>
    %c0_1 = arith.constant 0 : index
    %c0_2 = arith.constant 0 : index
    %10 = vector.load %arg2[%c0_1, %c0_2] : memref<128x256xf32, #tpu.memory_space<vmem>>, vector<128x128xf32>
    tpu.vector_store %arg2[%c0_1, %c0_2], %9 {strides = array<i32>} : memref<128x256xf32, #tpu.memory_space<vmem>>, vector<128x128xf32>,
    %11 = math.cos %8 : vector<128x128xf32>
    %c0_3 = arith.constant 0 : index
    %c128 = arith.constant 128 : index
    %12 = vector.load %arg2[%c0_3, %c128] : memref<128x256xf32, #tpu.memory_space<vmem>>, vector<128x128xf32>
    tpu.vector_store %arg2[%c0_3, %c128], %11 {strides = array<i32>} : memref<128x256xf32, #tpu.memory_space<vmem>>, vector<128x128xf32>,
    return
  }
  func.func @transform_0(%arg0: i32) -> (i32, i32) {
    %c0_i32 = arith.constant 0 : i32
    %c0_i32_0 = arith.constant 0 : i32
    return %arg0, %c0_i32 : i32, i32
  }
  func.func @transform_1(%arg0: i32) -> (i32, i32) {
    %c0_i32 = arith.constant 0 : i32
    %c0_i32_0 = arith.constant 0 : i32
    return %arg0, %c0_i32 : i32, i32
  }
}

</mosaic_0001>

<llo_original>
// kernel: tpu_custom_call.1
$region0: #{tpu_custom_call.1}
  #allocation0 [shape = 'u32[]', space=smem, size = 0x4, offset = 0x4, fixed_abs, tag = 'smem constant byte address 0x4 - core index']
  #allocation1 [shape = 'u32[72,128]{1,0:T(1,128)}', space=vmem, size = 0x9000, scoped, tag = 'internal scratch']
  %s0 = inlined_call_operand.vmem [shape: f32[256,1], index: 0, kind: input, shape index: {}]
  %s1 = inlined_call_operand.hbm [shape: f32[256,256], index: 1, kind: output, shape index: {}]
  %s2 = sld [smem:[#allocation0]]
  $region37: #{tpu_custom_call.1} parent=0
    _
  %s4 = ssub.s32 1, %s2
  %s5 = scalar_select 0, %s4, %s2
  $region1: #{tpu_custom_call.1} parent=0
    #allocation2 [shape = 'u8[262144]{0}', space=vmem, size = 0x40000, scoped, tag = 'output window, operand 0']
    #allocation3 [shape = 's32[2]{0}', space=sflag, size = 0x8, scoped, tag = 'scoped memory for tpu_custom_call.1']
    %6 = vsyncpa [#allocation3], 0
    %s7 = scalar_lea.sflag [#allocation3], 1
    %8 = vsyncpa %s7, 0
    loop: start=0, step=1, limit=4
    $region2: #{tpu_custom_call.1} parent=1 // loop_pre_header
      _
    $region3: #{tpu_custom_call.1} parent=1 // loop_header
      %s10 = sphi 0, %s14
      %p11 = scmp.ge.s32.totalorder %s10, 4
      %s20 = sphi 0, %s22
      %s23 = sphi 0, %s20
      %s24 = sphi 0, %s23
      %s40 = sphi 0, %s24
      %s46 = sphi 0, %s48
      %s49 = sphi 0, %s46
      %s50 = sphi 0, %s49
      %s66 = sphi 0, %s50
    $region4: #{tpu_custom_call.1} parent=1 // loop_header_branch
      %13 = sbr.rel (%p11) target = $region8
    $region5: #{tpu_custom_call.1} parent=1 // loop_body
      %s15 = ssub.s32 %s10, 1
      %s16 = ssub.s32 %s10, 2
      %s17 = sadd.s32 %s10, 1
      %s18 = ssub.s32 %s10, %s17
      %p19 = scmp.eq.s32.totalorder %s18, 0
      %s21 = sadd.s32 %s20, 1
      %s22 = scalar_select %p19, %s20, %s21
      %p25 = pneg %p19
      %p26 = scmp.eq.s32.totalorder %s10, 1
      %p27 = por %p25, %p26
      %p28 = scmp.ne.s32.totalorder %s20, %s23
      %p29 = scmp.eq.s32.totalorder %s10, 0
      %p30 = por %p28, %p29
      %p31 = scmp.ne.s32.totalorder %s20, %s23
      %p32 = scmp.eq.s32.totalorder %s15, 1
      %p33 = por %p31, %p32
      %p34 = scmp.ne.s32.totalorder %s23, %s24
      %p35 = scmp.eq.s32.totalorder %s15, 0
      %p36 = por %p34, %p35
      %p37 = scmp.ne.s32.totalorder %s23, %s24
      %p38 = scmp.eq.s32.totalorder %s16, 1
      %p39 = por %p37, %p38
      %p41 = scmp.ne.s32.totalorder %s24, %s40
      %p42 = scmp.eq.s32.totalorder %s16, 0
      %p43 = por %p41, %p42
      %s44 = ssub.s32 %s10, %s17
      %p45 = scmp.eq.s32.totalorder %s44, 0
      %s47 = sadd.s32 %s46, 1
      %s48 = scalar_select %p45, %s46, %s47
      %p51 = pneg %p45
      %p52 = scmp.eq.s32.totalorder %s10, 1
      %p53 = por %p51, %p52
      %p54 = scmp.ne.s32.totalorder %s46, %s49
      %p55 = scmp.eq.s32.totalorder %s10, 0
      %p56 = por %p54, %p55
      %p57 = scmp.ne.s32.totalorder %s46, %s49
      %p58 = scmp.eq.s32.totalorder %s15, 1
      %p59 = por %p57, %p58
      %p60 = scmp.ne.s32.totalorder %s49, %s50
      %p61 = scmp.eq.s32.totalorder %s15, 0
      %p62 = por %p60, %p61
      %p63 = scmp.ne.s32.totalorder %s49, %s50
      %p64 = scmp.eq.s32.totalorder %s16, 1
      %p65 = por %p63, %p64
      %p67 = scmp.ne.s32.totalorder %s50, %s66
      %p68 = scmp.eq.s32.totalorder %s16, 0
      %p69 = por %p67, %p68
      %p70 = scmp.le.s32.totalorder 1, %s10
      %p71 = scmp.lt.s32.totalorder %s10, 3
      %p72 = pnand %p70, %p71
      %p73 = pneg %p72
      // Predicated region
      $region9: #{tpu_custom_call.1} parent=5 // pred_check
        _
      $region10: #{tpu_custom_call.1} parent=5 // pred_check_branch
        %75 = sbr.rel (%p72) target = $region12
      $region11: #{tpu_custom_call.1} parent=5 // pred_region
        %s76 = ssub.s32 %s10, 1
      $region12: #{tpu_custom_call.1} parent=5 // pred_fallthru
        _
      %p77 = scmp.lt.s32.totalorder %s10, 2
      // Predicated region
      $region13: #{tpu_custom_call.1} parent=5 // pred_check
        %p78 = pneg %p77
      $region14: #{tpu_custom_call.1} parent=5 // pred_check_branch
        %80 = sbr.rel (%p78) target = $region16
      $region15: #{tpu_custom_call.1} parent=5 // pred_region
        // Predicated region
        $region17: #{tpu_custom_call.1} parent=15 // pred_check
          %p81 = pneg %p30
        $region18: #{tpu_custom_call.1} parent=15 // pred_check_branch
          %83 = sbr.rel (%p81) target = $region20
        $region19: #{tpu_custom_call.1} parent=15 // pred_region
          %s84 = smul.u32 16, %s10
          %p85 = scmp.lt.s32.totalorder %s84, 31
          %s86 = scalar_select %p85, %s84, 31
          %s87 = smul.addr %s86, 8
          %s88 = scalar_lea.vmem %s0, %s87
          %s89 = smul.u32 16, %s10
        $region20: #{tpu_custom_call.1} parent=15 // pred_fallthru
          _
      $region16: #{tpu_custom_call.1} parent=5 // pred_fallthru
        _
      %p90 = scmp.le.s32.totalorder 1, %s10
      %p91 = scmp.lt.s32.totalorder %s10, 3
      %p92 = pnand %p90, %p91
      %p93 = pneg %p92
      // Predicated region
      $region21: #{tpu_custom_call.1} parent=5 // pred_check
        _
      $region22: #{tpu_custom_call.1} parent=5 // pred_check_branch
        %95 = sbr.rel (%p92) target = $region24
      $region23: #{tpu_custom_call.1} parent=5 // pred_region
        %s96 = ssub.s32 %s10, 1
        %s97 = smul.u32 16, %s15
        %p98 = scmp.lt.s32.totalorder %s97, 31
        %s99 = scalar_select %p98, %s97, 31
        %s100 = smul.addr %s99, 8
        %s101 = scalar_lea.vmem %s0, %s100
        %p102 = pneg %p36
        %p103 = pneg %p33
        %p104 = pneg %p62
        %p105 = pneg %p59
        %s106 = sand.u32 %s49, 1
        %s107 = scalar_lea.sflag [#allocation3], %s106
        %s108 = sand.u32 %s49, 1
        %s109 = smul.addr %s108, 256
        %s110 = scalar_lea.vmem [#allocation2], %s109
        %s111 = smul.u32 16, %s15
        %p112 = scmp.lt.s32.totalorder %s111, 31
        %s113 = scalar_select %p112, %s111, 31
        %s114 = smul.addr %s113, 8
        %s115 = scalar_lea.vmem %s0, %s114
        %s116 = smul.u32 16, %s15
        %s117 = smul.u32 16, %s15
        %v118 = vlaneseq
        %v119 = vand.u32 %v118, 127
        %v120 = vcvt.s32.f32 %v119
        %v121 = vmul.f32 %v120, -0.072522365
        %v122 = vmul.f32 %v121, 1.442695
        %v123 = vpow.pop %v122
        %v124 = vld [vmem:[%s115] sm:$0xff]
        %v125 = vld [vmem:[%s115 + $0x8] sm:$0xff]
        %v126 = vld [vmem:[%s115 + $0x10] sm:$0xff]
        %v127 = vld [vmem:[%s115 + $0x18] sm:$0xff]
        %v128 = vld [vmem:[%s115 + $0x20] sm:$0xff]
        %v129 = vld [vmem:[%s115 + $0x28] sm:$0xff]
        %v130 = vld [vmem:[%s115 + $0x30] sm:$0xff]
        %v131 = vld [vmem:[%s115 + $0x38] sm:$0xff]
        %v132 = vld [vmem:[%s115 + $0x40] sm:$0xff]
        %v133 = vld [vmem:[%s115 + $0x48] sm:$0xff]
        %v134 = vld [vmem:[%s115 + $0x50] sm:$0xff]
        %v135 = vld [vmem:[%s115 + $0x58] sm:$0xff]
        %v136 = vld [vmem:[%s115 + $0x60] sm:$0xff]
        %v137 = vld [vmem:[%s115 + $0x68] sm:$0xff]
        %v138 = vld [vmem:[%s115 + $0x70] sm:$0xff]
        %v139 = vld [vmem:[%s115 + $0x78] sm:$0xff]
        %141 = vset.pattern.permute.xlu0 0
        %142 = vperm.xlu0 %141, %v124
        %v143 = vpop.permute.xlu0 %142
        %146 = vset.pattern.permute.xlu0 0
        %147 = vperm.xlu0 %146, %v125
        %v148 = vpop.permute.xlu0 %147
        %151 = vset.pattern.permute.xlu0 0
        %152 = vperm.xlu0 %151, %v126
        %v153 = vpop.permute.xlu0 %152
        %156 = vset.pattern.permute.xlu0 0
        %157 = vperm.xlu0 %156, %v127
        %v158 = vpop.permute.xlu0 %157
        %161 = vset.pattern.permute.xlu0 0
        %162 = vperm.xlu0 %161, %v128
        %v163 = vpop.permute.xlu0 %162
        %166 = vset.pattern.permute.xlu0 0
        %167 = vperm.xlu0 %166, %v129
        %v168 = vpop.permute.xlu0 %167
        %171 = vset.pattern.permute.xlu0 0
        %172 = vperm.xlu0 %171, %v130
        %v173 = vpop.permute.xlu0 %172
        %176 = vset.pattern.permute.xlu0 0
        %177 = vperm.xlu0 %176, %v131
        %v178 = vpop.permute.xlu0 %177
        %181 = vset.pattern.permute.xlu0 0
        %182 = vperm.xlu0 %181, %v132
        %v183 = vpop.permute.xlu0 %182
        %186 = vset.pattern.permute.xlu0 0
        %187 = vperm.xlu0 %186, %v133
        %v188 = vpop.permute.xlu0 %187
        %191 = vset.pattern.permute.xlu0 0
        %192 = vperm.xlu0 %191, %v134
        %v193 = vpop.permute.xlu0 %192
        %196 = vset.pattern.permute.xlu0 0
        %197 = vperm.xlu0 %196, %v135
        %v198 = vpop.permute.xlu0 %197
        %201 = vset.pattern.permute.xlu0 0
        %202 = vperm.xlu0 %201, %v136
        %v203 = vpop.permute.xlu0 %202
        %206 = vset.pattern.permute.xlu0 0
        %207 = vperm.xlu0 %206, %v137
        %v208 = vpop.permute.xlu0 %207
        %211 = vset.pattern.permute.xlu0 0
        %212 = vperm.xlu0 %211, %v138
        %v213 = vpop.permute.xlu0 %212
        %216 = vset.pattern.permute.xlu0 0
        %217 = vperm.xlu0 %216, %v139
        %v218 = vpop.permute.xlu0 %217
        %v220 = vmul.f32 %v143, %v123
        %v221 = vmul.f32 %v148, %v123
        %v222 = vmul.f32 %v153, %v123
        %v223 = vmul.f32 %v158, %v123
        %v224 = vmul.f32 %v163, %v123
        %v225 = vmul.f32 %v168, %v123
        %v226 = vmul.f32 %v173, %v123
        %v227 = vmul.f32 %v178, %v123
        %v228 = vmul.f32 %v183, %v123
        %v229 = vmul.f32 %v188, %v123
        %v230 = vmul.f32 %v193, %v123
        %v231 = vmul.f32 %v198, %v123
        %v232 = vmul.f32 %v203, %v123
        %v233 = vmul.f32 %v208, %v123
        %v234 = vmul.f32 %v213, %v123
        %v235 = vmul.f32 %v218, %v123
        %v236 = vand.u32 2147483647, %v220
        %vm237 = vcmp.le.f32.partialorder %v236, 0.7853982
        %vm238 = vcmp.lt.s32.totalorder %v220, 0
        %v239 = vand.u32 %v220, 2139095040
        %v240 = vshrl.u32 %v239, 23
        %v241 = vsub.s32 %v240, 127
        %v242 = vand.u32 2147483647, %v220
        %v243 = vand.u32 %v242, 8388607
        %v244 = vor.u32 %v243, 8388608
        %v245 = vsub.s32 0, %v244
        %v246 = vadd.s32 %v241, 1
        %vm247 = vcmp.gt.s32.totalorder %v246, 0
        %v248 = vsel %vm247, %v246, 0
        %v249 = vshrl.u32 %v248, 5
        %v250 = vand.u32 %v248, 31
        %v251 = vsub.s32 32, %v250
        %v252 = vshrl.u32 683565275, %v251
        %v253 = vshll.u32 683565275, %v250
        %v254 = vshrl.u32 2475754826, %v251
        %v255 = vor.u32 %v253, %v254
        %v256 = vshll.u32 2475754826, %v250
        %v257 = vshrl.u32 2131351028, %v251
        %v258 = vor.u32 %v256, %v257
        %v259 = vshll.u32 2131351028, %v250
        %v260 = vshrl.u32 2102212464, %v251
        %v261 = vor.u32 %v259, %v260
        %v262 = vshll.u32 2102212464, %v250
        %v263 = vshrl.u32 920167782, %v251
        %v264 = vor.u32 %v262, %v263
        %v265 = vshll.u32 920167782, %v250
        %v266 = vshrl.u32 1326507024, %v251
        %v267 = vor.u32 %v265, %v266
        %vm268 = vcmp.lt.s32.totalorder %v249, 1
        %vm269 = vcmp.lt.s32.totalorder %v249, 2
        %vm270 = vcmp.lt.s32.totalorder %v249, 3
        %vm271 = vcmp.lt.s32.totalorder %v249, 4
        %v272 = vsel %vm268, %v252, %v255
        %v273 = vsel %vm271, %v261, 2102212464
        %v274 = vsel %vm270, %v258, %v273
        %v275 = vsel %vm269, %v272, %v274
        %v276 = vsel %vm268, %v255, %v258
        %v277 = vsel %vm271, %v264, 920167782
        %v278 = vsel %vm270, %v261, %v277
        %v279 = vsel %vm269, %v276, %v278
        %v280 = vsel %vm268, %v258, %v261
        %v281 = vsel %vm271, %v267, 1326507024
        %v282 = vsel %vm270, %v264, %v281
        %v283 = vsel %vm269, %v280, %v282
        %v284 = vshll.u32 %v244, 8
        %v285 = vand.u32 %v284, 65535
        %v286 = vshrl.u32 %v284, 16
        %v287 = vand.u32 %v283, 65535
        %v288 = vshrl.u32 %v283, 16
        %v289 = vmul.u32 %v285, %v287
        %v290 = vmul.u32 %v285, %v288
        %v291 = vmul.u32 %v286, %v287
        %v292 = vmul.u32 %v286, %v288
        %v293 = vshll.u32 %v290, 16
        %v294 = vshrl.u32 %v290, 16
        %v295 = vshll.u32 %v291, 16
        %v296 = vshrl.u32 %v291, 16
        %vm297 = vc.u32 %v289, %v293
        %v298 = vsel %vm297, 1, 0
        %v299 = vadd.s32 %v289, %v293
        %v300 = vadd.s32 %v292, %v298
        %vm301 = vc.u32 %v299, %v295
        %v302 = vsel %vm301, 1, 0
        %v303 = vadd.s32 %v299, %v295
        %v304 = vadd.s32 %v300, %v302
        %v305 = vadd.s32 %v304, %v294
        %v306 = vadd.s32 %v305, %v296
        %v307 = vand.u32 %v284, 65535
        %v308 = vshrl.u32 %v284, 16
        %v309 = vand.u32 %v279, 65535
        %v310 = vshrl.u32 %v279, 16
        %v311 = vmul.u32 %v307, %v309
        %v312 = vmul.u32 %v307, %v310
        %v313 = vmul.u32 %v308, %v309
        %v314 = vmul.u32 %v308, %v310
        %v315 = vshll.u32 %v312, 16
        %v316 = vshrl.u32 %v312, 16
        %v317 = vshll.u32 %v313, 16
        %v318 = vshrl.u32 %v313, 16
        %vm319 = vc.u32 %v311, %v315
        %v320 = vsel %vm319, 1, 0
        %v321 = vadd.s32 %v311, %v315
        %v322 = vadd.s32 %v314, %v320
        %vm323 = vc.u32 %v321, %v317
        %v324 = vsel %vm323, 1, 0
        %v325 = vadd.s32 %v321, %v317
        %v326 = vadd.s32 %v322, %v324
        %v327 = vadd.s32 %v326, %v316
        %v328 = vadd.s32 %v327, %v318
        %v329 = vmul.u32 %v284, %v275
        %v330 = vadd.s32 %v306, %v325
        %vm331 = vc.u32 %v306, %v325
        %v332 = vadd.s32 %v328, 1
        %v333 = vsel %vm331, %v332, %v328
        %v334 = vadd.s32 %v329, %v333
        %v335 = vadd.s32 %v334, 536870912
        %v336 = vshrl.u32 %v335, 30
        %v337 = vshll.u32 %v336, 30
        %v338 = vsub.s32 %v334, %v337
        %vm339 = vcmp.lt.s32.totalorder %v338, 0
        %v340 = vsub.s32 0, %v338
        %v341 = vsel %vm339, %v340, %v338
        %v342 = vclz %v341
        %v343 = vsub.s32 %v342, 2
        %vm344 = vcmp.gt.s32.totalorder 0, %v343
        %v345 = vsel %vm344, 0, %v343
        %v346 = vsub.s32 32, %v345
        %v347 = vshll.u32 %v338, %v345
        %v348 = vshrl.u32 %v330, %v346
        %v349 = vor.u32 %v347, %v348
        %v350 = vsub.s32 4294967266, %v345
        %v351 = vadd.s32 %v350, 127
        %v352 = vshll.u32 %v351, 23
        %v353 = vor.u32 4788187, %v352
        %v354 = vand.u32 2147483647, %v353
        %v356 = vcvt.s32.f32 %v349
        %v357 = vmul.f32 %v356, %v354
        %v358 = vxor.u32 %v357, 2147483648
        %v359 = vsel %vm238, %v358, %v357
        %v360 = vsub.s32 4, %v336
        %v361 = vsel %vm238, %v360, %v336
        %v362 = vsel %vm237, %v220, %v359
        %v363 = vsel %vm237, 0, %v361
        %v364 = vmul.f32 %v362, %v362
        %v365 = vmul.f32 %v364, -0.001358992
        %v366 = vadd.f32 %v365, 0.041655596
        %v367 = vmul.f32 %v364, %v366
        %v368 = vadd.f32 %v367, -0.4999988
        %v369 = vmul.f32 %v364, %v368
        %v370 = vadd.f32 1.0, %v369
        %v371 = vmul.f32 %v362, %v362
        %v372 = vmul.f32 %v371, -0.00019511016
        %v373 = vadd.f32 %v372, 0.008332121
        %v374 = vmul.f32 %v371, %v373
        %v375 = vadd.f32 %v374, -0.16666654
        %v376 = vmul.f32 %v371, %v375
        %v377 = vadd.f32 %v376, 1.0
        %v378 = vmul.f32 %v377, %v362
        %vm379 = vweird.f32 %v220
        %v380 = vadd.s32 %v363, 3
        %v381 = vand.u32 %v380, 3
        %vm382 = vcmp.lt.s32.totalorder %v381, 2
        %vm383 = vcmp.eq.s32.totalorder %v381, 0
        %v384 = vxor.u32 %v378, 2147483648
        %v385 = vsel %vm383, %v370, %v384
        %vm386 = vcmp.eq.s32.totalorder %v381, 2
        %v387 = vxor.u32 %v370, 2147483648
        %v388 = vsel %vm386, %v387, %v378
        %v389 = vsel %vm382, %v385, %v388
        %v390 = vsel %vm379, nan, %v389
        %v391 = vand.u32 2147483647, %v221
        %vm392 = vcmp.le.f32.partialorder %v391, 0.7853982
        %vm393 = vcmp.lt.s32.totalorder %v221, 0
        %v394 = vand.u32 %v221, 2139095040
        %v395 = vshrl.u32 %v394, 23
        %v396 = vsub.s32 %v395, 127
        %v397 = vand.u32 2147483647, %v221
        %v398 = vand.u32 %v397, 8388607
        %v399 = vor.u32 %v398, 8388608
        %v400 = vsub.s32 0, %v399
        %v401 = vadd.s32 %v396, 1
        %vm402 = vcmp.gt.s32.totalorder %v401, 0
        %v403 = vsel %vm402, %v401, 0
        %v404 = vshrl.u32 %v403, 5
        %v405 = vand.u32 %v403, 31
        %v406 = vsub.s32 32, %v405
        %v407 = vshrl.u32 683565275, %v406
        %v408 = vshll.u32 683565275, %v405
        %v409 = vshrl.u32 2475754826, %v406
        %v410 = vor.u32 %v408, %v409
        %v411 = vshll.u32 2475754826, %v405
        %v412 = vshrl.u32 2131351028, %v406
        %v413 = vor.u32 %v411, %v412
        %v414 = vshll.u32 2131351028, %v405
        %v415 = vshrl.u32 2102212464, %v406
        %v416 = vor.u32 %v414, %v415
        %v417 = vshll.u32 2102212464, %v405
        %v418 = vshrl.u32 920167782, %v406
        %v419 = vor.u32 %v417, %v418
        %v420 = vshll.u32 920167782, %v405
        %v421 = vshrl.u32 1326507024, %v406
        %v422 = vor.u32 %v420, %v421
        %vm423 = vcmp.lt.s32.totalorder %v404, 1
        %vm424 = vcmp.lt.s32.totalorder %v404, 2
        %vm425 = vcmp.lt.s32.totalorder %v404, 3
        %vm426 = vcmp.lt.s32.totalorder %v404, 4
        %v427 = vsel %vm423, %v407, %v410
        %v428 = vsel %vm426, %v416, 2102212464
        %v429 = vsel %vm425, %v413, %v428
        %v430 = vsel %vm424, %v427, %v429
        %v431 = vsel %vm423, %v410, %v413
        %v432 = vsel %vm426, %v419, 920167782
        %v433 = vsel %vm425, %v416, %v432
        %v434 = vsel %vm424, %v431, %v433
        %v435 = vsel %vm423, %v413, %v416
        %v436 = vsel %vm426, %v422, 1326507024
        %v437 = vsel %vm425, %v419, %v436
        %v438 = vsel %vm424, %v435, %v437
        %v439 = vshll.u32 %v399, 8
        %v440 = vand.u32 %v439, 65535
        %v441 = vshrl.u32 %v439, 16
        %v442 = vand.u32 %v438, 65535
        %v443 = vshrl.u32 %v438, 16
        %v444 = vmul.u32 %v440, %v442
        %v445 = vmul.u32 %v440, %v443
        %v446 = vmul.u32 %v441, %v442
        %v447 = vmul.u32 %v441, %v443
        %v448 = vshll.u32 %v445, 16
        %v449 = vshrl.u32 %v445, 16
        %v450 = vshll.u32 %v446, 16
        %v451 = vshrl.u32 %v446, 16
        %vm452 = vc.u32 %v444, %v448
        %v453 = vsel %vm452, 1, 0
        %v454 = vadd.s32 %v444, %v448
        %v455 = vadd.s32 %v447, %v453
        %vm456 = vc.u32 %v454, %v450
        %v457 = vsel %vm456, 1, 0
        %v458 = vadd.s32 %v454, %v450
        %v459 = vadd.s32 %v455, %v457
        %v460 = vadd.s32 %v459, %v449
        %v461 = vadd.s32 %v460, %v451
        %v462 = vand.u32 %v439, 65535
        %v463 = vshrl.u32 %v439, 16
        %v464 = vand.u32 %v434, 65535
        %v465 = vshrl.u32 %v434, 16
        %v466 = vmul.u32 %v462, %v464
        %v467 = vmul.u32 %v462, %v465
        %v468 = vmul.u32 %v463, %v464
        %v469 = vmul.u32 %v463, %v465
        %v470 = vshll.u32 %v467, 16
        %v471 = vshrl.u32 %v467, 16
        %v472 = vshll.u32 %v468, 16
        %v473 = vshrl.u32 %v468, 16
        %vm474 = vc.u32 %v466, %v470
        %v475 = vsel %vm474, 1, 0
        %v476 = vadd.s32 %v466, %v470
        %v477 = vadd.s32 %v469, %v475
        %vm478 = vc.u32 %v476, %v472
        %v479 = vsel %vm478, 1, 0
        %v480 = vadd.s32 %v476, %v472
        %v481 = vadd.s32 %v477, %v479
        %v482 = vadd.s32 %v481, %v471
        %v483 = vadd.s32 %v482, %v473
        %v484 = vmul.u32 %v439, %v430
        %v485 = vadd.s32 %v461, %v480
        %vm486 = vc.u32 %v461, %v480
        %v487 = vadd.s32 %v483, 1
        %v488 = vsel %vm486, %v487, %v483
        %v489 = vadd.s32 %v484, %v488
        %v490 = vadd.s32 %v489, 536870912
        %v491 = vshrl.u32 %v490, 30
        %v492 = vshll.u32 %v491, 30
        %v493 = vsub.s32 %v489, %v492
        %vm494 = vcmp.lt.s32.totalorder %v493, 0
        %v495 = vsub.s32 0, %v493
        %v496 = vsel %vm494, %v495, %v493
        %v497 = vclz %v496
        %v498 = vsub.s32 %v497, 2
        %vm499 = vcmp.gt.s32.totalorder 0, %v498
        %v500 = vsel %vm499, 0, %v498
        %v501 = vsub.s32 32, %v500
        %v502 = vshll.u32 %v493, %v500
        %v503 = vshrl.u32 %v485, %v501
        %v504 = vor.u32 %v502, %v503
        %v505 = vsub.s32 4294967266, %v500
        %v506 = vadd.s32 %v505, 127
        %v507 = vshll.u32 %v506, 23
        %v508 = vor.u32 4788187, %v507
        %v509 = vand.u32 2147483647, %v508
        %v511 = vcvt.s32.f32 %v504
        %v512 = vmul.f32 %v511, %v509
        %v513 = vxor.u32 %v512, 2147483648
        %v514 = vsel %vm393, %v513, %v512
        %v515 = vsub.s32 4, %v491
        %v516 = vsel %vm393, %v515, %v491
        %v517 = vsel %vm392, %v221, %v514
        %v518 = vsel %vm392, 0, %v516
        %v519 = vmul.f32 %v517, %v517
        %v520 = vmul.f32 %v519, -0.001358992
        %v521 = vadd.f32 %v520, 0.041655596
        %v522 = vmul.f32 %v519, %v521
        %v523 = vadd.f32 %v522, -0.4999988
        %v524 = vmul.f32 %v519, %v523
        %v525 = vadd.f32 1.0, %v524
        %v526 = vmul.f32 %v517, %v517
        %v527 = vmul.f32 %v526, -0.00019511016
        %v528 = vadd.f32 %v527, 0.008332121
        %v529 = vmul.f32 %v526, %v528
        %v530 = vadd.f32 %v529, -0.16666654
        %v531 = vmul.f32 %v526, %v530
        %v532 = vadd.f32 %v531, 1.0
        %v533 = vmul.f32 %v532, %v517
        %vm534 = vweird.f32 %v221
        %v535 = vadd.s32 %v518, 3
        %v536 = vand.u32 %v535, 3
        %vm537 = vcmp.lt.s32.totalorder %v536, 2
        %vm538 = vcmp.eq.s32.totalorder %v536, 0
        %v539 = vxor.u32 %v533, 2147483648
        %v540 = vsel %vm538, %v525, %v539
        %vm541 = vcmp.eq.s32.totalorder %v536, 2
        %v542 = vxor.u32 %v525, 2147483648
        %v543 = vsel %vm541, %v542, %v533
        %v544 = vsel %vm537, %v540, %v543
        %v545 = vsel %vm534, nan, %v544
        %v546 = vand.u32 2147483647, %v222
        %vm547 = vcmp.le.f32.partialorder %v546, 0.7853982
        %vm548 = vcmp.lt.s32.totalorder %v222, 0
        %v549 = vand.u32 %v222, 2139095040
        %v550 = vshrl.u32 %v549, 23
        %v551 = vsub.s32 %v550, 127
        %v552 = vand.u32 2147483647, %v222
        %v553 = vand.u32 %v552, 8388607
        %v554 = vor.u32 %v553, 8388608
        %v555 = vsub.s32 0, %v554
        %v556 = vadd.s32 %v551, 1
        %vm557 = vcmp.gt.s32.totalorder %v556, 0
        %v558 = vsel %vm557, %v556, 0
        %v559 = vshrl.u32 %v558, 5
        %v560 = vand.u32 %v558, 31
        %v561 = vsub.s32 32, %v560
        %v562 = vshrl.u32 683565275, %v561
        %v563 = vshll.u32 683565275, %v560
        %v564 = vshrl.u32 2475754826, %v561
        %v565 = vor.u32 %v563, %v564
        %v566 = vshll.u32 2475754826, %v560
        %v567 = vshrl.u32 2131351028, %v561
        %v568 = vor.u32 %v566, %v567
        %v569 = vshll.u32 2131351028, %v560
        %v570 = vshrl.u32 2102212464, %v561
        %v571 = vor.u32 %v569, %v570
        %v572 = vshll.u32 2102212464, %v560
        %v573 = vshrl.u32 920167782, %v561
        %v574 = vor.u32 %v572, %v573
        %v575 = vshll.u32 920167782, %v560
        %v576 = vshrl.u32 1326507024, %v561
        %v577 = vor.u32 %v575, %v576
        %vm578 = vcmp.lt.s32.totalorder %v559, 1
        %vm579 = vcmp.lt.s32.totalorder %v559, 2
        %vm580 = vcmp.lt.s32.totalorder %v559, 3
        %vm581 = vcmp.lt.s32.totalorder %v559, 4
        %v582 = vsel %vm578, %v562, %v565
        %v583 = vsel %vm581, %v571, 2102212464
        %v584 = vsel %vm580, %v568, %v583
        %v585 = vsel %vm579, %v582, %v584
        %v586 = vsel %vm578, %v565, %v568
        %v587 = vsel %vm581, %v574, 920167782
        %v588 = vsel %vm580, %v571, %v587
        %v589 = vsel %vm579, %v586, %v588
        %v590 = vsel %vm578, %v568, %v571
        %v591 = vsel %vm581, %v577, 1326507024
        %v592 = vsel %vm580, %v574, %v591
        %v593 = vsel %vm579, %v590, %v592
        %v594 = vshll.u32 %v554, 8
        %v595 = vand.u32 %v594, 65535
        %v596 = vshrl.u32 %v594, 16
        %v597 = vand.u32 %v593, 65535
        %v598 = vshrl.u32 %v593, 16
        %v599 = vmul.u32 %v595, %v597
        %v600 = vmul.u32 %v595, %v598
        %v601 = vmul.u32 %v596, %v597
        %v602 = vmul.u32 %v596, %v598
        %v603 = vshll.u32 %v600, 16
        %v604 = vshrl.u32 %v600, 16
        %v605 = vshll.u32 %v601, 16
        %v606 = vshrl.u32 %v601, 16
        %vm607 = vc.u32 %v599, %v603
        %v608 = vsel %vm607, 1, 0
        %v609 = vadd.s32 %v599, %v603
        %v610 = vadd.s32 %v602, %v608
        %vm611 = vc.u32 %v609, %v605
        %v612 = vsel %vm611, 1, 0
        %v613 = vadd.s32 %v609, %v605
        %v614 = vadd.s32 %v610, %v612
        %v615 = vadd.s32 %v614, %v604
        %v616 = vadd.s32 %v615, %v606
        %v617 = vand.u32 %v594, 65535
        %v618 = vshrl.u32 %v594, 16
        %v619 = vand.u32 %v589, 65535
        %v620 = vshrl.u32 %v589, 16
        %v621 = vmul.u32 %v617, %v619
        %v622 = vmul.u32 %v617, %v620
        %v623 = vmul.u32 %v618, %v619
        %v624 = vmul.u32 %v618, %v620
        %v625 = vshll.u32 %v622, 16
        %v626 = vshrl.u32 %v622, 16
        %v627 = vshll.u32 %v623, 16
        %v628 = vshrl.u32 %v623, 16
        %vm629 = vc.u32 %v621, %v625
        %v630 = vsel %vm629, 1, 0
        %v631 = vadd.s32 %v621, %v625
        %v632 = vadd.s32 %v624, %v630
        %vm633 = vc.u32 %v631, %v627
        %v634 = vsel %vm633, 1, 0
        %v635 = vadd.s32 %v631, %v627
        %v636 = vadd.s32 %v632, %v634
        %v637 = vadd.s32 %v636, %v626
        %v638 = vadd.s32 %v637, %v628
        %v639 = vmul.u32 %v594, %v585
        %v640 = vadd.s32 %v616, %v635
        %vm641 = vc.u32 %v616, %v635
        %v642 = vadd.s32 %v638, 1
        %v643 = vsel %vm641, %v642, %v638
        %v644 = vadd.s32 %v639, %v643
        %v645 = vadd.s32 %v644, 536870912
        %v646 = vshrl.u32 %v645, 30
        %v647 = vshll.u32 %v646, 30
        %v648 = vsub.s32 %v644, %v647
        %vm649 = vcmp.lt.s32.totalorder %v648, 0
        %v650 = vsub.s32 0, %v648
        %v651 = vsel %vm649, %v650, %v648
        %v652 = vclz %v651
        %v653 = vsub.s32 %v652, 2
        %vm654 = vcmp.gt.s32.totalorder 0, %v653
        %v655 = vsel %vm654, 0, %v653
        %v656 = vsub.s32 32, %v655
        %v657 = vshll.u32 %v648, %v655
        %v658 = vshrl.u32 %v640, %v656
        %v659 = vor.u32 %v657, %v658
        %v660 = vsub.s32 4294967266, %v655
        %v661 = vadd.s32 %v660, 127
        %v662 = vshll.u32 %v661, 23
        %v663 = vor.u32 4788187, %v662
        %v664 = vand.u32 2147483647, %v663
        %v666 = vcvt.s32.f32 %v659
        %v667 = vmul.f32 %v666, %v664
        %v668 = vxor.u32 %v667, 2147483648
        %v669 = vsel %vm548, %v668, %v667
        %v670 = vsub.s32 4, %v646
        %v671 = vsel %vm548, %v670, %v646
        %v672 = vsel %vm547, %v222, %v669
        %v673 = vsel %vm547, 0, %v671
        %v674 = vmul.f32 %v672, %v672
        %v675 = vmul.f32 %v674, -0.001358992
        %v676 = vadd.f32 %v675, 0.041655596
        %v677 = vmul.f32 %v674, %v676
        %v678 = vadd.f32 %v677, -0.4999988
        %v679 = vmul.f32 %v674, %v678
        %v680 = vadd.f32 1.0, %v679
        %v681 = vmul.f32 %v672, %v672
        %v682 = vmul.f32 %v681, -0.00019511016
        %v683 = vadd.f32 %v682, 0.008332121
        %v684 = vmul.f32 %v681, %v683
        %v685 = vadd.f32 %v684, -0.16666654
        %v686 = vmul.f32 %v681, %v685
        %v687 = vadd.f32 %v686, 1.0
        %v688 = vmul.f32 %v687, %v672
        %vm689 = vweird.f32 %v222
        %v690 = vadd.s32 %v673, 3
        %v691 = vand.u32 %v690, 3
        %vm692 = vcmp.lt.s32.totalorder %v691, 2
        %vm693 = vcmp.eq.s32.totalorder %v691, 0
        %v694 = vxor.u32 %v688, 2147483648
        %v695 = vsel %vm693, %v680, %v694
        %vm696 = vcmp.eq.s32.totalorder %v691, 2
        %v697 = vxor.u32 %v680, 2147483648
        %v698 = vsel %vm696, %v697, %v688
        %v699 = vsel %vm692, %v695, %v698
        %v700 = vsel %vm689, nan, %v699
        %v701 = vand.u32 2147483647, %v223
        %vm702 = vcmp.le.f32.partialorder %v701, 0.7853982
        %vm703 = vcmp.lt.s32.totalorder %v223, 0
        %v704 = vand.u32 %v223, 2139095040
        %v705 = vshrl.u32 %v704, 23
        %v706 = vsub.s32 %v705, 127
        %v707 = vand.u32 2147483647, %v223
        %v708 = vand.u32 %v707, 8388607
        %v709 = vor.u32 %v708, 8388608
        %v710 = vsub.s32 0, %v709
        %v711 = vadd.s32 %v706, 1
        %vm712 = vcmp.gt.s32.totalorder %v711, 0
        %v713 = vsel %vm712, %v711, 0
        %v714 = vshrl.u32 %v713, 5
        %v715 = vand.u32 %v713, 31
        %v716 = vsub.s32 32, %v715
        %v717 = vshrl.u32 683565275, %v716
        %v718 = vshll.u32 683565275, %v715
        %v719 = vshrl.u32 2475754826, %v716
        %v720 = vor.u32 %v718, %v719
        %v721 = vshll.u32 2475754826, %v715
        %v722 = vshrl.u32 2131351028, %v716
        %v723 = vor.u32 %v721, %v722
        %v724 = vshll.u32 2131351028, %v715
        %v725 = vshrl.u32 2102212464, %v716
        %v726 = vor.u32 %v724, %v725
        %v727 = vshll.u32 2102212464, %v715
        %v728 = vshrl.u32 920167782, %v716
        %v729 = vor.u32 %v727, %v728
        %v730 = vshll.u32 920167782, %v715
        %v731 = vshrl.u32 1326507024, %v716
        %v732 = vor.u32 %v730, %v731
        %vm733 = vcmp.lt.s32.totalorder %v714, 1
        %vm734 = vcmp.lt.s32.totalorder %v714, 2
        %vm735 = vcmp.lt.s32.totalorder %v714, 3
        %vm736 = vcmp.lt.s32.totalorder %v714, 4
        %v737 = vsel %vm733, %v717, %v720
        %v738 = vsel %vm736, %v726, 2102212464
        %v739 = vsel %vm735, %v723, %v738
        %v740 = vsel %vm734, %v737, %v739
        %v741 = vsel %vm733, %v720, %v723
        %v742 = vsel %vm736, %v729, 920167782
        %v743 = vsel %vm735, %v726, %v742
        %v744 = vsel %vm734, %v741, %v743
        %v745 = vsel %vm733, %v723, %v726
        %v746 = vsel %vm736, %v732, 1326507024
        %v747 = vsel %vm735, %v729, %v746
        %v748 = vsel %vm734, %v745, %v747
        %v749 = vshll.u32 %v709, 8
        %v750 = vand.u32 %v749, 65535
        %v751 = vshrl.u32 %v749, 16
        %v752 = vand.u32 %v748, 65535
        %v753 = vshrl.u32 %v748, 16
        %v754 = vmul.u32 %v750, %v752
        %v755 = vmul.u32 %v750, %v753
        %v756 = vmul.u32 %v751, %v752
        %v757 = vmul.u32 %v751, %v753
        %v758 = vshll.u32 %v755, 16
        %v759 = vshrl.u32 %v755, 16
        %v760 = vshll.u32 %v756, 16
        %v761 = vshrl.u32 %v756, 16
        %vm762 = vc.u32 %v754, %v758
        %v763 = vsel %vm762, 1, 0
        %v764 = vadd.s32 %v754, %v758
        %v765 = vadd.s32 %v757, %v763
        %vm766 = vc.u32 %v764, %v760
        %v767 = vsel %vm766, 1, 0
        %v768 = vadd.s32 %v764, %v760
        %v769 = vadd.s32 %v765, %v767
        %v770 = vadd.s32 %v769, %v759
        %v771 = vadd.s32 %v770, %v761
        %v772 = vand.u32 %v749, 65535
        %v773 = vshrl.u32 %v749, 16
        %v774 = vand.u32 %v744, 65535
        %v775 = vshrl.u32 %v744, 16
        %v776 = vmul.u32 %v772, %v774
        %v777 = vmul.u32 %v772, %v775
        %v778 = vmul.u32 %v773, %v774
        %v779 = vmul.u32 %v773, %v775
        %v780 = vshll.u32 %v777, 16
        %v781 = vshrl.u32 %v777, 16
        %v782 = vshll.u32 %v778, 16
        %v783 = vshrl.u32 %v778, 16
        %vm784 = vc.u32 %v776, %v780
        %v785 = vsel %vm784, 1, 0
        %v786 = vadd.s32 %v776, %v780
        %v787 = vadd.s32 %v779, %v785
        %vm788 = vc.u32 %v786, %v782
        %v789 = vsel %vm788, 1, 0
        %v790 = vadd.s32 %v786, %v782
        %v791 = vadd.s32 %v787, %v789
        %v792 = vadd.s32 %v791, %v781
        %v793 = vadd.s32 %v792, %v783
        %v794 = vmul.u32 %v749, %v740
        %v795 = vadd.s32 %v771, %v790
        %vm796 = vc.u32 %v771, %v790
        %v797 = vadd.s32 %v793, 1
        %v798 = vsel %vm796, %v797, %v793
        %v799 = vadd.s32 %v794, %v798
        %v800 = vadd.s32 %v799, 536870912
        %v801 = vshrl.u32 %v800, 30
        %v802 = vshll.u32 %v801, 30
        %v803 = vsub.s32 %v799, %v802
        %vm804 = vcmp.lt.s32.totalorder %v803, 0
        %v805 = vsub.s32 0, %v803
        %v806 = vsel %vm804, %v805, %v803
        %v807 = vclz %v806
        %v808 = vsub.s32 %v807, 2
        %vm809 = vcmp.gt.s32.totalorder 0, %v808
        %v810 = vsel %vm809, 0, %v808
        %v811 = vsub.s32 32, %v810
        %v812 = vshll.u32 %v803, %v810
        %v813 = vshrl.u32 %v795, %v811
        %v814 = vor.u32 %v812, %v813
        %v815 = vsub.s32 4294967266, %v810
        %v816 = vadd.s32 %v815, 127
        %v817 = vshll.u32 %v816, 23
        %v818 = vor.u32 4788187, %v817
        %v819 = vand.u32 2147483647, %v818
        %v821 = vcvt.s32.f32 %v814
        %v822 = vmul.f32 %v821, %v819
        %v823 = vxor.u32 %v822, 2147483648
        %v824 = vsel %vm703, %v823, %v822
        %v825 = vsub.s32 4, %v801
        %v826 = vsel %vm703, %v825, %v801
        %v827 = vsel %vm702, %v223, %v824
        %v828 = vsel %vm702, 0, %v826
        %v829 = vmul.f32 %v827, %v827
        %v830 = vmul.f32 %v829, -0.001358992
        %v831 = vadd.f32 %v830, 0.041655596
        %v832 = vmul.f32 %v829, %v831
        %v833 = vadd.f32 %v832, -0.4999988
        %v834 = vmul.f32 %v829, %v833
        %v835 = vadd.f32 1.0, %v834
        %v836 = vmul.f32 %v827, %v827
        %v837 = vmul.f32 %v836, -0.00019511016
        %v838 = vadd.f32 %v837, 0.008332121
        %v839 = vmul.f32 %v836, %v838
        %v840 = vadd.f32 %v839, -0.16666654
        %v841 = vmul.f32 %v836, %v840
        %v842 = vadd.f32 %v841, 1.0
        %v843 = vmul.f32 %v842, %v827
        %vm844 = vweird.f32 %v223
        %v845 = vadd.s32 %v828, 3
        %v846 = vand.u32 %v845, 3
        %vm847 = vcmp.lt.s32.totalorder %v846, 2
        %vm848 = vcmp.eq.s32.totalorder %v846, 0
        %v849 = vxor.u32 %v843, 2147483648
        %v850 = vsel %vm848, %v835, %v849
        %vm851 = vcmp.eq.s32.totalorder %v846, 2
        %v852 = vxor.u32 %v835, 2147483648
        %v853 = vsel %vm851, %v852, %v843
        %v854 = vsel %vm847, %v850, %v853
        %v855 = vsel %vm844, nan, %v854
        %v856 = vand.u32 2147483647, %v224
        %vm857 = vcmp.le.f32.partialorder %v856, 0.7853982
        %vm858 = vcmp.lt.s32.totalorder %v224, 0
        %v859 = vand.u32 %v224, 2139095040
        %v860 = vshrl.u32 %v859, 23
        %v861 = vsub.s32 %v860, 127
        %v862 = vand.u32 2147483647, %v224
        %v863 = vand.u32 %v862, 8388607
        %v864 = vor.u32 %v863, 8388608
        %v865 = vsub.s32 0, %v864
        %v866 = vadd.s32 %v861, 1
        %vm867 = vcmp.gt.s32.totalorder %v866, 0
        %v868 = vsel %vm867, %v866, 0
        %v869 = vshrl.u32 %v868, 5
        %v870 = vand.u32 %v868, 31
        %v871 = vsub.s32 32, %v870
        %v872 = vshrl.u32 683565275, %v871
        %v873 = vshll.u32 683565275, %v870
        %v874 = vshrl.u32 2475754826, %v871
        %v875 = vor.u32 %v873, %v874
        %v876 = vshll.u32 2475754826, %v870
        %v877 = vshrl.u32 2131351028, %v871
        %v878 = vor.u32 %v876, %v877
        %v879 = vshll.u32 2131351028, %v870
        %v880 = vshrl.u32 2102212464, %v871
        %v881 = vor.u32 %v879, %v880
        %v882 = vshll.u32 2102212464, %v870
        %v883 = vshrl.u32 920167782, %v871
        %v884 = vor.u32 %v882, %v883
        %v885 = vshll.u32 920167782, %v870
        %v886 = vshrl.u32 1326507024, %v871
        %v887 = vor.u32 %v885, %v886
        %vm888 = vcmp.lt.s32.totalorder %v869, 1
        %vm889 = vcmp.lt.s32.totalorder %v869, 2
        %vm890 = vcmp.lt.s32.totalorder %v869, 3
        %vm891 = vcmp.lt.s32.totalorder %v869, 4
        %v892 = vsel %vm888, %v872, %v875
        %v893 = vsel %vm891, %v881, 2102212464
        %v894 = vsel %vm890, %v878, %v893
        %v895 = vsel %vm889, %v892, %v894
        %v896 = vsel %vm888, %v875, %v878
        %v897 = vsel %vm891, %v884, 920167782
        %v898 = vsel %vm890, %v881, %v897
        %v899 = vsel %vm889, %v896, %v898
        %v900 = vsel %vm888, %v878, %v881
        %v901 = vsel %vm891, %v887, 1326507024
        %v902 = vsel %vm890, %v884, %v901
        %v903 = vsel %vm889, %v900, %v902
        %v904 = vshll.u32 %v864, 8
        %v905 = vand.u32 %v904, 65535
        %v906 = vshrl.u32 %v904, 16
        %v907 = vand.u32 %v903, 65535
        %v908 = vshrl.u32 %v903, 16
        %v909 = vmul.u32 %v905, %v907
        %v910 = vmul.u32 %v905, %v908
        %v911 = vmul.u32 %v906, %v907
        %v912 = vmul.u32 %v906, %v908
        %v913 = vshll.u32 %v910, 16
        %v914 = vshrl.u32 %v910, 16
        %v915 = vshll.u32 %v911, 16
        %v916 = vshrl.u32 %v911, 16
        %vm917 = vc.u32 %v909, %v913
        %v918 = vsel %vm917, 1, 0
        %v919 = vadd.s32 %v909, %v913
        %v920 = vadd.s32 %v912, %v918
        %vm921 = vc.u32 %v919, %v915
        %v922 = vsel %vm921, 1, 0
        %v923 = vadd.s32 %v919, %v915
        %v924 = vadd.s32 %v920, %v922
        %v925 = vadd.s32 %v924, %v914
        %v926 = vadd.s32 %v925, %v916
        %v927 = vand.u32 %v904, 65535
        %v928 = vshrl.u32 %v904, 16
        %v929 = vand.u32 %v899, 65535
        %v930 = vshrl.u32 %v899, 16
        %v931 = vmul.u32 %v927, %v929
        %v932 = vmul.u32 %v927, %v930
        %v933 = vmul.u32 %v928, %v929
        %v934 = vmul.u32 %v928, %v930
        %v935 = vshll.u32 %v932, 16
        %v936 = vshrl.u32 %v932, 16
        %v937 = vshll.u32 %v933, 16
        %v938 = vshrl.u32 %v933, 16
        %vm939 = vc.u32 %v931, %v935
        %v940 = vsel %vm939, 1, 0
        %v941 = vadd.s32 %v931, %v935
        %v942 = vadd.s32 %v934, %v940
        %vm943 = vc.u32 %v941, %v937
        %v944 = vsel %vm943, 1, 0
        %v945 = vadd.s32 %v941, %v937
        %v946 = vadd.s32 %v942, %v944
        %v947 = vadd.s32 %v946, %v936
        %v948 = vadd.s32 %v947, %v938
        %v949 = vmul.u32 %v904, %v895
        %v950 = vadd.s32 %v926, %v945
        %vm951 = vc.u32 %v926, %v945
        %v952 = vadd.s32 %v948, 1
        %v953 = vsel %vm951, %v952, %v948
        %v954 = vadd.s32 %v949, %v953
        %v955 = vadd.s32 %v954, 536870912
        %v956 = vshrl.u32 %v955, 30
        %v957 = vshll.u32 %v956, 30
        %v958 = vsub.s32 %v954, %v957
        %vm959 = vcmp.lt.s32.totalorder %v958, 0
        %v960 = vsub.s32 0, %v958
        %v961 = vsel %vm959, %v960, %v958
        %v962 = vclz %v961
        %v963 = vsub.s32 %v962, 2
        %vm964 = vcmp.gt.s32.totalorder 0, %v963
        %v965 = vsel %vm964, 0, %v963
        %v966 = vsub.s32 32, %v965
        %v967 = vshll.u32 %v958, %v965
        %v968 = vshrl.u32 %v950, %v966
        %v969 = vor.u32 %v967, %v968
        %v970 = vsub.s32 4294967266, %v965
        %v971 = vadd.s32 %v970, 127
        %v972 = vshll.u32 %v971, 23
        %v973 = vor.u32 4788187, %v972
        %v974 = vand.u32 2147483647, %v973
        %v976 = vcvt.s32.f32 %v969
        %v977 = vmul.f32 %v976, %v974
        %v978 = vxor.u32 %v977, 2147483648
        %v979 = vsel %vm858, %v978, %v977
        %v980 = vsub.s32 4, %v956
        %v981 = vsel %vm858, %v980, %v956
        %v982 = vsel %vm857, %v224, %v979
        %v983 = vsel %vm857, 0, %v981
        %v984 = vmul.f32 %v982, %v982
        %v985 = vmul.f32 %v984, -0.001358992
        %v986 = vadd.f32 %v985, 0.041655596
        %v987 = vmul.f32 %v984, %v986
        %v988 = vadd.f32 %v987, -0.4999988
        %v989 = vmul.f32 %v984, %v988
        %v990 = vadd.f32 1.0, %v989
        %v991 = vmul.f32 %v982, %v982
        %v992 = vmul.f32 %v991, -0.00019511016
        %v993 = vadd.f32 %v992, 0.008332121
        %v994 = vmul.f32 %v991, %v993
        %v995 = vadd.f32 %v994, -0.16666654
        %v996 = vmul.f32 %v991, %v995
        %v997 = vadd.f32 %v996, 1.0
        %v998 = vmul.f32 %v997, %v982
        %vm999 = vweird.f32 %v224
        %v1000 = vadd.s32 %v983, 3
        %v1001 = vand.u32 %v1000, 3
        %vm1002 = vcmp.lt.s32.totalorder %v1001, 2
        %vm1003 = vcmp.eq.s32.totalorder %v1001, 0
        %v1004 = vxor.u32 %v998, 2147483648
        %v1005 = vsel %vm1003, %v990, %v1004
        %vm1006 = vcmp.eq.s32.totalorder %v1001, 2
        %v1007 = vxor.u32 %v990, 2147483648
        %v1008 = vsel %vm1006, %v1007, %v998
        %v1009 = vsel %vm1002, %v1005, %v1008
        %v1010 = vsel %vm999, nan, %v1009
        %v1011 = vand.u32 2147483647, %v225
        %vm1012 = vcmp.le.f32.partialorder %v1011, 0.7853982
        %vm1013 = vcmp.lt.s32.totalorder %v225, 0
        %v1014 = vand.u32 %v225, 2139095040
        %v1015 = vshrl.u32 %v1014, 23
        %v1016 = vsub.s32 %v1015, 127
        %v1017 = vand.u32 2147483647, %v225
        %v1018 = vand.u32 %v1017, 8388607
        %v1019 = vor.u32 %v1018, 8388608
        %v1020 = vsub.s32 0, %v1019
        %v1021 = vadd.s32 %v1016, 1
        %vm1022 = vcmp.gt.s32.totalorder %v1021, 0
        %v1023 = vsel %vm1022, %v1021, 0
        %v1024 = vshrl.u32 %v1023, 5
        %v1025 = vand.u32 %v1023, 31
        %v1026 = vsub.s32 32, %v1025
        %v1027 = vshrl.u32 683565275, %v1026
        %v1028 = vshll.u32 683565275, %v1025
        %v1029 = vshrl.u32 2475754826, %v1026
        %v1030 = vor.u32 %v1028, %v1029
        %v1031 = vshll.u32 2475754826, %v1025
        %v1032 = vshrl.u32 2131351028, %v1026
        %v1033 = vor.u32 %v1031, %v1032
        %v1034 = vshll.u32 2131351028, %v1025
        %v1035 = vshrl.u32 2102212464, %v1026
        %v1036 = vor.u32 %v1034, %v1035
        %v1037 = vshll.u32 2102212464, %v1025
        %v1038 = vshrl.u32 920167782, %v1026
        %v1039 = vor.u32 %v1037, %v1038
        %v1040 = vshll.u32 920167782, %v1025
        %v1041 = vshrl.u32 1326507024, %v1026
        %v1042 = vor.u32 %v1040, %v1041
        %vm1043 = vcmp.lt.s32.totalorder %v1024, 1
        %vm1044 = vcmp.lt.s32.totalorder %v1024, 2
        %vm1045 = vcmp.lt.s32.totalorder %v1024, 3
        %vm1046 = vcmp.lt.s32.totalorder %v1024, 4
        %v1047 = vsel %vm1043, %v1027, %v1030
        %v1048 = vsel %vm1046, %v1036, 2102212464
        %v1049 = vsel %vm1045, %v1033, %v1048
        %v1050 = vsel %vm1044, %v1047, %v1049
        %v1051 = vsel %vm1043, %v1030, %v1033
        %v1052 = vsel %vm1046, %v1039, 920167782
        %v1053 = vsel %vm1045, %v1036, %v1052
        %v1054 = vsel %vm1044, %v1051, %v1053
        %v1055 = vsel %vm1043, %v1033, %v1036
        %v1056 = vsel %vm1046, %v1042, 1326507024
        %v1057 = vsel %vm1045, %v1039, %v1056
        %v1058 = vsel %vm1044, %v1055, %v1057
        %v1059 = vshll.u32 %v1019, 8
        %v1060 = vand.u32 %v1059, 65535
        %v1061 = vshrl.u32 %v1059, 16
        %v1062 = vand.u32 %v1058, 65535
        %v1063 = vshrl.u32 %v1058, 16
        %v1064 = vmul.u32 %v1060, %v1062
        %v1065 = vmul.u32 %v1060, %v1063
        %v1066 = vmul.u32 %v1061, %v1062
        %v1067 = vmul.u32 %v1061, %v1063
        %v1068 = vshll.u32 %v1065, 16
        %v1069 = vshrl.u32 %v1065, 16
        %v1070 = vshll.u32 %v1066, 16
        %v1071 = vshrl.u32 %v1066, 16
        %vm1072 = vc.u32 %v1064, %v1068
        %v1073 = vsel %vm1072, 1, 0
        %v1074 = vadd.s32 %v1064, %v1068
        %v1075 = vadd.s32 %v1067, %v1073
        %vm1076 = vc.u32 %v1074, %v1070
        %v1077 = vsel %vm1076, 1, 0
        %v1078 = vadd.s32 %v1074, %v1070
        %v1079 = vadd.s32 %v1075, %v1077
        %v1080 = vadd.s32 %v1079, %v1069
        %v1081 = vadd.s32 %v1080, %v1071
        %v1082 = vand.u32 %v1059, 65535
        %v1083 = vshrl.u32 %v1059, 16
        %v1084 = vand.u32 %v1054, 65535
        %v1085 = vshrl.u32 %v1054, 16
        %v1086 = vmul.u32 %v1082, %v1084
        %v1087 = vmul.u32 %v1082, %v1085
        %v1088 = vmul.u32 %v1083, %v1084
        %v1089 = vmul.u32 %v1083, %v1085
        %v1090 = vshll.u32 %v1087, 16
        %v1091 = vshrl.u32 %v1087, 16
        %v1092 = vshll.u32 %v1088, 16
        %v1093 = vshrl.u32 %v1088, 16
        %vm1094 = vc.u32 %v1086, %v1090
        %v1095 = vsel %vm1094, 1, 0
        %v1096 = vadd.s32 %v1086, %v1090
        %v1097 = vadd.s32 %v1089, %v1095
        %vm1098 = vc.u32 %v1096, %v1092
        %v1099 = vsel %vm1098, 1, 0
        %v1100 = vadd.s32 %v1096, %v1092
        %v1101 = vadd.s32 %v1097, %v1099
        %v1102 = vadd.s32 %v1101, %v1091
        %v1103 = vadd.s32 %v1102, %v1093
        %v1104 = vmul.u32 %v1059, %v1050
        %v1105 = vadd.s32 %v1081, %v1100
        %vm1106 = vc.u32 %v1081, %v1100
        %v1107 = vadd.s32 %v1103, 1
        %v1108 = vsel %vm1106, %v1107, %v1103
        %v1109 = vadd.s32 %v1104, %v1108
        %v1110 = vadd.s32 %v1109, 536870912
        %v1111 = vshrl.u32 %v1110, 30
        %v1112 = vshll.u32 %v1111, 30
        %v1113 = vsub.s32 %v1109, %v1112
        %vm1114 = vcmp.lt.s32.totalorder %v1113, 0
        %v1115 = vsub.s32 0, %v1113
        %v1116 = vsel %vm1114, %v1115, %v1113
        %v1117 = vclz %v1116
        %v1118 = vsub.s32 %v1117, 2
        %vm1119 = vcmp.gt.s32.totalorder 0, %v1118
        %v1120 = vsel %vm1119, 0, %v1118
        %v1121 = vsub.s32 32, %v1120
        %v1122 = vshll.u32 %v1113, %v1120
        %v1123 = vshrl.u32 %v1105, %v1121
        %v1124 = vor.u32 %v1122, %v1123
        %v1125 = vsub.s32 4294967266, %v1120
        %v1126 = vadd.s32 %v1125, 127
        %v1127 = vshll.u32 %v1126, 23
        %v1128 = vor.u32 4788187, %v1127
        %v1129 = vand.u32 2147483647, %v1128
        %v1131 = vcvt.s32.f32 %v1124
        %v1132 = vmul.f32 %v1131, %v1129
        %v1133 = vxor.u32 %v1132, 2147483648
        %v1134 = vsel %vm1013, %v1133, %v1132
        %v1135 = vsub.s32 4, %v1111
        %v1136 = vsel %vm1013, %v1135, %v1111
        %v1137 = vsel %vm1012, %v225, %v1134
        %v1138 = vsel %vm1012, 0, %v1136
        %v1139 = vmul.f32 %v1137, %v1137
        %v1140 = vmul.f32 %v1139, -0.001358992
        %v1141 = vadd.f32 %v1140, 0.041655596
        %v1142 = vmul.f32 %v1139, %v1141
        %v1143 = vadd.f32 %v1142, -0.4999988
        %v1144 = vmul.f32 %v1139, %v1143
        %v1145 = vadd.f32 1.0, %v1144
        %v1146 = vmul.f32 %v1137, %v1137
        %v1147 = vmul.f32 %v1146, -0.00019511016
        %v1148 = vadd.f32 %v1147, 0.008332121
        %v1149 = vmul.f32 %v1146, %v1148
        %v1150 = vadd.f32 %v1149, -0.16666654
        %v1151 = vmul.f32 %v1146, %v1150
        %v1152 = vadd.f32 %v1151, 1.0
        %v1153 = vmul.f32 %v1152, %v1137
        %vm1154 = vweird.f32 %v225
        %v1155 = vadd.s32 %v1138, 3
        %v1156 = vand.u32 %v1155, 3
        %vm1157 = vcmp.lt.s32.totalorder %v1156, 2
        %vm1158 = vcmp.eq.s32.totalorder %v1156, 0
        %v1159 = vxor.u32 %v1153, 2147483648
        %v1160 = vsel %vm1158, %v1145, %v1159
        %vm1161 = vcmp.eq.s32.totalorder %v1156, 2
        %v1162 = vxor.u32 %v1145, 2147483648
        %v1163 = vsel %vm1161, %v1162, %v1153
        %v1164 = vsel %vm1157, %v1160, %v1163
        %v1165 = vsel %vm1154, nan, %v1164
        %v1166 = vand.u32 2147483647, %v226
        %vm1167 = vcmp.le.f32.partialorder %v1166, 0.7853982
        %vm1168 = vcmp.lt.s32.totalorder %v226, 0
        %v1169 = vand.u32 %v226, 2139095040
        %v1170 = vshrl.u32 %v1169, 23
        %v1171 = vsub.s32 %v1170, 127
        %v1172 = vand.u32 2147483647, %v226
        %v1173 = vand.u32 %v1172, 8388607
        %v1174 = vor.u32 %v1173, 8388608
        %v1175 = vsub.s32 0, %v1174
        %v1176 = vadd.s32 %v1171, 1
        %vm1177 = vcmp.gt.s32.totalorder %v1176, 0
        %v1178 = vsel %vm1177, %v1176, 0
        %v1179 = vshrl.u32 %v1178, 5
        %v1180 = vand.u32 %v1178, 31
        %v1181 = vsub.s32 32, %v1180
        %v1182 = vshrl.u32 683565275, %v1181
        %v1183 = vshll.u32 683565275, %v1180
        %v1184 = vshrl.u32 2475754826, %v1181
        %v1185 = vor.u32 %v1183, %v1184
        %v1186 = vshll.u32 2475754826, %v1180
        %v1187 = vshrl.u32 2131351028, %v1181
        %v1188 = vor.u32 %v1186, %v1187
        %v1189 = vshll.u32 2131351028, %v1180
        %v1190 = vshrl.u32 2102212464, %v1181
        %v1191 = vor.u32 %v1189, %v1190
        %v1192 = vshll.u32 2102212464, %v1180
        %v1193 = vshrl.u32 920167782, %v1181
        %v1194 = vor.u32 %v1192, %v1193
        %v1195 = vshll.u32 920167782, %v1180
        %v1196 = vshrl.u32 1326507024, %v1181
        %v1197 = vor.u32 %v1195, %v1196
        %vm1198 = vcmp.lt.s32.totalorder %v1179, 1
        %vm1199 = vcmp.lt.s32.totalorder %v1179, 2
        %vm1200 = vcmp.lt.s32.totalorder %v1179, 3
        %vm1201 = vcmp.lt.s32.totalorder %v1179, 4
        %v1202 = vsel %vm1198, %v1182, %v1185
        %v1203 = vsel %vm1201, %v1191, 2102212464
        %v1204 = vsel %vm1200, %v1188, %v1203
        %v1205 = vsel %vm1199, %v1202, %v1204
        %v1206 = vsel %vm1198, %v1185, %v1188
        %v1207 = vsel %vm1201, %v1194, 920167782
        %v1208 = vsel %vm1200, %v1191, %v1207
        %v1209 = vsel %vm1199, %v1206, %v1208
        %v1210 = vsel %vm1198, %v1188, %v1191
        %v1211 = vsel %vm1201, %v1197, 1326507024
        %v1212 = vsel %vm1200, %v1194, %v1211
        %v1213 = vsel %vm1199, %v1210, %v1212
        %v1214 = vshll.u32 %v1174, 8
        %v1215 = vand.u32 %v1214, 65535
        %v1216 = vshrl.u32 %v1214, 16
        %v1217 = vand.u32 %v1213, 65535
        %v1218 = vshrl.u32 %v1213, 16
        %v1219 = vmul.u32 %v1215, %v1217
        %v1220 = vmul.u32 %v1215, %v1218
        %v1221 = vmul.u32 %v1216, %v1217
        %v1222 = vmul.u32 %v1216, %v1218
        %v1223 = vshll.u32 %v1220, 16
        %v1224 = vshrl.u32 %v1220, 16
        %v1225 = vshll.u32 %v1221, 16
        %v1226 = vshrl.u32 %v1221, 16
        %vm1227 = vc.u32 %v1219, %v1223
        %v1228 = vsel %vm1227, 1, 0
        %v1229 = vadd.s32 %v1219, %v1223
        %v1230 = vadd.s32 %v1222, %v1228
        %vm1231 = vc.u32 %v1229, %v1225
        %v1232 = vsel %vm1231, 1, 0
        %v1233 = vadd.s32 %v1229, %v1225
        %v1234 = vadd.s32 %v1230, %v1232
        %v1235 = vadd.s32 %v1234, %v1224
        %v1236 = vadd.s32 %v1235, %v1226
        %v1237 = vand.u32 %v1214, 65535
        %v1238 = vshrl.u32 %v1214, 16
        %v1239 = vand.u32 %v1209, 65535
        %v1240 = vshrl.u32 %v1209, 16
        %v1241 = vmul.u32 %v1237, %v1239
        %v1242 = vmul.u32 %v1237, %v1240
        %v1243 = vmul.u32 %v1238, %v1239
        %v1244 = vmul.u32 %v1238, %v1240
        %v1245 = vshll.u32 %v1242, 16
        %v1246 = vshrl.u32 %v1242, 16
        %v1247 = vshll.u32 %v1243, 16
        %v1248 = vshrl.u32 %v1243, 16
        %vm1249 = vc.u32 %v1241, %v1245
        %v1250 = vsel %vm1249, 1, 0
        %v1251 = vadd.s32 %v1241, %v1245
        %v1252 = vadd.s32 %v1244, %v1250
        %vm1253 = vc.u32 %v1251, %v1247
        %v1254 = vsel %vm1253, 1, 0
        %v1255 = vadd.s32 %v1251, %v1247
        %v1256 = vadd.s32 %v1252, %v1254
        %v1257 = vadd.s32 %v1256, %v1246
        %v1258 = vadd.s32 %v1257, %v1248
        %v1259 = vmul.u32 %v1214, %v1205
        %v1260 = vadd.s32 %v1236, %v1255
        %vm1261 = vc.u32 %v1236, %v1255
        %v1262 = vadd.s32 %v1258, 1
        %v1263 = vsel %vm1261, %v1262, %v1258
        %v1264 = vadd.s32 %v1259, %v1263
        %v1265 = vadd.s32 %v1264, 536870912
        %v1266 = vshrl.u32 %v1265, 30
        %v1267 = vshll.u32 %v1266, 30
        %v1268 = vsub.s32 %v1264, %v1267
        %vm1269 = vcmp.lt.s32.totalorder %v1268, 0
        %v1270 = vsub.s32 0, %v1268
        %v1271 = vsel %vm1269, %v1270, %v1268
        %v1272 = vclz %v1271
        %v1273 = vsub.s32 %v1272, 2
        %vm1274 = vcmp.gt.s32.totalorder 0, %v1273
        %v1275 = vsel %vm1274, 0, %v1273
        %v1276 = vsub.s32 32, %v1275
        %v1277 = vshll.u32 %v1268, %v1275
        %v1278 = vshrl.u32 %v1260, %v1276
        %v1279 = vor.u32 %v1277, %v1278
        %v1280 = vsub.s32 4294967266, %v1275
        %v1281 = vadd.s32 %v1280, 127
        %v1282 = vshll.u32 %v1281, 23
        %v1283 = vor.u32 4788187, %v1282
        %v1284 = vand.u32 2147483647, %v1283
        %v1286 = vcvt.s32.f32 %v1279
        %v1287 = vmul.f32 %v1286, %v1284
        %v1288 = vxor.u32 %v1287, 2147483648
        %v1289 = vsel %vm1168, %v1288, %v1287
        %v1290 = vsub.s32 4, %v1266
        %v1291 = vsel %vm1168, %v1290, %v1266
        %v1292 = vsel %vm1167, %v226, %v1289
        %v1293 = vsel %vm1167, 0, %v1291
        %v1294 = vmul.f32 %v1292, %v1292
        %v1295 = vmul.f32 %v1294, -0.001358992
        %v1296 = vadd.f32 %v1295, 0.041655596
        %v1297 = vmul.f32 %v1294, %v1296
        %v1298 = vadd.f32 %v1297, -0.4999988
        %v1299 = vmul.f32 %v1294, %v1298
        %v1300 = vadd.f32 1.0, %v1299
        %v1301 = vmul.f32 %v1292, %v1292
        %v1302 = vmul.f32 %v1301, -0.00019511016
        %v1303 = vadd.f32 %v1302, 0.008332121
        %v1304 = vmul.f32 %v1301, %v1303
        %v1305 = vadd.f32 %v1304, -0.16666654
        %v1306 = vmul.f32 %v1301, %v1305
        %v1307 = vadd.f32 %v1306, 1.0
        %v1308 = vmul.f32 %v1307, %v1292
        %vm1309 = vweird.f32 %v226
        %v1310 = vadd.s32 %v1293, 3
        %v1311 = vand.u32 %v1310, 3
        %vm1312 = vcmp.lt.s32.totalorder %v1311, 2
        %vm1313 = vcmp.eq.s32.totalorder %v1311, 0
        %v1314 = vxor.u32 %v1308, 2147483648
        %v1315 = vsel %vm1313, %v1300, %v1314
        %vm1316 = vcmp.eq.s32.totalorder %v1311, 2
        %v1317 = vxor.u32 %v1300, 2147483648
        %v1318 = vsel %vm1316, %v1317, %v1308
        %v1319 = vsel %vm1312, %v1315, %v1318
        %v1320 = vsel %vm1309, nan, %v1319
        %v1321 = vand.u32 2147483647, %v227
        %vm1322 = vcmp.le.f32.partialorder %v1321, 0.7853982
        %vm1323 = vcmp.lt.s32.totalorder %v227, 0
        %v1324 = vand.u32 %v227, 2139095040
        %v1325 = vshrl.u32 %v1324, 23
        %v1326 = vsub.s32 %v1325, 127
        %v1327 = vand.u32 2147483647, %v227
        %v1328 = vand.u32 %v1327, 8388607
        %v1329 = vor.u32 %v1328, 8388608
        %v1330 = vsub.s32 0, %v1329
        %v1331 = vadd.s32 %v1326, 1
        %vm1332 = vcmp.gt.s32.totalorder %v1331, 0
        %v1333 = vsel %vm1332, %v1331, 0
        %v1334 = vshrl.u32 %v1333, 5
        %v1335 = vand.u32 %v1333, 31
        %v1336 = vsub.s32 32, %v1335
        %v1337 = vshrl.u32 683565275, %v1336
        %v1338 = vshll.u32 683565275, %v1335
        %v1339 = vshrl.u32 2475754826, %v1336
        %v1340 = vor.u32 %v1338, %v1339
        %v1341 = vshll.u32 2475754826, %v1335
        %v1342 = vshrl.u32 2131351028, %v1336
        %v1343 = vor.u32 %v1341, %v1342
        %v1344 = vshll.u32 2131351028, %v1335
        %v1345 = vshrl.u32 2102212464, %v1336
        %v1346 = vor.u32 %v1344, %v1345
        %v1347 = vshll.u32 2102212464, %v1335
        %v1348 = vshrl.u32 920167782, %v1336
        %v1349 = vor.u32 %v1347, %v1348
        %v1350 = vshll.u32 920167782, %v1335
        %v1351 = vshrl.u32 1326507024, %v1336
        %v1352 = vor.u32 %v1350, %v1351
        %vm1353 = vcmp.lt.s32.totalorder %v1334, 1
        %vm1354 = vcmp.lt.s32.totalorder %v1334, 2
        %vm1355 = vcmp.lt.s32.totalorder %v1334, 3
        %vm1356 = vcmp.lt.s32.totalorder %v1334, 4
        %v1357 = vsel %vm1353, %v1337, %v1340
        %v1358 = vsel %vm1356, %v1346, 2102212464
        %v1359 = vsel %vm1355, %v1343, %v1358
        %v1360 = vsel %vm1354, %v1357, %v1359
        %v1361 = vsel %vm1353, %v1340, %v1343
        %v1362 = vsel %vm1356, %v1349, 920167782
        %v1363 = vsel %vm1355, %v1346, %v1362
        %v1364 = vsel %vm1354, %v1361, %v1363
        %v1365 = vsel %vm1353, %v1343, %v1346
        %v1366 = vsel %vm1356, %v1352, 1326507024
        %v1367 = vsel %vm1355, %v1349, %v1366
        %v1368 = vsel %vm1354, %v1365, %v1367
        %v1369 = vshll.u32 %v1329, 8
        %v1370 = vand.u32 %v1369, 65535
        %v1371 = vshrl.u32 %v1369, 16
        %v1372 = vand.u32 %v1368, 65535
        %v1373 = vshrl.u32 %v1368, 16
        %v1374 = vmul.u32 %v1370, %v1372
        %v1375 = vmul.u32 %v1370, %v1373
        %v1376 = vmul.u32 %v1371, %v1372
        %v1377 = vmul.u32 %v1371, %v1373
        %v1378 = vshll.u32 %v1375, 16
        %v1379 = vshrl.u32 %v1375, 16
        %v1380 = vshll.u32 %v1376, 16
        %v1381 = vshrl.u32 %v1376, 16
        %vm1382 = vc.u32 %v1374, %v1378
        %v1383 = vsel %vm1382, 1, 0
        %v1384 = vadd.s32 %v1374, %v1378
        %v1385 = vadd.s32 %v1377, %v1383
        %vm1386 = vc.u32 %v1384, %v1380
        %v1387 = vsel %vm1386, 1, 0
        %v1388 = vadd.s32 %v1384, %v1380
        %v1389 = vadd.s32 %v1385, %v1387
        %v1390 = vadd.s32 %v1389, %v1379
        %v1391 = vadd.s32 %v1390, %v1381
        %v1392 = vand.u32 %v1369, 65535
        %v1393 = vshrl.u32 %v1369, 16
        %v1394 = vand.u32 %v1364, 65535
        %v1395 = vshrl.u32 %v1364, 16
        %v1396 = vmul.u32 %v1392, %v1394
        %v1397 = vmul.u32 %v1392, %v1395
        %v1398 = vmul.u32 %v1393, %v1394
        %v1399 = vmul.u32 %v1393, %v1395
        %v1400 = vshll.u32 %v1397, 16
        %v1401 = vshrl.u32 %v1397, 16
        %v1402 = vshll.u32 %v1398, 16
        %v1403 = vshrl.u32 %v1398, 16
        %vm1404 = vc.u32 %v1396, %v1400
        %v1405 = vsel %vm1404, 1, 0
        %v1406 = vadd.s32 %v1396, %v1400
        %v1407 = vadd.s32 %v1399, %v1405
        %vm1408 = vc.u32 %v1406, %v1402
        %v1409 = vsel %vm1408, 1, 0
        %v1410 = vadd.s32 %v1406, %v1402
        %v1411 = vadd.s32 %v1407, %v1409
        %v1412 = vadd.s32 %v1411, %v1401
        %v1413 = vadd.s32 %v1412, %v1403
        %v1414 = vmul.u32 %v1369, %v1360
        %v1415 = vadd.s32 %v1391, %v1410
        %vm1416 = vc.u32 %v1391, %v1410
        %v1417 = vadd.s32 %v1413, 1
        %v1418 = vsel %vm1416, %v1417, %v1413
        %v1419 = vadd.s32 %v1414, %v1418
        %v1420 = vadd.s32 %v1419, 536870912
        %v1421 = vshrl.u32 %v1420, 30
        %v1422 = vshll.u32 %v1421, 30
        %v1423 = vsub.s32 %v1419, %v1422
        %vm1424 = vcmp.lt.s32.totalorder %v1423, 0
        %v1425 = vsub.s32 0, %v1423
        %v1426 = vsel %vm1424, %v1425, %v1423
        %v1427 = vclz %v1426
        %v1428 = vsub.s32 %v1427, 2
        %vm1429 = vcmp.gt.s32.totalorder 0, %v1428
        %v1430 = vsel %vm1429, 0, %v1428
        %v1431 = vsub.s32 32, %v1430
        %v1432 = vshll.u32 %v1423, %v1430
        %v1433 = vshrl.u32 %v1415, %v1431
        %v1434 = vor.u32 %v1432, %v1433
        %v1435 = vsub.s32 4294967266, %v1430
        %v1436 = vadd.s32 %v1435, 127
        %v1437 = vshll.u32 %v1436, 23
        %v1438 = vor.u32 4788187, %v1437
        %v1439 = vand.u32 2147483647, %v1438
        %v1441 = vcvt.s32.f32 %v1434
        %v1442 = vmul.f32 %v1441, %v1439
        %v1443 = vxor.u32 %v1442, 2147483648
        %v1444 = vsel %vm1323, %v1443, %v1442
        %v1445 = vsub.s32 4, %v1421
        %v1446 = vsel %vm1323, %v1445, %v1421
        %v1447 = vsel %vm1322, %v227, %v1444
        %v1448 = vsel %vm1322, 0, %v1446
        %v1449 = vmul.f32 %v1447, %v1447
        %v1450 = vmul.f32 %v1449, -0.001358992
        %v1451 = vadd.f32 %v1450, 0.041655596
        %v1452 = vmul.f32 %v1449, %v1451
        %v1453 = vadd.f32 %v1452, -0.4999988
        %v1454 = vmul.f32 %v1449, %v1453
        %v1455 = vadd.f32 1.0, %v1454
        %v1456 = vmul.f32 %v1447, %v1447
        %v1457 = vmul.f32 %v1456, -0.00019511016
        %v1458 = vadd.f32 %v1457, 0.008332121
        %v1459 = vmul.f32 %v1456, %v1458
        %v1460 = vadd.f32 %v1459, -0.16666654
        %v1461 = vmul.f32 %v1456, %v1460
        %v1462 = vadd.f32 %v1461, 1.0
        %v1463 = vmul.f32 %v1462, %v1447
        %vm1464 = vweird.f32 %v227
        %v1465 = vadd.s32 %v1448, 3
        %v1466 = vand.u32 %v1465, 3
        %vm1467 = vcmp.lt.s32.totalorder %v1466, 2
        %vm1468 = vcmp.eq.s32.totalorder %v1466, 0
        %v1469 = vxor.u32 %v1463, 2147483648
        %v1470 = vsel %vm1468, %v1455, %v1469
        %vm1471 = vcmp.eq.s32.totalorder %v1466, 2
        %v1472 = vxor.u32 %v1455, 2147483648
        %v1473 = vsel %vm1471, %v1472, %v1463
        %v1474 = vsel %vm1467, %v1470, %v1473
        %v1475 = vsel %vm1464, nan, %v1474
        %v1476 = vand.u32 2147483647, %v228
        %vm1477 = vcmp.le.f32.partialorder %v1476, 0.7853982
        %vm1478 = vcmp.lt.s32.totalorder %v228, 0
        %v1479 = vand.u32 %v228, 2139095040
        %v1480 = vshrl.u32 %v1479, 23
        %v1481 = vsub.s32 %v1480, 127
        %v1482 = vand.u32 2147483647, %v228
        %v1483 = vand.u32 %v1482, 8388607
        %v1484 = vor.u32 %v1483, 8388608
        %v1485 = vsub.s32 0, %v1484
        %v1486 = vadd.s32 %v1481, 1
        %vm1487 = vcmp.gt.s32.totalorder %v1486, 0
        %v1488 = vsel %vm1487, %v1486, 0
        %v1489 = vshrl.u32 %v1488, 5
        %v1490 = vand.u32 %v1488, 31
        %v1491 = vsub.s32 32, %v1490
        %v1492 = vshrl.u32 683565275, %v1491
        %v1493 = vshll.u32 683565275, %v1490
        %v1494 = vshrl.u32 2475754826, %v1491
        %v1495 = vor.u32 %v1493, %v1494
        %v1496 = vshll.u32 2475754826, %v1490
        %v1497 = vshrl.u32 2131351028, %v1491
        %v1498 = vor.u32 %v1496, %v1497
        %v1499 = vshll.u32 2131351028, %v1490
        %v1500 = vshrl.u32 2102212464, %v1491
        %v1501 = vor.u32 %v1499, %v1500
        %v1502 = vshll.u32 2102212464, %v1490
        %v1503 = vshrl.u32 920167782, %v1491
        %v1504 = vor.u32 %v1502, %v1503
        %v1505 = vshll.u32 920167782, %v1490
        %v1506 = vshrl.u32 1326507024, %v1491
        %v1507 = vor.u32 %v1505, %v1506
        %vm1508 = vcmp.lt.s32.totalorder %v1489, 1
        %vm1509 = vcmp.lt.s32.totalorder %v1489, 2
        %vm1510 = vcmp.lt.s32.totalorder %v1489, 3
        %vm1511 = vcmp.lt.s32.totalorder %v1489, 4
        %v1512 = vsel %vm1508, %v1492, %v1495
        %v1513 = vsel %vm1511, %v1501, 2102212464
        %v1514 = vsel %vm1510, %v1498, %v1513
        %v1515 = vsel %vm1509, %v1512, %v1514
        %v1516 = vsel %vm1508, %v1495, %v1498
        %v1517 = vsel %vm1511, %v1504, 920167782
        %v1518 = vsel %vm1510, %v1501, %v1517
        %v1519 = vsel %vm1509, %v1516, %v1518
        %v1520 = vsel %vm1508, %v1498, %v1501
        %v1521 = vsel %vm1511, %v1507, 1326507024
        %v1522 = vsel %vm1510, %v1504, %v1521
        %v1523 = vsel %vm1509, %v1520, %v1522
        %v1524 = vshll.u32 %v1484, 8
        %v1525 = vand.u32 %v1524, 65535
        %v1526 = vshrl.u32 %v1524, 16
        %v1527 = vand.u32 %v1523, 65535
        %v1528 = vshrl.u32 %v1523, 16
        %v1529 = vmul.u32 %v1525, %v1527
        %v1530 = vmul.u32 %v1525, %v1528
        %v1531 = vmul.u32 %v1526, %v1527
        %v1532 = vmul.u32 %v1526, %v1528
        %v1533 = vshll.u32 %v1530, 16
        %v1534 = vshrl.u32 %v1530, 16
        %v1535 = vshll.u32 %v1531, 16
        %v1536 = vshrl.u32 %v1531, 16
        %vm1537 = vc.u32 %v1529, %v1533
        %v1538 = vsel %vm1537, 1, 0
        %v1539 = vadd.s32 %v1529, %v1533
        %v1540 = vadd.s32 %v1532, %v1538
        %vm1541 = vc.u32 %v1539, %v1535
        %v1542 = vsel %vm1541, 1, 0
        %v1543 = vadd.s32 %v1539, %v1535
        %v1544 = vadd.s32 %v1540, %v1542
        %v1545 = vadd.s32 %v1544, %v1534
        %v1546 = vadd.s32 %v1545, %v1536
        %v1547 = vand.u32 %v1524, 65535
        %v1548 = vshrl.u32 %v1524, 16
        %v1549 = vand.u32 %v1519, 65535
        %v1550 = vshrl.u32 %v1519, 16
        %v1551 = vmul.u32 %v1547, %v1549
        %v1552 = vmul.u32 %v1547, %v1550
        %v1553 = vmul.u32 %v1548, %v1549
        %v1554 = vmul.u32 %v1548, %v1550
        %v1555 = vshll.u32 %v1552, 16
        %v1556 = vshrl.u32 %v1552, 16
        %v1557 = vshll.u32 %v1553, 16
        %v1558 = vshrl.u32 %v1553, 16
        %vm1559 = vc.u32 %v1551, %v1555
        %v1560 = vsel %vm1559, 1, 0
        %v1561 = vadd.s32 %v1551, %v1555
        %v1562 = vadd.s32 %v1554, %v1560
        %vm1563 = vc.u32 %v1561, %v1557
        %v1564 = vsel %vm1563, 1, 0
        %v1565 = vadd.s32 %v1561, %v1557
        %v1566 = vadd.s32 %v1562, %v1564
        %v1567 = vadd.s32 %v1566, %v1556
        %v1568 = vadd.s32 %v1567, %v1558
        %v1569 = vmul.u32 %v1524, %v1515
        %v1570 = vadd.s32 %v1546, %v1565
        %vm1571 = vc.u32 %v1546, %v1565
        %v1572 = vadd.s32 %v1568, 1
        %v1573 = vsel %vm1571, %v1572, %v1568
        %v1574 = vadd.s32 %v1569, %v1573
        %v1575 = vadd.s32 %v1574, 536870912
        %v1576 = vshrl.u32 %v1575, 30
        %v1577 = vshll.u32 %v1576, 30
        %v1578 = vsub.s32 %v1574, %v1577
        %vm1579 = vcmp.lt.s32.totalorder %v1578, 0
        %v1580 = vsub.s32 0, %v1578
        %v1581 = vsel %vm1579, %v1580, %v1578
        %v1582 = vclz %v1581
        %v1583 = vsub.s32 %v1582, 2
        %vm1584 = vcmp.gt.s32.totalorder 0, %v1583
        %v1585 = vsel %vm1584, 0, %v1583
        %v1586 = vsub.s32 32, %v1585
        %v1587 = vshll.u32 %v1578, %v1585
        %v1588 = vshrl.u32 %v1570, %v1586
        %v1589 = vor.u32 %v1587, %v1588
        %v1590 = vsub.s32 4294967266, %v1585
        %v1591 = vadd.s32 %v1590, 127
        %v1592 = vshll.u32 %v1591, 23
        %v1593 = vor.u32 4788187, %v1592
        %v1594 = vand.u32 2147483647, %v1593
        %v1596 = vcvt.s32.f32 %v1589
        %v1597 = vmul.f32 %v1596, %v1594
        %v1598 = vxor.u32 %v1597, 2147483648
        %v1599 = vsel %vm1478, %v1598, %v1597
        %v1600 = vsub.s32 4, %v1576
        %v1601 = vsel %vm1478, %v1600, %v1576
        %v1602 = vsel %vm1477, %v228, %v1599
        %v1603 = vsel %vm1477, 0, %v1601
        %v1604 = vmul.f32 %v1602, %v1602
        %v1605 = vmul.f32 %v1604, -0.001358992
        %v1606 = vadd.f32 %v1605, 0.041655596
        %v1607 = vmul.f32 %v1604, %v1606
        %v1608 = vadd.f32 %v1607, -0.4999988
        %v1609 = vmul.f32 %v1604, %v1608
        %v1610 = vadd.f32 1.0, %v1609
        %v1611 = vmul.f32 %v1602, %v1602
        %v1612 = vmul.f32 %v1611, -0.00019511016
        %v1613 = vadd.f32 %v1612, 0.008332121
        %v1614 = vmul.f32 %v1611, %v1613
        %v1615 = vadd.f32 %v1614, -0.16666654
        %v1616 = vmul.f32 %v1611, %v1615
        %v1617 = vadd.f32 %v1616, 1.0
        %v1618 = vmul.f32 %v1617, %v1602
        %vm1619 = vweird.f32 %v228
        %v1620 = vadd.s32 %v1603, 3
        %v1621 = vand.u32 %v1620, 3
        %vm1622 = vcmp.lt.s32.totalorder %v1621, 2
        %vm1623 = vcmp.eq.s32.totalorder %v1621, 0
        %v1624 = vxor.u32 %v1618, 2147483648
        %v1625 = vsel %vm1623, %v1610, %v1624
        %vm1626 = vcmp.eq.s32.totalorder %v1621, 2
        %v1627 = vxor.u32 %v1610, 2147483648
        %v1628 = vsel %vm1626, %v1627, %v1618
        %v1629 = vsel %vm1622, %v1625, %v1628
        %v1630 = vsel %vm1619, nan, %v1629
        %v1631 = vand.u32 2147483647, %v229
        %vm1632 = vcmp.le.f32.partialorder %v1631, 0.7853982
        %vm1633 = vcmp.lt.s32.totalorder %v229, 0
        %v1634 = vand.u32 %v229, 2139095040
        %v1635 = vshrl.u32 %v1634, 23
        %v1636 = vsub.s32 %v1635, 127
        %v1637 = vand.u32 2147483647, %v229
        %v1638 = vand.u32 %v1637, 8388607
        %v1639 = vor.u32 %v1638, 8388608
        %v1640 = vsub.s32 0, %v1639
        %v1641 = vadd.s32 %v1636, 1
        %vm1642 = vcmp.gt.s32.totalorder %v1641, 0
        %v1643 = vsel %vm1642, %v1641, 0
        %v1644 = vshrl.u32 %v1643, 5
        %v1645 = vand.u32 %v1643, 31
        %v1646 = vsub.s32 32, %v1645
        %v1647 = vshrl.u32 683565275, %v1646
        %v1648 = vshll.u32 683565275, %v1645
        %v1649 = vshrl.u32 2475754826, %v1646
        %v1650 = vor.u32 %v1648, %v1649
        %v1651 = vshll.u32 2475754826, %v1645
        %v1652 = vshrl.u32 2131351028, %v1646
        %v1653 = vor.u32 %v1651, %v1652
        %v1654 = vshll.u32 2131351028, %v1645
        %v1655 = vshrl.u32 2102212464, %v1646
        %v1656 = vor.u32 %v1654, %v1655
        %v1657 = vshll.u32 2102212464, %v1645
        %v1658 = vshrl.u32 920167782, %v1646
        %v1659 = vor.u32 %v1657, %v1658
        %v1660 = vshll.u32 920167782, %v1645
        %v1661 = vshrl.u32 1326507024, %v1646
        %v1662 = vor.u32 %v1660, %v1661
        %vm1663 = vcmp.lt.s32.totalorder %v1644, 1
        %vm1664 = vcmp.lt.s32.totalorder %v1644, 2
        %vm1665 = vcmp.lt.s32.totalorder %v1644, 3
        %vm1666 = vcmp.lt.s32.totalorder %v1644, 4
        %v1667 = vsel %vm1663, %v1647, %v1650
        %v1668 = vsel %vm1666, %v1656, 2102212464
        %v1669 = vsel %vm1665, %v1653, %v1668
        %v1670 = vsel %vm1664, %v1667, %v1669
        %v1671 = vsel %vm1663, %v1650, %v1653
        %v1672 = vsel %vm1666, %v1659, 920167782
        %v1673 = vsel %vm1665, %v1656, %v1672
        %v1674 = vsel %vm1664, %v1671, %v1673
        %v1675 = vsel %vm1663, %v1653, %v1656
        %v1676 = vsel %vm1666, %v1662, 1326507024
        %v1677 = vsel %vm1665, %v1659, %v1676
        %v1678 = vsel %vm1664, %v1675, %v1677
        %v1679 = vshll.u32 %v1639, 8
        %v1680 = vand.u32 %v1679, 65535
        %v1681 = vshrl.u32 %v1679, 16
        %v1682 = vand.u32 %v1678, 65535
        %v1683 = vshrl.u32 %v1678, 16
        %v1684 = vmul.u32 %v1680, %v1682
        %v1685 = vmul.u32 %v1680, %v1683
        %v1686 = vmul.u32 %v1681, %v1682
        %v1687 = vmul.u32 %v1681, %v1683
        %v1688 = vshll.u32 %v1685, 16
        %v1689 = vshrl.u32 %v1685, 16
        %v1690 = vshll.u32 %v1686, 16
        %v1691 = vshrl.u32 %v1686, 16
        %vm1692 = vc.u32 %v1684, %v1688
        %v1693 = vsel %vm1692, 1, 0
        %v1694 = vadd.s32 %v1684, %v1688
        %v1695 = vadd.s32 %v1687, %v1693
        %vm1696 = vc.u32 %v1694, %v1690
        %v1697 = vsel %vm1696, 1, 0
        %v1698 = vadd.s32 %v1694, %v1690
        %v1699 = vadd.s32 %v1695, %v1697
        %v1700 = vadd.s32 %v1699, %v1689
        %v1701 = vadd.s32 %v1700, %v1691
        %v1702 = vand.u32 %v1679, 65535
        %v1703 = vshrl.u32 %v1679, 16
        %v1704 = vand.u32 %v1674, 65535
        %v1705 = vshrl.u32 %v1674, 16
        %v1706 = vmul.u32 %v1702, %v1704
        %v1707 = vmul.u32 %v1702, %v1705
        %v1708 = vmul.u32 %v1703, %v1704
        %v1709 = vmul.u32 %v1703, %v1705
        %v1710 = vshll.u32 %v1707, 16
        %v1711 = vshrl.u32 %v1707, 16
        %v1712 = vshll.u32 %v1708, 16
        %v1713 = vshrl.u32 %v1708, 16
        %vm1714 = vc.u32 %v1706, %v1710
        %v1715 = vsel %vm1714, 1, 0
        %v1716 = vadd.s32 %v1706, %v1710
        %v1717 = vadd.s32 %v1709, %v1715
        %vm1718 = vc.u32 %v1716, %v1712
        %v1719 = vsel %vm1718, 1, 0
        %v1720 = vadd.s32 %v1716, %v1712
        %v1721 = vadd.s32 %v1717, %v1719
        %v1722 = vadd.s32 %v1721, %v1711
        %v1723 = vadd.s32 %v1722, %v1713
        %v1724 = vmul.u32 %v1679, %v1670
        %v1725 = vadd.s32 %v1701, %v1720
        %vm1726 = vc.u32 %v1701, %v1720
        %v1727 = vadd.s32 %v1723, 1
        %v1728 = vsel %vm1726, %v1727, %v1723
        %v1729 = vadd.s32 %v1724, %v1728
        %v1730 = vadd.s32 %v1729, 536870912
        %v1731 = vshrl.u32 %v1730, 30
        %v1732 = vshll.u32 %v1731, 30
        %v1733 = vsub.s32 %v1729, %v1732
        %vm1734 = vcmp.lt.s32.totalorder %v1733, 0
        %v1735 = vsub.s32 0, %v1733
        %v1736 = vsel %vm1734, %v1735, %v1733
        %v1737 = vclz %v1736
        %v1738 = vsub.s32 %v1737, 2
        %vm1739 = vcmp.gt.s32.totalorder 0, %v1738
        %v1740 = vsel %vm1739, 0, %v1738
        %v1741 = vsub.s32 32, %v1740
        %v1742 = vshll.u32 %v1733, %v1740
        %v1743 = vshrl.u32 %v1725, %v1741
        %v1744 = vor.u32 %v1742, %v1743
        %v1745 = vsub.s32 4294967266, %v1740
        %v1746 = vadd.s32 %v1745, 127
        %v1747 = vshll.u32 %v1746, 23
        %v1748 = vor.u32 4788187, %v1747
        %v1749 = vand.u32 2147483647, %v1748
        %v1751 = vcvt.s32.f32 %v1744
        %v1752 = vmul.f32 %v1751, %v1749
        %v1753 = vxor.u32 %v1752, 2147483648
        %v1754 = vsel %vm1633, %v1753, %v1752
        %v1755 = vsub.s32 4, %v1731
        %v1756 = vsel %vm1633, %v1755, %v1731
        %v1757 = vsel %vm1632, %v229, %v1754
        %v1758 = vsel %vm1632, 0, %v1756
        %v1759 = vmul.f32 %v1757, %v1757
        %v1760 = vmul.f32 %v1759, -0.001358992
        %v1761 = vadd.f32 %v1760, 0.041655596
        %v1762 = vmul.f32 %v1759, %v1761
        %v1763 = vadd.f32 %v1762, -0.4999988
        %v1764 = vmul.f32 %v1759, %v1763
        %v1765 = vadd.f32 1.0, %v1764
        %v1766 = vmul.f32 %v1757, %v1757
        %v1767 = vmul.f32 %v1766, -0.00019511016
        %v1768 = vadd.f32 %v1767, 0.008332121
        %v1769 = vmul.f32 %v1766, %v1768
        %v1770 = vadd.f32 %v1769, -0.16666654
        %v1771 = vmul.f32 %v1766, %v1770
        %v1772 = vadd.f32 %v1771, 1.0
        %v1773 = vmul.f32 %v1772, %v1757
        %vm1774 = vweird.f32 %v229
        %v1775 = vadd.s32 %v1758, 3
        %v1776 = vand.u32 %v1775, 3
        %vm1777 = vcmp.lt.s32.totalorder %v1776, 2
        %vm1778 = vcmp.eq.s32.totalorder %v1776, 0
        %v1779 = vxor.u32 %v1773, 2147483648
        %v1780 = vsel %vm1778, %v1765, %v1779
        %vm1781 = vcmp.eq.s32.totalorder %v1776, 2
        %v1782 = vxor.u32 %v1765, 2147483648
        %v1783 = vsel %vm1781, %v1782, %v1773
        %v1784 = vsel %vm1777, %v1780, %v1783
        %v1785 = vsel %vm1774, nan, %v1784
        %v1786 = vand.u32 2147483647, %v230
        %vm1787 = vcmp.le.f32.partialorder %v1786, 0.7853982
        %vm1788 = vcmp.lt.s32.totalorder %v230, 0
        %v1789 = vand.u32 %v230, 2139095040
        %v1790 = vshrl.u32 %v1789, 23
        %v1791 = vsub.s32 %v1790, 127
        %v1792 = vand.u32 2147483647, %v230
        %v1793 = vand.u32 %v1792, 8388607
        %v1794 = vor.u32 %v1793, 8388608
        %v1795 = vsub.s32 0, %v1794
        %v1796 = vadd.s32 %v1791, 1
        %vm1797 = vcmp.gt.s32.totalorder %v1796, 0
        %v1798 = vsel %vm1797, %v1796, 0
        %v1799 = vshrl.u32 %v1798, 5
        %v1800 = vand.u32 %v1798, 31
        %v1801 = vsub.s32 32, %v1800
        %v1802 = vshrl.u32 683565275, %v1801
        %v1803 = vshll.u32 683565275, %v1800
        %v1804 = vshrl.u32 2475754826, %v1801
        %v1805 = vor.u32 %v1803, %v1804
        %v1806 = vshll.u32 2475754826, %v1800
        %v1807 = vshrl.u32 2131351028, %v1801
        %v1808 = vor.u32 %v1806, %v1807
        %v1809 = vshll.u32 2131351028, %v1800
        %v1810 = vshrl.u32 2102212464, %v1801
        %v1811 = vor.u32 %v1809, %v1810
        %v1812 = vshll.u32 2102212464, %v1800
        %v1813 = vshrl.u32 920167782, %v1801
        %v1814 = vor.u32 %v1812, %v1813
        %v1815 = vshll.u32 920167782, %v1800
        %v1816 = vshrl.u32 1326507024, %v1801
        %v1817 = vor.u32 %v1815, %v1816
        %vm1818 = vcmp.lt.s32.totalorder %v1799, 1
        %vm1819 = vcmp.lt.s32.totalorder %v1799, 2
        %vm1820 = vcmp.lt.s32.totalorder %v1799, 3
        %vm1821 = vcmp.lt.s32.totalorder %v1799, 4
        %v1822 = vsel %vm1818, %v1802, %v1805
        %v1823 = vsel %vm1821, %v1811, 2102212464
        %v1824 = vsel %vm1820, %v1808, %v1823
        %v1825 = vsel %vm1819, %v1822, %v1824
        %v1826 = vsel %vm1818, %v1805, %v1808
        %v1827 = vsel %vm1821, %v1814, 920167782
        %v1828 = vsel %vm1820, %v1811, %v1827
        %v1829 = vsel %vm1819, %v1826, %v1828
        %v1830 = vsel %vm1818, %v1808, %v1811
        %v1831 = vsel %vm1821, %v1817, 1326507024
        %v1832 = vsel %vm1820, %v1814, %v1831
        %v1833 = vsel %vm1819, %v1830, %v1832
        %v1834 = vshll.u32 %v1794, 8
        %v1835 = vand.u32 %v1834, 65535
        %v1836 = vshrl.u32 %v1834, 16
        %v1837 = vand.u32 %v1833, 65535
        %v1838 = vshrl.u32 %v1833, 16
        %v1839 = vmul.u32 %v1835, %v1837
        %v1840 = vmul.u32 %v1835, %v1838
        %v1841 = vmul.u32 %v1836, %v1837
        %v1842 = vmul.u32 %v1836, %v1838
        %v1843 = vshll.u32 %v1840, 16
        %v1844 = vshrl.u32 %v1840, 16
        %v1845 = vshll.u32 %v1841, 16
        %v1846 = vshrl.u32 %v1841, 16
        %vm1847 = vc.u32 %v1839, %v1843
        %v1848 = vsel %vm1847, 1, 0
        %v1849 = vadd.s32 %v1839, %v1843
        %v1850 = vadd.s32 %v1842, %v1848
        %vm1851 = vc.u32 %v1849, %v1845
        %v1852 = vsel %vm1851, 1, 0
        %v1853 = vadd.s32 %v1849, %v1845
        %v1854 = vadd.s32 %v1850, %v1852
        %v1855 = vadd.s32 %v1854, %v1844
        %v1856 = vadd.s32 %v1855, %v1846
        %v1857 = vand.u32 %v1834, 65535
        %v1858 = vshrl.u32 %v1834, 16
        %v1859 = vand.u32 %v1829, 65535
        %v1860 = vshrl.u32 %v1829, 16
        %v1861 = vmul.u32 %v1857, %v1859
        %v1862 = vmul.u32 %v1857, %v1860
        %v1863 = vmul.u32 %v1858, %v1859
        %v1864 = vmul.u32 %v1858, %v1860
        %v1865 = vshll.u32 %v1862, 16
        %v1866 = vshrl.u32 %v1862, 16
        %v1867 = vshll.u32 %v1863, 16
        %v1868 = vshrl.u32 %v1863, 16
        %vm1869 = vc.u32 %v1861, %v1865
        %v1870 = vsel %vm1869, 1, 0
        %v1871 = vadd.s32 %v1861, %v1865
        %v1872 = vadd.s32 %v1864, %v1870
        %vm1873 = vc.u32 %v1871, %v1867
        %v1874 = vsel %vm1873, 1, 0
        %v1875 = vadd.s32 %v1871, %v1867
        %v1876 = vadd.s32 %v1872, %v1874
        %v1877 = vadd.s32 %v1876, %v1866
        %v1878 = vadd.s32 %v1877, %v1868
        %v1879 = vmul.u32 %v1834, %v1825
        %v1880 = vadd.s32 %v1856, %v1875
        %vm1881 = vc.u32 %v1856, %v1875
        %v1882 = vadd.s32 %v1878, 1
        %v1883 = vsel %vm1881, %v1882, %v1878
        %v1884 = vadd.s32 %v1879, %v1883
        %v1885 = vadd.s32 %v1884, 536870912
        %v1886 = vshrl.u32 %v1885, 30
        %v1887 = vshll.u32 %v1886, 30
        %v1888 = vsub.s32 %v1884, %v1887
        %vm1889 = vcmp.lt.s32.totalorder %v1888, 0
        %v1890 = vsub.s32 0, %v1888
        %v1891 = vsel %vm1889, %v1890, %v1888
        %v1892 = vclz %v1891
        %v1893 = vsub.s32 %v1892, 2
        %vm1894 = vcmp.gt.s32.totalorder 0, %v1893
        %v1895 = vsel %vm1894, 0, %v1893
        %v1896 = vsub.s32 32, %v1895
        %v1897 = vshll.u32 %v1888, %v1895
        %v1898 = vshrl.u32 %v1880, %v1896
        %v1899 = vor.u32 %v1897, %v1898
        %v1900 = vsub.s32 4294967266, %v1895
        %v1901 = vadd.s32 %v1900, 127
        %v1902 = vshll.u32 %v1901, 23
        %v1903 = vor.u32 4788187, %v1902
        %v1904 = vand.u32 2147483647, %v1903
        %v1906 = vcvt.s32.f32 %v1899
        %v1907 = vmul.f32 %v1906, %v1904
        %v1908 = vxor.u32 %v1907, 2147483648
        %v1909 = vsel %vm1788, %v1908, %v1907
        %v1910 = vsub.s32 4, %v1886
        %v1911 = vsel %vm1788, %v1910, %v1886
        %v1912 = vsel %vm1787, %v230, %v1909
        %v1913 = vsel %vm1787, 0, %v1911
        %v1914 = vmul.f32 %v1912, %v1912
        %v1915 = vmul.f32 %v1914, -0.001358992
        %v1916 = vadd.f32 %v1915, 0.041655596
        %v1917 = vmul.f32 %v1914, %v1916
        %v1918 = vadd.f32 %v1917, -0.4999988
        %v1919 = vmul.f32 %v1914, %v1918
        %v1920 = vadd.f32 1.0, %v1919
        %v1921 = vmul.f32 %v1912, %v1912
        %v1922 = vmul.f32 %v1921, -0.00019511016
        %v1923 = vadd.f32 %v1922, 0.008332121
        %v1924 = vmul.f32 %v1921, %v1923
        %v1925 = vadd.f32 %v1924, -0.16666654
        %v1926 = vmul.f32 %v1921, %v1925
        %v1927 = vadd.f32 %v1926, 1.0
        %v1928 = vmul.f32 %v1927, %v1912
        %vm1929 = vweird.f32 %v230
        %v1930 = vadd.s32 %v1913, 3
        %v1931 = vand.u32 %v1930, 3
        %vm1932 = vcmp.lt.s32.totalorder %v1931, 2
        %vm1933 = vcmp.eq.s32.totalorder %v1931, 0
        %v1934 = vxor.u32 %v1928, 2147483648
        %v1935 = vsel %vm1933, %v1920, %v1934
        %vm1936 = vcmp.eq.s32.totalorder %v1931, 2
        %v1937 = vxor.u32 %v1920, 2147483648
        %v1938 = vsel %vm1936, %v1937, %v1928
        %v1939 = vsel %vm1932, %v1935, %v1938
        %v1940 = vsel %vm1929, nan, %v1939
        %v1941 = vand.u32 2147483647, %v231
        %vm1942 = vcmp.le.f32.partialorder %v1941, 0.7853982
        %vm1943 = vcmp.lt.s32.totalorder %v231, 0
        %v1944 = vand.u32 %v231, 2139095040
        %v1945 = vshrl.u32 %v1944, 23
        %v1946 = vsub.s32 %v1945, 127
        %v1947 = vand.u32 2147483647, %v231
        %v1948 = vand.u32 %v1947, 8388607
        %v1949 = vor.u32 %v1948, 8388608
        %v1950 = vsub.s32 0, %v1949
        %v1951 = vadd.s32 %v1946, 1
        %vm1952 = vcmp.gt.s32.totalorder %v1951, 0
        %v1953 = vsel %vm1952, %v1951, 0
        %v1954 = vshrl.u32 %v1953, 5
        %v1955 = vand.u32 %v1953, 31
        %v1956 = vsub.s32 32, %v1955
        %v1957 = vshrl.u32 683565275, %v1956
        %v1958 = vshll.u32 683565275, %v1955
        %v1959 = vshrl.u32 2475754826, %v1956
        %v1960 = vor.u32 %v1958, %v1959
        %v1961 = vshll.u32 2475754826, %v1955
        %v1962 = vshrl.u32 2131351028, %v1956
        %v1963 = vor.u32 %v1961, %v1962
        %v1964 = vshll.u32 2131351028, %v1955
        %v1965 = vshrl.u32 2102212464, %v1956
        %v1966 = vor.u32 %v1964, %v1965
        %v1967 = vshll.u32 2102212464, %v1955
        %v1968 = vshrl.u32 920167782, %v1956
        %v1969 = vor.u32 %v1967, %v1968
        %v1970 = vshll.u32 920167782, %v1955
        %v1971 = vshrl.u32 1326507024, %v1956
        %v1972 = vor.u32 %v1970, %v1971
        %vm1973 = vcmp.lt.s32.totalorder %v1954, 1
        %vm1974 = vcmp.lt.s32.totalorder %v1954, 2
        %vm1975 = vcmp.lt.s32.totalorder %v1954, 3
        %vm1976 = vcmp.lt.s32.totalorder %v1954, 4
        %v1977 = vsel %vm1973, %v1957, %v1960
        %v1978 = vsel %vm1976, %v1966, 2102212464
        %v1979 = vsel %vm1975, %v1963, %v1978
        %v1980 = vsel %vm1974, %v1977, %v1979
        %v1981 = vsel %vm1973, %v1960, %v1963
        %v1982 = vsel %vm1976, %v1969, 920167782
        %v1983 = vsel %vm1975, %v1966, %v1982
        %v1984 = vsel %vm1974, %v1981, %v1983
        %v1985 = vsel %vm1973, %v1963, %v1966
        %v1986 = vsel %vm1976, %v1972, 1326507024
        %v1987 = vsel %vm1975, %v1969, %v1986
        %v1988 = vsel %vm1974, %v1985, %v1987
        %v1989 = vshll.u32 %v1949, 8
        %v1990 = vand.u32 %v1989, 65535
        %v1991 = vshrl.u32 %v1989, 16
        %v1992 = vand.u32 %v1988, 65535
        %v1993 = vshrl.u32 %v1988, 16
        %v1994 = vmul.u32 %v1990, %v1992
        %v1995 = vmul.u32 %v1990, %v1993
        %v1996 = vmul.u32 %v1991, %v1992
        %v1997 = vmul.u32 %v1991, %v1993
        %v1998 = vshll.u32 %v1995, 16
        %v1999 = vshrl.u32 %v1995, 16
        %v2000 = vshll.u32 %v1996, 16
        %v2001 = vshrl.u32 %v1996, 16
        %vm2002 = vc.u32 %v1994, %v1998
        %v2003 = vsel %vm2002, 1, 0
        %v2004 = vadd.s32 %v1994, %v1998
        %v2005 = vadd.s32 %v1997, %v2003
        %vm2006 = vc.u32 %v2004, %v2000
        %v2007 = vsel %vm2006, 1, 0
        %v2008 = vadd.s32 %v2004, %v2000
        %v2009 = vadd.s32 %v2005, %v2007
        %v2010 = vadd.s32 %v2009, %v1999
        %v2011 = vadd.s32 %v2010, %v2001
        %v2012 = vand.u32 %v1989, 65535
        %v2013 = vshrl.u32 %v1989, 16
        %v2014 = vand.u32 %v1984, 65535
        %v2015 = vshrl.u32 %v1984, 16
        %v2016 = vmul.u32 %v2012, %v2014
        %v2017 = vmul.u32 %v2012, %v2015
        %v2018 = vmul.u32 %v2013, %v2014
        %v2019 = vmul.u32 %v2013, %v2015
        %v2020 = vshll.u32 %v2017, 16
        %v2021 = vshrl.u32 %v2017, 16
        %v2022 = vshll.u32 %v2018, 16
        %v2023 = vshrl.u32 %v2018, 16
        %vm2024 = vc.u32 %v2016, %v2020
        %v2025 = vsel %vm2024, 1, 0
        %v2026 = vadd.s32 %v2016, %v2020
        %v2027 = vadd.s32 %v2019, %v2025
        %vm2028 = vc.u32 %v2026, %v2022
        %v2029 = vsel %vm2028, 1, 0
        %v2030 = vadd.s32 %v2026, %v2022
        %v2031 = vadd.s32 %v2027, %v2029
        %v2032 = vadd.s32 %v2031, %v2021
        %v2033 = vadd.s32 %v2032, %v2023
        %v2034 = vmul.u32 %v1989, %v1980
        %v2035 = vadd.s32 %v2011, %v2030
        %vm2036 = vc.u32 %v2011, %v2030
        %v2037 = vadd.s32 %v2033, 1
        %v2038 = vsel %vm2036, %v2037, %v2033
        %v2039 = vadd.s32 %v2034, %v2038
        %v2040 = vadd.s32 %v2039, 536870912
        %v2041 = vshrl.u32 %v2040, 30
        %v2042 = vshll.u32 %v2041, 30
        %v2043 = vsub.s32 %v2039, %v2042
        %vm2044 = vcmp.lt.s32.totalorder %v2043, 0
        %v2045 = vsub.s32 0, %v2043
        %v2046 = vsel %vm2044, %v2045, %v2043
        %v2047 = vclz %v2046
        %v2048 = vsub.s32 %v2047, 2
        %vm2049 = vcmp.gt.s32.totalorder 0, %v2048
        %v2050 = vsel %vm2049, 0, %v2048
        %v2051 = vsub.s32 32, %v2050
        %v2052 = vshll.u32 %v2043, %v2050
        %v2053 = vshrl.u32 %v2035, %v2051
        %v2054 = vor.u32 %v2052, %v2053
        %v2055 = vsub.s32 4294967266, %v2050
        %v2056 = vadd.s32 %v2055, 127
        %v2057 = vshll.u32 %v2056, 23
        %v2058 = vor.u32 4788187, %v2057
        %v2059 = vand.u32 2147483647, %v2058
        %v2061 = vcvt.s32.f32 %v2054
        %v2062 = vmul.f32 %v2061, %v2059
        %v2063 = vxor.u32 %v2062, 2147483648
        %v2064 = vsel %vm1943, %v2063, %v2062
        %v2065 = vsub.s32 4, %v2041
        %v2066 = vsel %vm1943, %v2065, %v2041
        %v2067 = vsel %vm1942, %v231, %v2064
        %v2068 = vsel %vm1942, 0, %v2066
        %v2069 = vmul.f32 %v2067, %v2067
        %v2070 = vmul.f32 %v2069, -0.001358992
        %v2071 = vadd.f32 %v2070, 0.041655596
        %v2072 = vmul.f32 %v2069, %v2071
        %v2073 = vadd.f32 %v2072, -0.4999988
        %v2074 = vmul.f32 %v2069, %v2073
        %v2075 = vadd.f32 1.0, %v2074
        %v2076 = vmul.f32 %v2067, %v2067
        %v2077 = vmul.f32 %v2076, -0.00019511016
        %v2078 = vadd.f32 %v2077, 0.008332121
        %v2079 = vmul.f32 %v2076, %v2078
        %v2080 = vadd.f32 %v2079, -0.16666654
        %v2081 = vmul.f32 %v2076, %v2080
        %v2082 = vadd.f32 %v2081, 1.0
        %v2083 = vmul.f32 %v2082, %v2067
        %vm2084 = vweird.f32 %v231
        %v2085 = vadd.s32 %v2068, 3
        %v2086 = vand.u32 %v2085, 3
        %vm2087 = vcmp.lt.s32.totalorder %v2086, 2
        %vm2088 = vcmp.eq.s32.totalorder %v2086, 0
        %v2089 = vxor.u32 %v2083, 2147483648
        %v2090 = vsel %vm2088, %v2075, %v2089
        %vm2091 = vcmp.eq.s32.totalorder %v2086, 2
        %v2092 = vxor.u32 %v2075, 2147483648
        %v2093 = vsel %vm2091, %v2092, %v2083
        %v2094 = vsel %vm2087, %v2090, %v2093
        %v2095 = vsel %vm2084, nan, %v2094
        %v2096 = vand.u32 2147483647, %v232
        %vm2097 = vcmp.le.f32.partialorder %v2096, 0.7853982
        %vm2098 = vcmp.lt.s32.totalorder %v232, 0
        %v2099 = vand.u32 %v232, 2139095040
        %v2100 = vshrl.u32 %v2099, 23
        %v2101 = vsub.s32 %v2100, 127
        %v2102 = vand.u32 2147483647, %v232
        %v2103 = vand.u32 %v2102, 8388607
        %v2104 = vor.u32 %v2103, 8388608
        %v2105 = vsub.s32 0, %v2104
        %v2106 = vadd.s32 %v2101, 1
        %vm2107 = vcmp.gt.s32.totalorder %v2106, 0
        %v2108 = vsel %vm2107, %v2106, 0
        %v2109 = vshrl.u32 %v2108, 5
        %v2110 = vand.u32 %v2108, 31
        %v2111 = vsub.s32 32, %v2110
        %v2112 = vshrl.u32 683565275, %v2111
        %v2113 = vshll.u32 683565275, %v2110
        %v2114 = vshrl.u32 2475754826, %v2111
        %v2115 = vor.u32 %v2113, %v2114
        %v2116 = vshll.u32 2475754826, %v2110
        %v2117 = vshrl.u32 2131351028, %v2111
        %v2118 = vor.u32 %v2116, %v2117
        %v2119 = vshll.u32 2131351028, %v2110
        %v2120 = vshrl.u32 2102212464, %v2111
        %v2121 = vor.u32 %v2119, %v2120
        %v2122 = vshll.u32 2102212464, %v2110
        %v2123 = vshrl.u32 920167782, %v2111
        %v2124 = vor.u32 %v2122, %v2123
        %v2125 = vshll.u32 920167782, %v2110
        %v2126 = vshrl.u32 1326507024, %v2111
        %v2127 = vor.u32 %v2125, %v2126
        %vm2128 = vcmp.lt.s32.totalorder %v2109, 1
        %vm2129 = vcmp.lt.s32.totalorder %v2109, 2
        %vm2130 = vcmp.lt.s32.totalorder %v2109, 3
        %vm2131 = vcmp.lt.s32.totalorder %v2109, 4
        %v2132 = vsel %vm2128, %v2112, %v2115
        %v2133 = vsel %vm2131, %v2121, 2102212464
        %v2134 = vsel %vm2130, %v2118, %v2133
        %v2135 = vsel %vm2129, %v2132, %v2134
        %v2136 = vsel %vm2128, %v2115, %v2118
        %v2137 = vsel %vm2131, %v2124, 920167782
        %v2138 = vsel %vm2130, %v2121, %v2137
        %v2139 = vsel %vm2129, %v2136, %v2138
        %v2140 = vsel %vm2128, %v2118, %v2121
        %v2141 = vsel %vm2131, %v2127, 1326507024
        %v2142 = vsel %vm2130, %v2124, %v2141
        %v2143 = vsel %vm2129, %v2140, %v2142
        %v2144 = vshll.u32 %v2104, 8
        %v2145 = vand.u32 %v2144, 65535
        %v2146 = vshrl.u32 %v2144, 16
        %v2147 = vand.u32 %v2143, 65535
        %v2148 = vshrl.u32 %v2143, 16
        %v2149 = vmul.u32 %v2145, %v2147
        %v2150 = vmul.u32 %v2145, %v2148
        %v2151 = vmul.u32 %v2146, %v2147
        %v2152 = vmul.u32 %v2146, %v2148
        %v2153 = vshll.u32 %v2150, 16
        %v2154 = vshrl.u32 %v2150, 16
        %v2155 = vshll.u32 %v2151, 16
        %v2156 = vshrl.u32 %v2151, 16
        %vm2157 = vc.u32 %v2149, %v2153
        %v2158 = vsel %vm2157, 1, 0
        %v2159 = vadd.s32 %v2149, %v2153
        %v2160 = vadd.s32 %v2152, %v2158
        %vm2161 = vc.u32 %v2159, %v2155
        %v2162 = vsel %vm2161, 1, 0
        %v2163 = vadd.s32 %v2159, %v2155
        %v2164 = vadd.s32 %v2160, %v2162
        %v2165 = vadd.s32 %v2164, %v2154
        %v2166 = vadd.s32 %v2165, %v2156
        %v2167 = vand.u32 %v2144, 65535
        %v2168 = vshrl.u32 %v2144, 16
        %v2169 = vand.u32 %v2139, 65535
        %v2170 = vshrl.u32 %v2139, 16
        %v2171 = vmul.u32 %v2167, %v2169
        %v2172 = vmul.u32 %v2167, %v2170
        %v2173 = vmul.u32 %v2168, %v2169
        %v2174 = vmul.u32 %v2168, %v2170
        %v2175 = vshll.u32 %v2172, 16
        %v2176 = vshrl.u32 %v2172, 16
        %v2177 = vshll.u32 %v2173, 16
        %v2178 = vshrl.u32 %v2173, 16
        %vm2179 = vc.u32 %v2171, %v2175
        %v2180 = vsel %vm2179, 1, 0
        %v2181 = vadd.s32 %v2171, %v2175
        %v2182 = vadd.s32 %v2174, %v2180
        %vm2183 = vc.u32 %v2181, %v2177
        %v2184 = vsel %vm2183, 1, 0
        %v2185 = vadd.s32 %v2181, %v2177
        %v2186 = vadd.s32 %v2182, %v2184
        %v2187 = vadd.s32 %v2186, %v2176
        %v2188 = vadd.s32 %v2187, %v2178
        %v2189 = vmul.u32 %v2144, %v2135
        %v2190 = vadd.s32 %v2166, %v2185
        %vm2191 = vc.u32 %v2166, %v2185
        %v2192 = vadd.s32 %v2188, 1
        %v2193 = vsel %vm2191, %v2192, %v2188
        %v2194 = vadd.s32 %v2189, %v2193
        %v2195 = vadd.s32 %v2194, 536870912
        %v2196 = vshrl.u32 %v2195, 30
        %v2197 = vshll.u32 %v2196, 30
        %v2198 = vsub.s32 %v2194, %v2197
        %vm2199 = vcmp.lt.s32.totalorder %v2198, 0
        %v2200 = vsub.s32 0, %v2198
        %v2201 = vsel %vm2199, %v2200, %v2198
        %v2202 = vclz %v2201
        %v2203 = vsub.s32 %v2202, 2
        %vm2204 = vcmp.gt.s32.totalorder 0, %v2203
        %v2205 = vsel %vm2204, 0, %v2203
        %v2206 = vsub.s32 32, %v2205
        %v2207 = vshll.u32 %v2198, %v2205
        %v2208 = vshrl.u32 %v2190, %v2206
        %v2209 = vor.u32 %v2207, %v2208
        %v2210 = vsub.s32 4294967266, %v2205
        %v2211 = vadd.s32 %v2210, 127
        %v2212 = vshll.u32 %v2211, 23
        %v2213 = vor.u32 4788187, %v2212
        %v2214 = vand.u32 2147483647, %v2213
        %v2216 = vcvt.s32.f32 %v2209
        %v2217 = vmul.f32 %v2216, %v2214
        %v2218 = vxor.u32 %v2217, 2147483648
        %v2219 = vsel %vm2098, %v2218, %v2217
        %v2220 = vsub.s32 4, %v2196
        %v2221 = vsel %vm2098, %v2220, %v2196
        %v2222 = vsel %vm2097, %v232, %v2219
        %v2223 = vsel %vm2097, 0, %v2221
        %v2224 = vmul.f32 %v2222, %v2222
        %v2225 = vmul.f32 %v2224, -0.001358992
        %v2226 = vadd.f32 %v2225, 0.041655596
        %v2227 = vmul.f32 %v2224, %v2226
        %v2228 = vadd.f32 %v2227, -0.4999988
        %v2229 = vmul.f32 %v2224, %v2228
        %v2230 = vadd.f32 1.0, %v2229
        %v2231 = vmul.f32 %v2222, %v2222
        %v2232 = vmul.f32 %v2231, -0.00019511016
        %v2233 = vadd.f32 %v2232, 0.008332121
        %v2234 = vmul.f32 %v2231, %v2233
        %v2235 = vadd.f32 %v2234, -0.16666654
        %v2236 = vmul.f32 %v2231, %v2235
        %v2237 = vadd.f32 %v2236, 1.0
        %v2238 = vmul.f32 %v2237, %v2222
        %vm2239 = vweird.f32 %v232
        %v2240 = vadd.s32 %v2223, 3
        %v2241 = vand.u32 %v2240, 3
        %vm2242 = vcmp.lt.s32.totalorder %v2241, 2
        %vm2243 = vcmp.eq.s32.totalorder %v2241, 0
        %v2244 = vxor.u32 %v2238, 2147483648
        %v2245 = vsel %vm2243, %v2230, %v2244
        %vm2246 = vcmp.eq.s32.totalorder %v2241, 2
        %v2247 = vxor.u32 %v2230, 2147483648
        %v2248 = vsel %vm2246, %v2247, %v2238
        %v2249 = vsel %vm2242, %v2245, %v2248
        %v2250 = vsel %vm2239, nan, %v2249
        %v2251 = vand.u32 2147483647, %v233
        %vm2252 = vcmp.le.f32.partialorder %v2251, 0.7853982
        %vm2253 = vcmp.lt.s32.totalorder %v233, 0
        %v2254 = vand.u32 %v233, 2139095040
        %v2255 = vshrl.u32 %v2254, 23
        %v2256 = vsub.s32 %v2255, 127
        %v2257 = vand.u32 2147483647, %v233
        %v2258 = vand.u32 %v2257, 8388607
        %v2259 = vor.u32 %v2258, 8388608
        %v2260 = vsub.s32 0, %v2259
        %v2261 = vadd.s32 %v2256, 1
        %vm2262 = vcmp.gt.s32.totalorder %v2261, 0
        %v2263 = vsel %vm2262, %v2261, 0
        %v2264 = vshrl.u32 %v2263, 5
        %v2265 = vand.u32 %v2263, 31
        %v2266 = vsub.s32 32, %v2265
        %v2267 = vshrl.u32 683565275, %v2266
        %v2268 = vshll.u32 683565275, %v2265
        %v2269 = vshrl.u32 2475754826, %v2266
        %v2270 = vor.u32 %v2268, %v2269
        %v2271 = vshll.u32 2475754826, %v2265
        %v2272 = vshrl.u32 2131351028, %v2266
        %v2273 = vor.u32 %v2271, %v2272
        %v2274 = vshll.u32 2131351028, %v2265
        %v2275 = vshrl.u32 2102212464, %v2266
        %v2276 = vor.u32 %v2274, %v2275
        %v2277 = vshll.u32 2102212464, %v2265
        %v2278 = vshrl.u32 920167782, %v2266
        %v2279 = vor.u32 %v2277, %v2278
        %v2280 = vshll.u32 920167782, %v2265
        %v2281 = vshrl.u32 1326507024, %v2266
        %v2282 = vor.u32 %v2280, %v2281
        %vm2283 = vcmp.lt.s32.totalorder %v2264, 1
        %vm2284 = vcmp.lt.s32.totalorder %v2264, 2
        %vm2285 = vcmp.lt.s32.totalorder %v2264, 3
        %vm2286 = vcmp.lt.s32.totalorder %v2264, 4
        %v2287 = vsel %vm2283, %v2267, %v2270
        %v2288 = vsel %vm2286, %v2276, 2102212464
        %v2289 = vsel %vm2285, %v2273, %v2288
        %v2290 = vsel %vm2284, %v2287, %v2289
        %v2291 = vsel %vm2283, %v2270, %v2273
        %v2292 = vsel %vm2286, %v2279, 920167782
        %v2293 = vsel %vm2285, %v2276, %v2292
        %v2294 = vsel %vm2284, %v2291, %v2293
        %v2295 = vsel %vm2283, %v2273, %v2276
        %v2296 = vsel %vm2286, %v2282, 1326507024
        %v2297 = vsel %vm2285, %v2279, %v2296
        %v2298 = vsel %vm2284, %v2295, %v2297
        %v2299 = vshll.u32 %v2259, 8
        %v2300 = vand.u32 %v2299, 65535
        %v2301 = vshrl.u32 %v2299, 16
        %v2302 = vand.u32 %v2298, 65535
        %v2303 = vshrl.u32 %v2298, 16
        %v2304 = vmul.u32 %v2300, %v2302
        %v2305 = vmul.u32 %v2300, %v2303
        %v2306 = vmul.u32 %v2301, %v2302
        %v2307 = vmul.u32 %v2301, %v2303
        %v2308 = vshll.u32 %v2305, 16
        %v2309 = vshrl.u32 %v2305, 16
        %v2310 = vshll.u32 %v2306, 16
        %v2311 = vshrl.u32 %v2306, 16
        %vm2312 = vc.u32 %v2304, %v2308
        %v2313 = vsel %vm2312, 1, 0
        %v2314 = vadd.s32 %v2304, %v2308
        %v2315 = vadd.s32 %v2307, %v2313
        %vm2316 = vc.u32 %v2314, %v2310
        %v2317 = vsel %vm2316, 1, 0
        %v2318 = vadd.s32 %v2314, %v2310
        %v2319 = vadd.s32 %v2315, %v2317
        %v2320 = vadd.s32 %v2319, %v2309
        %v2321 = vadd.s32 %v2320, %v2311
        %v2322 = vand.u32 %v2299, 65535
        %v2323 = vshrl.u32 %v2299, 16
        %v2324 = vand.u32 %v2294, 65535
        %v2325 = vshrl.u32 %v2294, 16
        %v2326 = vmul.u32 %v2322, %v2324
        %v2327 = vmul.u32 %v2322, %v2325
        %v2328 = vmul.u32 %v2323, %v2324
        %v2329 = vmul.u32 %v2323, %v2325
        %v2330 = vshll.u32 %v2327, 16
        %v2331 = vshrl.u32 %v2327, 16
        %v2332 = vshll.u32 %v2328, 16
        %v2333 = vshrl.u32 %v2328, 16
        %vm2334 = vc.u32 %v2326, %v2330
        %v2335 = vsel %vm2334, 1, 0
        %v2336 = vadd.s32 %v2326, %v2330
        %v2337 = vadd.s32 %v2329, %v2335
        %vm2338 = vc.u32 %v2336, %v2332
        %v2339 = vsel %vm2338, 1, 0
        %v2340 = vadd.s32 %v2336, %v2332
        %v2341 = vadd.s32 %v2337, %v2339
        %v2342 = vadd.s32 %v2341, %v2331
        %v2343 = vadd.s32 %v2342, %v2333
        %v2344 = vmul.u32 %v2299, %v2290
        %v2345 = vadd.s32 %v2321, %v2340
        %vm2346 = vc.u32 %v2321, %v2340
        %v2347 = vadd.s32 %v2343, 1
        %v2348 = vsel %vm2346, %v2347, %v2343
        %v2349 = vadd.s32 %v2344, %v2348
        %v2350 = vadd.s32 %v2349, 536870912
        %v2351 = vshrl.u32 %v2350, 30
        %v2352 = vshll.u32 %v2351, 30
        %v2353 = vsub.s32 %v2349, %v2352
        %vm2354 = vcmp.lt.s32.totalorder %v2353, 0
        %v2355 = vsub.s32 0, %v2353
        %v2356 = vsel %vm2354, %v2355, %v2353
        %v2357 = vclz %v2356
        %v2358 = vsub.s32 %v2357, 2
        %vm2359 = vcmp.gt.s32.totalorder 0, %v2358
        %v2360 = vsel %vm2359, 0, %v2358
        %v2361 = vsub.s32 32, %v2360
        %v2362 = vshll.u32 %v2353, %v2360
        %v2363 = vshrl.u32 %v2345, %v2361
        %v2364 = vor.u32 %v2362, %v2363
        %v2365 = vsub.s32 4294967266, %v2360
        %v2366 = vadd.s32 %v2365, 127
        %v2367 = vshll.u32 %v2366, 23
        %v2368 = vor.u32 4788187, %v2367
        %v2369 = vand.u32 2147483647, %v2368
        %v2371 = vcvt.s32.f32 %v2364
        %v2372 = vmul.f32 %v2371, %v2369
        %v2373 = vxor.u32 %v2372, 2147483648
        %v2374 = vsel %vm2253, %v2373, %v2372
        %v2375 = vsub.s32 4, %v2351
        %v2376 = vsel %vm2253, %v2375, %v2351
        %v2377 = vsel %vm2252, %v233, %v2374
        %v2378 = vsel %vm2252, 0, %v2376
        %v2379 = vmul.f32 %v2377, %v2377
        %v2380 = vmul.f32 %v2379, -0.001358992
        %v2381 = vadd.f32 %v2380, 0.041655596
        %v2382 = vmul.f32 %v2379, %v2381
        %v2383 = vadd.f32 %v2382, -0.4999988
        %v2384 = vmul.f32 %v2379, %v2383
        %v2385 = vadd.f32 1.0, %v2384
        %v2386 = vmul.f32 %v2377, %v2377
        %v2387 = vmul.f32 %v2386, -0.00019511016
        %v2388 = vadd.f32 %v2387, 0.008332121
        %v2389 = vmul.f32 %v2386, %v2388
        %v2390 = vadd.f32 %v2389, -0.16666654
        %v2391 = vmul.f32 %v2386, %v2390
        %v2392 = vadd.f32 %v2391, 1.0
        %v2393 = vmul.f32 %v2392, %v2377
        %vm2394 = vweird.f32 %v233
        %v2395 = vadd.s32 %v2378, 3
        %v2396 = vand.u32 %v2395, 3
        %vm2397 = vcmp.lt.s32.totalorder %v2396, 2
        %vm2398 = vcmp.eq.s32.totalorder %v2396, 0
        %v2399 = vxor.u32 %v2393, 2147483648
        %v2400 = vsel %vm2398, %v2385, %v2399
        %vm2401 = vcmp.eq.s32.totalorder %v2396, 2
        %v2402 = vxor.u32 %v2385, 2147483648
        %v2403 = vsel %vm2401, %v2402, %v2393
        %v2404 = vsel %vm2397, %v2400, %v2403
        %v2405 = vsel %vm2394, nan, %v2404
        %v2406 = vand.u32 2147483647, %v234
        %vm2407 = vcmp.le.f32.partialorder %v2406, 0.7853982
        %vm2408 = vcmp.lt.s32.totalorder %v234, 0
        %v2409 = vand.u32 %v234, 2139095040
        %v2410 = vshrl.u32 %v2409, 23
        %v2411 = vsub.s32 %v2410, 127
        %v2412 = vand.u32 2147483647, %v234
        %v2413 = vand.u32 %v2412, 8388607
        %v2414 = vor.u32 %v2413, 8388608
        %v2415 = vsub.s32 0, %v2414
        %v2416 = vadd.s32 %v2411, 1
        %vm2417 = vcmp.gt.s32.totalorder %v2416, 0
        %v2418 = vsel %vm2417, %v2416, 0
        %v2419 = vshrl.u32 %v2418, 5
        %v2420 = vand.u32 %v2418, 31
        %v2421 = vsub.s32 32, %v2420
        %v2422 = vshrl.u32 683565275, %v2421
        %v2423 = vshll.u32 683565275, %v2420
        %v2424 = vshrl.u32 2475754826, %v2421
        %v2425 = vor.u32 %v2423, %v2424
        %v2426 = vshll.u32 2475754826, %v2420
        %v2427 = vshrl.u32 2131351028, %v2421
        %v2428 = vor.u32 %v2426, %v2427
        %v2429 = vshll.u32 2131351028, %v2420
        %v2430 = vshrl.u32 2102212464, %v2421
        %v2431 = vor.u32 %v2429, %v2430
        %v2432 = vshll.u32 2102212464, %v2420
        %v2433 = vshrl.u32 920167782, %v2421
        %v2434 = vor.u32 %v2432, %v2433
        %v2435 = vshll.u32 920167782, %v2420
        %v2436 = vshrl.u32 1326507024, %v2421
        %v2437 = vor.u32 %v2435, %v2436
        %vm2438 = vcmp.lt.s32.totalorder %v2419, 1
        %vm2439 = vcmp.lt.s32.totalorder %v2419, 2
        %vm2440 = vcmp.lt.s32.totalorder %v2419, 3
        %vm2441 = vcmp.lt.s32.totalorder %v2419, 4
        %v2442 = vsel %vm2438, %v2422, %v2425
        %v2443 = vsel %vm2441, %v2431, 2102212464
        %v2444 = vsel %vm2440, %v2428, %v2443
        %v2445 = vsel %vm2439, %v2442, %v2444
        %v2446 = vsel %vm2438, %v2425, %v2428
        %v2447 = vsel %vm2441, %v2434, 920167782
        %v2448 = vsel %vm2440, %v2431, %v2447
        %v2449 = vsel %vm2439, %v2446, %v2448
        %v2450 = vsel %vm2438, %v2428, %v2431
        %v2451 = vsel %vm2441, %v2437, 1326507024
        %v2452 = vsel %vm2440, %v2434, %v2451
        %v2453 = vsel %vm2439, %v2450, %v2452
        %v2454 = vshll.u32 %v2414, 8
        %v2455 = vand.u32 %v2454, 65535
        %v2456 = vshrl.u32 %v2454, 16
        %v2457 = vand.u32 %v2453, 65535
        %v2458 = vshrl.u32 %v2453, 16
        %v2459 = vmul.u32 %v2455, %v2457
        %v2460 = vmul.u32 %v2455, %v2458
        %v2461 = vmul.u32 %v2456, %v2457
        %v2462 = vmul.u32 %v2456, %v2458
        %v2463 = vshll.u32 %v2460, 16
        %v2464 = vshrl.u32 %v2460, 16
        %v2465 = vshll.u32 %v2461, 16
        %v2466 = vshrl.u32 %v2461, 16
        %vm2467 = vc.u32 %v2459, %v2463
        %v2468 = vsel %vm2467, 1, 0
        %v2469 = vadd.s32 %v2459, %v2463
        %v2470 = vadd.s32 %v2462, %v2468
        %vm2471 = vc.u32 %v2469, %v2465
        %v2472 = vsel %vm2471, 1, 0
        %v2473 = vadd.s32 %v2469, %v2465
        %v2474 = vadd.s32 %v2470, %v2472
        %v2475 = vadd.s32 %v2474, %v2464
        %v2476 = vadd.s32 %v2475, %v2466
        %v2477 = vand.u32 %v2454, 65535
        %v2478 = vshrl.u32 %v2454, 16
        %v2479 = vand.u32 %v2449, 65535
        %v2480 = vshrl.u32 %v2449, 16
        %v2481 = vmul.u32 %v2477, %v2479
        %v2482 = vmul.u32 %v2477, %v2480
        %v2483 = vmul.u32 %v2478, %v2479
        %v2484 = vmul.u32 %v2478, %v2480
        %v2485 = vshll.u32 %v2482, 16
        %v2486 = vshrl.u32 %v2482, 16
        %v2487 = vshll.u32 %v2483, 16
        %v2488 = vshrl.u32 %v2483, 16
        %vm2489 = vc.u32 %v2481, %v2485
        %v2490 = vsel %vm2489, 1, 0
        %v2491 = vadd.s32 %v2481, %v2485
        %v2492 = vadd.s32 %v2484, %v2490
        %vm2493 = vc.u32 %v2491, %v2487
        %v2494 = vsel %vm2493, 1, 0
        %v2495 = vadd.s32 %v2491, %v2487
        %v2496 = vadd.s32 %v2492, %v2494
        %v2497 = vadd.s32 %v2496, %v2486
        %v2498 = vadd.s32 %v2497, %v2488
        %v2499 = vmul.u32 %v2454, %v2445
        %v2500 = vadd.s32 %v2476, %v2495
        %vm2501 = vc.u32 %v2476, %v2495
        %v2502 = vadd.s32 %v2498, 1
        %v2503 = vsel %vm2501, %v2502, %v2498
        %v2504 = vadd.s32 %v2499, %v2503
        %v2505 = vadd.s32 %v2504, 536870912
        %v2506 = vshrl.u32 %v2505, 30
        %v2507 = vshll.u32 %v2506, 30
        %v2508 = vsub.s32 %v2504, %v2507
        %vm2509 = vcmp.lt.s32.totalorder %v2508, 0
        %v2510 = vsub.s32 0, %v2508
        %v2511 = vsel %vm2509, %v2510, %v2508
        %v2512 = vclz %v2511
        %v2513 = vsub.s32 %v2512, 2
        %vm2514 = vcmp.gt.s32.totalorder 0, %v2513
        %v2515 = vsel %vm2514, 0, %v2513
        %v2516 = vsub.s32 32, %v2515
        %v2517 = vshll.u32 %v2508, %v2515
        %v2518 = vshrl.u32 %v2500, %v2516
        %v2519 = vor.u32 %v2517, %v2518
        %v2520 = vsub.s32 4294967266, %v2515
        %v2521 = vadd.s32 %v2520, 127
        %v2522 = vshll.u32 %v2521, 23
        %v2523 = vor.u32 4788187, %v2522
        %v2524 = vand.u32 2147483647, %v2523
        %v2526 = vcvt.s32.f32 %v2519
        %v2527 = vmul.f32 %v2526, %v2524
        %v2528 = vxor.u32 %v2527, 2147483648
        %v2529 = vsel %vm2408, %v2528, %v2527
        %v2530 = vsub.s32 4, %v2506
        %v2531 = vsel %vm2408, %v2530, %v2506
        %v2532 = vsel %vm2407, %v234, %v2529
        %v2533 = vsel %vm2407, 0, %v2531
        %v2534 = vmul.f32 %v2532, %v2532
        %v2535 = vmul.f32 %v2534, -0.001358992
        %v2536 = vadd.f32 %v2535, 0.041655596
        %v2537 = vmul.f32 %v2534, %v2536
        %v2538 = vadd.f32 %v2537, -0.4999988
        %v2539 = vmul.f32 %v2534, %v2538
        %v2540 = vadd.f32 1.0, %v2539
        %v2541 = vmul.f32 %v2532, %v2532
        %v2542 = vmul.f32 %v2541, -0.00019511016
        %v2543 = vadd.f32 %v2542, 0.008332121
        %v2544 = vmul.f32 %v2541, %v2543
        %v2545 = vadd.f32 %v2544, -0.16666654
        %v2546 = vmul.f32 %v2541, %v2545
        %v2547 = vadd.f32 %v2546, 1.0
        %v2548 = vmul.f32 %v2547, %v2532
        %vm2549 = vweird.f32 %v234
        %v2550 = vadd.s32 %v2533, 3
        %v2551 = vand.u32 %v2550, 3
        %vm2552 = vcmp.lt.s32.totalorder %v2551, 2
        %vm2553 = vcmp.eq.s32.totalorder %v2551, 0
        %v2554 = vxor.u32 %v2548, 2147483648
        %v2555 = vsel %vm2553, %v2540, %v2554
        %vm2556 = vcmp.eq.s32.totalorder %v2551, 2
        %v2557 = vxor.u32 %v2540, 2147483648
        %v2558 = vsel %vm2556, %v2557, %v2548
        %v2559 = vsel %vm2552, %v2555, %v2558
        %v2560 = vsel %vm2549, nan, %v2559
        %v2561 = vand.u32 2147483647, %v235
        %vm2562 = vcmp.le.f32.partialorder %v2561, 0.7853982
        %vm2563 = vcmp.lt.s32.totalorder %v235, 0
        %v2564 = vand.u32 %v235, 2139095040
        %v2565 = vshrl.u32 %v2564, 23
        %v2566 = vsub.s32 %v2565, 127
        %v2567 = vand.u32 2147483647, %v235
        %v2568 = vand.u32 %v2567, 8388607
        %v2569 = vor.u32 %v2568, 8388608
        %v2570 = vsub.s32 0, %v2569
        %v2571 = vadd.s32 %v2566, 1
        %vm2572 = vcmp.gt.s32.totalorder %v2571, 0
        %v2573 = vsel %vm2572, %v2571, 0
        %v2574 = vshrl.u32 %v2573, 5
        %v2575 = vand.u32 %v2573, 31
        %v2576 = vsub.s32 32, %v2575
        %v2577 = vshrl.u32 683565275, %v2576
        %v2578 = vshll.u32 683565275, %v2575
        %v2579 = vshrl.u32 2475754826, %v2576
        %v2580 = vor.u32 %v2578, %v2579
        %v2581 = vshll.u32 2475754826, %v2575
        %v2582 = vshrl.u32 2131351028, %v2576
        %v2583 = vor.u32 %v2581, %v2582
        %v2584 = vshll.u32 2131351028, %v2575
        %v2585 = vshrl.u32 2102212464, %v2576
        %v2586 = vor.u32 %v2584, %v2585
        %v2587 = vshll.u32 2102212464, %v2575
        %v2588 = vshrl.u32 920167782, %v2576
        %v2589 = vor.u32 %v2587, %v2588
        %v2590 = vshll.u32 920167782, %v2575
        %v2591 = vshrl.u32 1326507024, %v2576
        %v2592 = vor.u32 %v2590, %v2591
        %vm2593 = vcmp.lt.s32.totalorder %v2574, 1
        %vm2594 = vcmp.lt.s32.totalorder %v2574, 2
        %vm2595 = vcmp.lt.s32.totalorder %v2574, 3
        %vm2596 = vcmp.lt.s32.totalorder %v2574, 4
        %v2597 = vsel %vm2593, %v2577, %v2580
        %v2598 = vsel %vm2596, %v2586, 2102212464
        %v2599 = vsel %vm2595, %v2583, %v2598
        %v2600 = vsel %vm2594, %v2597, %v2599
        %v2601 = vsel %vm2593, %v2580, %v2583
        %v2602 = vsel %vm2596, %v2589, 920167782
        %v2603 = vsel %vm2595, %v2586, %v2602
        %v2604 = vsel %vm2594, %v2601, %v2603
        %v2605 = vsel %vm2593, %v2583, %v2586
        %v2606 = vsel %vm2596, %v2592, 1326507024
        %v2607 = vsel %vm2595, %v2589, %v2606
        %v2608 = vsel %vm2594, %v2605, %v2607
        %v2609 = vshll.u32 %v2569, 8
        %v2610 = vand.u32 %v2609, 65535
        %v2611 = vshrl.u32 %v2609, 16
        %v2612 = vand.u32 %v2608, 65535
        %v2613 = vshrl.u32 %v2608, 16
        %v2614 = vmul.u32 %v2610, %v2612
        %v2615 = vmul.u32 %v2610, %v2613
        %v2616 = vmul.u32 %v2611, %v2612
        %v2617 = vmul.u32 %v2611, %v2613
        %v2618 = vshll.u32 %v2615, 16
        %v2619 = vshrl.u32 %v2615, 16
        %v2620 = vshll.u32 %v2616, 16
        %v2621 = vshrl.u32 %v2616, 16
        %vm2622 = vc.u32 %v2614, %v2618
        %v2623 = vsel %vm2622, 1, 0
        %v2624 = vadd.s32 %v2614, %v2618
        %v2625 = vadd.s32 %v2617, %v2623
        %vm2626 = vc.u32 %v2624, %v2620
        %v2627 = vsel %vm2626, 1, 0
        %v2628 = vadd.s32 %v2624, %v2620
        %v2629 = vadd.s32 %v2625, %v2627
        %v2630 = vadd.s32 %v2629, %v2619
        %v2631 = vadd.s32 %v2630, %v2621
        %v2632 = vand.u32 %v2609, 65535
        %v2633 = vshrl.u32 %v2609, 16
        %v2634 = vand.u32 %v2604, 65535
        %v2635 = vshrl.u32 %v2604, 16
        %v2636 = vmul.u32 %v2632, %v2634
        %v2637 = vmul.u32 %v2632, %v2635
        %v2638 = vmul.u32 %v2633, %v2634
        %v2639 = vmul.u32 %v2633, %v2635
        %v2640 = vshll.u32 %v2637, 16
        %v2641 = vshrl.u32 %v2637, 16
        %v2642 = vshll.u32 %v2638, 16
        %v2643 = vshrl.u32 %v2638, 16
        %vm2644 = vc.u32 %v2636, %v2640
        %v2645 = vsel %vm2644, 1, 0
        %v2646 = vadd.s32 %v2636, %v2640
        %v2647 = vadd.s32 %v2639, %v2645
        %vm2648 = vc.u32 %v2646, %v2642
        %v2649 = vsel %vm2648, 1, 0
        %v2650 = vadd.s32 %v2646, %v2642
        %v2651 = vadd.s32 %v2647, %v2649
        %v2652 = vadd.s32 %v2651, %v2641
        %v2653 = vadd.s32 %v2652, %v2643
        %v2654 = vmul.u32 %v2609, %v2600
        %v2655 = vadd.s32 %v2631, %v2650
        %vm2656 = vc.u32 %v2631, %v2650
        %v2657 = vadd.s32 %v2653, 1
        %v2658 = vsel %vm2656, %v2657, %v2653
        %v2659 = vadd.s32 %v2654, %v2658
        %v2660 = vadd.s32 %v2659, 536870912
        %v2661 = vshrl.u32 %v2660, 30
        %v2662 = vshll.u32 %v2661, 30
        %v2663 = vsub.s32 %v2659, %v2662
        %vm2664 = vcmp.lt.s32.totalorder %v2663, 0
        %v2665 = vsub.s32 0, %v2663
        %v2666 = vsel %vm2664, %v2665, %v2663
        %v2667 = vclz %v2666
        %v2668 = vsub.s32 %v2667, 2
        %vm2669 = vcmp.gt.s32.totalorder 0, %v2668
        %v2670 = vsel %vm2669, 0, %v2668
        %v2671 = vsub.s32 32, %v2670
        %v2672 = vshll.u32 %v2663, %v2670
        %v2673 = vshrl.u32 %v2655, %v2671
        %v2674 = vor.u32 %v2672, %v2673
        %v2675 = vsub.s32 4294967266, %v2670
        %v2676 = vadd.s32 %v2675, 127
        %v2677 = vshll.u32 %v2676, 23
        %v2678 = vor.u32 4788187, %v2677
        %v2679 = vand.u32 2147483647, %v2678
        %v2681 = vcvt.s32.f32 %v2674
        %v2682 = vmul.f32 %v2681, %v2679
        %v2683 = vxor.u32 %v2682, 2147483648
        %v2684 = vsel %vm2563, %v2683, %v2682
        %v2685 = vsub.s32 4, %v2661
        %v2686 = vsel %vm2563, %v2685, %v2661
        %v2687 = vsel %vm2562, %v235, %v2684
        %v2688 = vsel %vm2562, 0, %v2686
        %v2689 = vmul.f32 %v2687, %v2687
        %v2690 = vmul.f32 %v2689, -0.001358992
        %v2691 = vadd.f32 %v2690, 0.041655596
        %v2692 = vmul.f32 %v2689, %v2691
        %v2693 = vadd.f32 %v2692, -0.4999988
        %v2694 = vmul.f32 %v2689, %v2693
        %v2695 = vadd.f32 1.0, %v2694
        %v2696 = vmul.f32 %v2687, %v2687
        %v2697 = vmul.f32 %v2696, -0.00019511016
        %v2698 = vadd.f32 %v2697, 0.008332121
        %v2699 = vmul.f32 %v2696, %v2698
        %v2700 = vadd.f32 %v2699, -0.16666654
        %v2701 = vmul.f32 %v2696, %v2700
        %v2702 = vadd.f32 %v2701, 1.0
        %v2703 = vmul.f32 %v2702, %v2687
        %vm2704 = vweird.f32 %v235
        %v2705 = vadd.s32 %v2688, 3
        %v2706 = vand.u32 %v2705, 3
        %vm2707 = vcmp.lt.s32.totalorder %v2706, 2
        %vm2708 = vcmp.eq.s32.totalorder %v2706, 0
        %v2709 = vxor.u32 %v2703, 2147483648
        %v2710 = vsel %vm2708, %v2695, %v2709
        %vm2711 = vcmp.eq.s32.totalorder %v2706, 2
        %v2712 = vxor.u32 %v2695, 2147483648
        %v2713 = vsel %vm2711, %v2712, %v2703
        %v2714 = vsel %vm2707, %v2710, %v2713
        %v2715 = vsel %vm2704, nan, %v2714
        %2716 = vst [vmem:[%s110] sm:$0xff] %v390
        %2717 = vst [vmem:[%s110 + $0x10] sm:$0xff] %v545
        %2718 = vst [vmem:[%s110 + $0x20] sm:$0xff] %v700
        %2719 = vst [vmem:[%s110 + $0x30] sm:$0xff] %v855
        %2720 = vst [vmem:[%s110 + $0x40] sm:$0xff] %v1010
        %2721 = vst [vmem:[%s110 + $0x50] sm:$0xff] %v1165
        %2722 = vst [vmem:[%s110 + $0x60] sm:$0xff] %v1320
        %2723 = vst [vmem:[%s110 + $0x70] sm:$0xff] %v1475
        %2724 = vst [vmem:[%s110 + $0x80] sm:$0xff] %v1630
        %2725 = vst [vmem:[%s110 + $0x90] sm:$0xff] %v1785
        %2726 = vst [vmem:[%s110 + $0xa0] sm:$0xff] %v1940
        %2727 = vst [vmem:[%s110 + $0xb0] sm:$0xff] %v2095
        %2728 = vst [vmem:[%s110 + $0xc0] sm:$0xff] %v2250
        %2729 = vst [vmem:[%s110 + $0xd0] sm:$0xff] %v2405
        %2730 = vst [vmem:[%s110 + $0xe0] sm:$0xff] %v2560
        %2731 = vst [vmem:[%s110 + $0xf0] sm:$0xff] %v2715
        %v2732 = vand.u32 2147483647, %v220
        %vm2733 = vcmp.le.f32.partialorder %v2732, 0.7853982
        %vm2734 = vcmp.lt.s32.totalorder %v220, 0
        %v2735 = vand.u32 %v220, 2139095040
        %v2736 = vshrl.u32 %v2735, 23
        %v2737 = vsub.s32 %v2736, 127
        %v2738 = vand.u32 2147483647, %v220
        %v2739 = vand.u32 %v2738, 8388607
        %v2740 = vor.u32 %v2739, 8388608
        %v2741 = vsub.s32 0, %v2740
        %v2742 = vadd.s32 %v2737, 1
        %vm2743 = vcmp.gt.s32.totalorder %v2742, 0
        %v2744 = vsel %vm2743, %v2742, 0
        %v2745 = vshrl.u32 %v2744, 5
        %v2746 = vand.u32 %v2744, 31
        %v2747 = vsub.s32 32, %v2746
        %v2748 = vshrl.u32 683565275, %v2747
        %v2749 = vshll.u32 683565275, %v2746
        %v2750 = vshrl.u32 2475754826, %v2747
        %v2751 = vor.u32 %v2749, %v2750
        %v2752 = vshll.u32 2475754826, %v2746
        %v2753 = vshrl.u32 2131351028, %v2747
        %v2754 = vor.u32 %v2752, %v2753
        %v2755 = vshll.u32 2131351028, %v2746
        %v2756 = vshrl.u32 2102212464, %v2747
        %v2757 = vor.u32 %v2755, %v2756
        %v2758 = vshll.u32 2102212464, %v2746
        %v2759 = vshrl.u32 920167782, %v2747
        %v2760 = vor.u32 %v2758, %v2759
        %v2761 = vshll.u32 920167782, %v2746
        %v2762 = vshrl.u32 1326507024, %v2747
        %v2763 = vor.u32 %v2761, %v2762
        %vm2764 = vcmp.lt.s32.totalorder %v2745, 1
        %vm2765 = vcmp.lt.s32.totalorder %v2745, 2
        %vm2766 = vcmp.lt.s32.totalorder %v2745, 3
        %vm2767 = vcmp.lt.s32.totalorder %v2745, 4
        %v2768 = vsel %vm2764, %v2748, %v2751
        %v2769 = vsel %vm2767, %v2757, 2102212464
        %v2770 = vsel %vm2766, %v2754, %v2769
        %v2771 = vsel %vm2765, %v2768, %v2770
        %v2772 = vsel %vm2764, %v2751, %v2754
        %v2773 = vsel %vm2767, %v2760, 920167782
        %v2774 = vsel %vm2766, %v2757, %v2773
        %v2775 = vsel %vm2765, %v2772, %v2774
        %v2776 = vsel %vm2764, %v2754, %v2757
        %v2777 = vsel %vm2767, %v2763, 1326507024
        %v2778 = vsel %vm2766, %v2760, %v2777
        %v2779 = vsel %vm2765, %v2776, %v2778
        %v2780 = vshll.u32 %v2740, 8
        %v2781 = vand.u32 %v2780, 65535
        %v2782 = vshrl.u32 %v2780, 16
        %v2783 = vand.u32 %v2779, 65535
        %v2784 = vshrl.u32 %v2779, 16
        %v2785 = vmul.u32 %v2781, %v2783
        %v2786 = vmul.u32 %v2781, %v2784
        %v2787 = vmul.u32 %v2782, %v2783
        %v2788 = vmul.u32 %v2782, %v2784
        %v2789 = vshll.u32 %v2786, 16
        %v2790 = vshrl.u32 %v2786, 16
        %v2791 = vshll.u32 %v2787, 16
        %v2792 = vshrl.u32 %v2787, 16
        %vm2793 = vc.u32 %v2785, %v2789
        %v2794 = vsel %vm2793, 1, 0
        %v2795 = vadd.s32 %v2785, %v2789
        %v2796 = vadd.s32 %v2788, %v2794
        %vm2797 = vc.u32 %v2795, %v2791
        %v2798 = vsel %vm2797, 1, 0
        %v2799 = vadd.s32 %v2795, %v2791
        %v2800 = vadd.s32 %v2796, %v2798
        %v2801 = vadd.s32 %v2800, %v2790
        %v2802 = vadd.s32 %v2801, %v2792
        %v2803 = vand.u32 %v2780, 65535
        %v2804 = vshrl.u32 %v2780, 16
        %v2805 = vand.u32 %v2775, 65535
        %v2806 = vshrl.u32 %v2775, 16
        %v2807 = vmul.u32 %v2803, %v2805
        %v2808 = vmul.u32 %v2803, %v2806
        %v2809 = vmul.u32 %v2804, %v2805
        %v2810 = vmul.u32 %v2804, %v2806
        %v2811 = vshll.u32 %v2808, 16
        %v2812 = vshrl.u32 %v2808, 16
        %v2813 = vshll.u32 %v2809, 16
        %v2814 = vshrl.u32 %v2809, 16
        %vm2815 = vc.u32 %v2807, %v2811
        %v2816 = vsel %vm2815, 1, 0
        %v2817 = vadd.s32 %v2807, %v2811
        %v2818 = vadd.s32 %v2810, %v2816
        %vm2819 = vc.u32 %v2817, %v2813
        %v2820 = vsel %vm2819, 1, 0
        %v2821 = vadd.s32 %v2817, %v2813
        %v2822 = vadd.s32 %v2818, %v2820
        %v2823 = vadd.s32 %v2822, %v2812
        %v2824 = vadd.s32 %v2823, %v2814
        %v2825 = vmul.u32 %v2780, %v2771
        %v2826 = vadd.s32 %v2802, %v2821
        %vm2827 = vc.u32 %v2802, %v2821
        %v2828 = vadd.s32 %v2824, 1
        %v2829 = vsel %vm2827, %v2828, %v2824
        %v2830 = vadd.s32 %v2825, %v2829
        %v2831 = vadd.s32 %v2830, 536870912
        %v2832 = vshrl.u32 %v2831, 30
        %v2833 = vshll.u32 %v2832, 30
        %v2834 = vsub.s32 %v2830, %v2833
        %vm2835 = vcmp.lt.s32.totalorder %v2834, 0
        %v2836 = vsub.s32 0, %v2834
        %v2837 = vsel %vm2835, %v2836, %v2834
        %v2838 = vclz %v2837
        %v2839 = vsub.s32 %v2838, 2
        %vm2840 = vcmp.gt.s32.totalorder 0, %v2839
        %v2841 = vsel %vm2840, 0, %v2839
        %v2842 = vsub.s32 32, %v2841
        %v2843 = vshll.u32 %v2834, %v2841
        %v2844 = vshrl.u32 %v2826, %v2842
        %v2845 = vor.u32 %v2843, %v2844
        %v2846 = vsub.s32 4294967266, %v2841
        %v2847 = vadd.s32 %v2846, 127
        %v2848 = vshll.u32 %v2847, 23
        %v2849 = vor.u32 4788187, %v2848
        %v2850 = vand.u32 2147483647, %v2849
        %v2852 = vcvt.s32.f32 %v2845
        %v2853 = vmul.f32 %v2852, %v2850
        %v2854 = vxor.u32 %v2853, 2147483648
        %v2855 = vsel %vm2734, %v2854, %v2853
        %v2856 = vsub.s32 4, %v2832
        %v2857 = vsel %vm2734, %v2856, %v2832
        %v2858 = vsel %vm2733, %v220, %v2855
        %v2859 = vsel %vm2733, 0, %v2857
        %v2860 = vmul.f32 %v2858, %v2858
        %v2861 = vmul.f32 %v2860, -0.001358992
        %v2862 = vadd.f32 %v2861, 0.041655596
        %v2863 = vmul.f32 %v2860, %v2862
        %v2864 = vadd.f32 %v2863, -0.4999988
        %v2865 = vmul.f32 %v2860, %v2864
        %v2866 = vadd.f32 1.0, %v2865
        %v2867 = vmul.f32 %v2858, %v2858
        %v2868 = vmul.f32 %v2867, -0.00019511016
        %v2869 = vadd.f32 %v2868, 0.008332121
        %v2870 = vmul.f32 %v2867, %v2869
        %v2871 = vadd.f32 %v2870, -0.16666654
        %v2872 = vmul.f32 %v2867, %v2871
        %v2873 = vadd.f32 %v2872, 1.0
        %v2874 = vmul.f32 %v2873, %v2858
        %vm2875 = vweird.f32 %v220
        %v2876 = vand.u32 %v2859, 3
        %vm2877 = vcmp.lt.s32.totalorder %v2876, 2
        %vm2878 = vcmp.eq.s32.totalorder %v2876, 0
        %v2879 = vxor.u32 %v2874, 2147483648
        %v2880 = vsel %vm2878, %v2866, %v2879
        %vm2881 = vcmp.eq.s32.totalorder %v2876, 2
        %v2882 = vxor.u32 %v2866, 2147483648
        %v2883 = vsel %vm2881, %v2882, %v2874
        %v2884 = vsel %vm2877, %v2880, %v2883
        %v2885 = vsel %vm2875, nan, %v2884
        %v2886 = vand.u32 2147483647, %v221
        %vm2887 = vcmp.le.f32.partialorder %v2886, 0.7853982
        %vm2888 = vcmp.lt.s32.totalorder %v221, 0
        %v2889 = vand.u32 %v221, 2139095040
        %v2890 = vshrl.u32 %v2889, 23
        %v2891 = vsub.s32 %v2890, 127
        %v2892 = vand.u32 2147483647, %v221
        %v2893 = vand.u32 %v2892, 8388607
        %v2894 = vor.u32 %v2893, 8388608
        %v2895 = vsub.s32 0, %v2894
        %v2896 = vadd.s32 %v2891, 1
        %vm2897 = vcmp.gt.s32.totalorder %v2896, 0
        %v2898 = vsel %vm2897, %v2896, 0
        %v2899 = vshrl.u32 %v2898, 5
        %v2900 = vand.u32 %v2898, 31
        %v2901 = vsub.s32 32, %v2900
        %v2902 = vshrl.u32 683565275, %v2901
        %v2903 = vshll.u32 683565275, %v2900
        %v2904 = vshrl.u32 2475754826, %v2901
        %v2905 = vor.u32 %v2903, %v2904
        %v2906 = vshll.u32 2475754826, %v2900
        %v2907 = vshrl.u32 2131351028, %v2901
        %v2908 = vor.u32 %v2906, %v2907
        %v2909 = vshll.u32 2131351028, %v2900
        %v2910 = vshrl.u32 2102212464, %v2901
        %v2911 = vor.u32 %v2909, %v2910
        %v2912 = vshll.u32 2102212464, %v2900
        %v2913 = vshrl.u32 920167782, %v2901
        %v2914 = vor.u32 %v2912, %v2913
        %v2915 = vshll.u32 920167782, %v2900
        %v2916 = vshrl.u32 1326507024, %v2901
        %v2917 = vor.u32 %v2915, %v2916
        %vm2918 = vcmp.lt.s32.totalorder %v2899, 1
        %vm2919 = vcmp.lt.s32.totalorder %v2899, 2
        %vm2920 = vcmp.lt.s32.totalorder %v2899, 3
        %vm2921 = vcmp.lt.s32.totalorder %v2899, 4
        %v2922 = vsel %vm2918, %v2902, %v2905
        %v2923 = vsel %vm2921, %v2911, 2102212464
        %v2924 = vsel %vm2920, %v2908, %v2923
        %v2925 = vsel %vm2919, %v2922, %v2924
        %v2926 = vsel %vm2918, %v2905, %v2908
        %v2927 = vsel %vm2921, %v2914, 920167782
        %v2928 = vsel %vm2920, %v2911, %v2927
        %v2929 = vsel %vm2919, %v2926, %v2928
        %v2930 = vsel %vm2918, %v2908, %v2911
        %v2931 = vsel %vm2921, %v2917, 1326507024
        %v2932 = vsel %vm2920, %v2914, %v2931
        %v2933 = vsel %vm2919, %v2930, %v2932
        %v2934 = vshll.u32 %v2894, 8
        %v2935 = vand.u32 %v2934, 65535
        %v2936 = vshrl.u32 %v2934, 16
        %v2937 = vand.u32 %v2933, 65535
        %v2938 = vshrl.u32 %v2933, 16
        %v2939 = vmul.u32 %v2935, %v2937
        %v2940 = vmul.u32 %v2935, %v2938
        %v2941 = vmul.u32 %v2936, %v2937
        %v2942 = vmul.u32 %v2936, %v2938
        %v2943 = vshll.u32 %v2940, 16
        %v2944 = vshrl.u32 %v2940, 16
        %v2945 = vshll.u32 %v2941, 16
        %v2946 = vshrl.u32 %v2941, 16
        %vm2947 = vc.u32 %v2939, %v2943
        %v2948 = vsel %vm2947, 1, 0
        %v2949 = vadd.s32 %v2939, %v2943
        %v2950 = vadd.s32 %v2942, %v2948
        %vm2951 = vc.u32 %v2949, %v2945
        %v2952 = vsel %vm2951, 1, 0
        %v2953 = vadd.s32 %v2949, %v2945
        %v2954 = vadd.s32 %v2950, %v2952
        %v2955 = vadd.s32 %v2954, %v2944
        %v2956 = vadd.s32 %v2955, %v2946
        %v2957 = vand.u32 %v2934, 65535
        %v2958 = vshrl.u32 %v2934, 16
        %v2959 = vand.u32 %v2929, 65535
        %v2960 = vshrl.u32 %v2929, 16
        %v2961 = vmul.u32 %v2957, %v2959
        %v2962 = vmul.u32 %v2957, %v2960
        %v2963 = vmul.u32 %v2958, %v2959
        %v2964 = vmul.u32 %v2958, %v2960
        %v2965 = vshll.u32 %v2962, 16
        %v2966 = vshrl.u32 %v2962, 16
        %v2967 = vshll.u32 %v2963, 16
        %v2968 = vshrl.u32 %v2963, 16
        %vm2969 = vc.u32 %v2961, %v2965
        %v2970 = vsel %vm2969, 1, 0
        %v2971 = vadd.s32 %v2961, %v2965
        %v2972 = vadd.s32 %v2964, %v2970
        %vm2973 = vc.u32 %v2971, %v2967
        %v2974 = vsel %vm2973, 1, 0
        %v2975 = vadd.s32 %v2971, %v2967
        %v2976 = vadd.s32 %v2972, %v2974
        %v2977 = vadd.s32 %v2976, %v2966
        %v2978 = vadd.s32 %v2977, %v2968
        %v2979 = vmul.u32 %v2934, %v2925
        %v2980 = vadd.s32 %v2956, %v2975
        %vm2981 = vc.u32 %v2956, %v2975
        %v2982 = vadd.s32 %v2978, 1
        %v2983 = vsel %vm2981, %v2982, %v2978
        %v2984 = vadd.s32 %v2979, %v2983
        %v2985 = vadd.s32 %v2984, 536870912
        %v2986 = vshrl.u32 %v2985, 30
        %v2987 = vshll.u32 %v2986, 30
        %v2988 = vsub.s32 %v2984, %v2987
        %vm2989 = vcmp.lt.s32.totalorder %v2988, 0
        %v2990 = vsub.s32 0, %v2988
        %v2991 = vsel %vm2989, %v2990, %v2988
        %v2992 = vclz %v2991
        %v2993 = vsub.s32 %v2992, 2
        %vm2994 = vcmp.gt.s32.totalorder 0, %v2993
        %v2995 = vsel %vm2994, 0, %v2993
        %v2996 = vsub.s32 32, %v2995
        %v2997 = vshll.u32 %v2988, %v2995
        %v2998 = vshrl.u32 %v2980, %v2996
        %v2999 = vor.u32 %v2997, %v2998
        %v3000 = vsub.s32 4294967266, %v2995
        %v3001 = vadd.s32 %v3000, 127
        %v3002 = vshll.u32 %v3001, 23
        %v3003 = vor.u32 4788187, %v3002
        %v3004 = vand.u32 2147483647, %v3003
        %v3006 = vcvt.s32.f32 %v2999
        %v3007 = vmul.f32 %v3006, %v3004
        %v3008 = vxor.u32 %v3007, 2147483648
        %v3009 = vsel %vm2888, %v3008, %v3007
        %v3010 = vsub.s32 4, %v2986
        %v3011 = vsel %vm2888, %v3010, %v2986
        %v3012 = vsel %vm2887, %v221, %v3009
        %v3013 = vsel %vm2887, 0, %v3011
        %v3014 = vmul.f32 %v3012, %v3012
        %v3015 = vmul.f32 %v3014, -0.001358992
        %v3016 = vadd.f32 %v3015, 0.041655596
        %v3017 = vmul.f32 %v3014, %v3016
        %v3018 = vadd.f32 %v3017, -0.4999988
        %v3019 = vmul.f32 %v3014, %v3018
        %v3020 = vadd.f32 1.0, %v3019
        %v3021 = vmul.f32 %v3012, %v3012
        %v3022 = vmul.f32 %v3021, -0.00019511016
        %v3023 = vadd.f32 %v3022, 0.008332121
        %v3024 = vmul.f32 %v3021, %v3023
        %v3025 = vadd.f32 %v3024, -0.16666654
        %v3026 = vmul.f32 %v3021, %v3025
        %v3027 = vadd.f32 %v3026, 1.0
        %v3028 = vmul.f32 %v3027, %v3012
        %vm3029 = vweird.f32 %v221
        %v3030 = vand.u32 %v3013, 3
        %vm3031 = vcmp.lt.s32.totalorder %v3030, 2
        %vm3032 = vcmp.eq.s32.totalorder %v3030, 0
        %v3033 = vxor.u32 %v3028, 2147483648
        %v3034 = vsel %vm3032, %v3020, %v3033
        %vm3035 = vcmp.eq.s32.totalorder %v3030, 2
        %v3036 = vxor.u32 %v3020, 2147483648
        %v3037 = vsel %vm3035, %v3036, %v3028
        %v3038 = vsel %vm3031, %v3034, %v3037
        %v3039 = vsel %vm3029, nan, %v3038
        %v3040 = vand.u32 2147483647, %v222
        %vm3041 = vcmp.le.f32.partialorder %v3040, 0.7853982
        %vm3042 = vcmp.lt.s32.totalorder %v222, 0
        %v3043 = vand.u32 %v222, 2139095040
        %v3044 = vshrl.u32 %v3043, 23
        %v3045 = vsub.s32 %v3044, 127
        %v3046 = vand.u32 2147483647, %v222
        %v3047 = vand.u32 %v3046, 8388607
        %v3048 = vor.u32 %v3047, 8388608
        %v3049 = vsub.s32 0, %v3048
        %v3050 = vadd.s32 %v3045, 1
        %vm3051 = vcmp.gt.s32.totalorder %v3050, 0
        %v3052 = vsel %vm3051, %v3050, 0
        %v3053 = vshrl.u32 %v3052, 5
        %v3054 = vand.u32 %v3052, 31
        %v3055 = vsub.s32 32, %v3054
        %v3056 = vshrl.u32 683565275, %v3055
        %v3057 = vshll.u32 683565275, %v3054
        %v3058 = vshrl.u32 2475754826, %v3055
        %v3059 = vor.u32 %v3057, %v3058
        %v3060 = vshll.u32 2475754826, %v3054
        %v3061 = vshrl.u32 2131351028, %v3055
        %v3062 = vor.u32 %v3060, %v3061
        %v3063 = vshll.u32 2131351028, %v3054
        %v3064 = vshrl.u32 2102212464, %v3055
        %v3065 = vor.u32 %v3063, %v3064
        %v3066 = vshll.u32 2102212464, %v3054
        %v3067 = vshrl.u32 920167782, %v3055
        %v3068 = vor.u32 %v3066, %v3067
        %v3069 = vshll.u32 920167782, %v3054
        %v3070 = vshrl.u32 1326507024, %v3055
        %v3071 = vor.u32 %v3069, %v3070
        %vm3072 = vcmp.lt.s32.totalorder %v3053, 1
        %vm3073 = vcmp.lt.s32.totalorder %v3053, 2
        %vm3074 = vcmp.lt.s32.totalorder %v3053, 3
        %vm3075 = vcmp.lt.s32.totalorder %v3053, 4
        %v3076 = vsel %vm3072, %v3056, %v3059
        %v3077 = vsel %vm3075, %v3065, 2102212464
        %v3078 = vsel %vm3074, %v3062, %v3077
        %v3079 = vsel %vm3073, %v3076, %v3078
        %v3080 = vsel %vm3072, %v3059, %v3062
        %v3081 = vsel %vm3075, %v3068, 920167782
        %v3082 = vsel %vm3074, %v3065, %v3081
        %v3083 = vsel %vm3073, %v3080, %v3082
        %v3084 = vsel %vm3072, %v3062, %v3065
        %v3085 = vsel %vm3075, %v3071, 1326507024
        %v3086 = vsel %vm3074, %v3068, %v3085
        %v3087 = vsel %vm3073, %v3084, %v3086
        %v3088 = vshll.u32 %v3048, 8
        %v3089 = vand.u32 %v3088, 65535
        %v3090 = vshrl.u32 %v3088, 16
        %v3091 = vand.u32 %v3087, 65535
        %v3092 = vshrl.u32 %v3087, 16
        %v3093 = vmul.u32 %v3089, %v3091
        %v3094 = vmul.u32 %v3089, %v3092
        %v3095 = vmul.u32 %v3090, %v3091
        %v3096 = vmul.u32 %v3090, %v3092
        %v3097 = vshll.u32 %v3094, 16
        %v3098 = vshrl.u32 %v3094, 16
        %v3099 = vshll.u32 %v3095, 16
        %v3100 = vshrl.u32 %v3095, 16
        %vm3101 = vc.u32 %v3093, %v3097
        %v3102 = vsel %vm3101, 1, 0
        %v3103 = vadd.s32 %v3093, %v3097
        %v3104 = vadd.s32 %v3096, %v3102
        %vm3105 = vc.u32 %v3103, %v3099
        %v3106 = vsel %vm3105, 1, 0
        %v3107 = vadd.s32 %v3103, %v3099
        %v3108 = vadd.s32 %v3104, %v3106
        %v3109 = vadd.s32 %v3108, %v3098
        %v3110 = vadd.s32 %v3109, %v3100
        %v3111 = vand.u32 %v3088, 65535
        %v3112 = vshrl.u32 %v3088, 16
        %v3113 = vand.u32 %v3083, 65535
        %v3114 = vshrl.u32 %v3083, 16
        %v3115 = vmul.u32 %v3111, %v3113
        %v3116 = vmul.u32 %v3111, %v3114
        %v3117 = vmul.u32 %v3112, %v3113
        %v3118 = vmul.u32 %v3112, %v3114
        %v3119 = vshll.u32 %v3116, 16
        %v3120 = vshrl.u32 %v3116, 16
        %v3121 = vshll.u32 %v3117, 16
        %v3122 = vshrl.u32 %v3117, 16
        %vm3123 = vc.u32 %v3115, %v3119
        %v3124 = vsel %vm3123, 1, 0
        %v3125 = vadd.s32 %v3115, %v3119
        %v3126 = vadd.s32 %v3118, %v3124
        %vm3127 = vc.u32 %v3125, %v3121
        %v3128 = vsel %vm3127, 1, 0
        %v3129 = vadd.s32 %v3125, %v3121
        %v3130 = vadd.s32 %v3126, %v3128
        %v3131 = vadd.s32 %v3130, %v3120
        %v3132 = vadd.s32 %v3131, %v3122
        %v3133 = vmul.u32 %v3088, %v3079
        %v3134 = vadd.s32 %v3110, %v3129
        %vm3135 = vc.u32 %v3110, %v3129
        %v3136 = vadd.s32 %v3132, 1
        %v3137 = vsel %vm3135, %v3136, %v3132
        %v3138 = vadd.s32 %v3133, %v3137
        %v3139 = vadd.s32 %v3138, 536870912
        %v3140 = vshrl.u32 %v3139, 30
        %v3141 = vshll.u32 %v3140, 30
        %v3142 = vsub.s32 %v3138, %v3141
        %vm3143 = vcmp.lt.s32.totalorder %v3142, 0
        %v3144 = vsub.s32 0, %v3142
        %v3145 = vsel %vm3143, %v3144, %v3142
        %v3146 = vclz %v3145
        %v3147 = vsub.s32 %v3146, 2
        %vm3148 = vcmp.gt.s32.totalorder 0, %v3147
        %v3149 = vsel %vm3148, 0, %v3147
        %v3150 = vsub.s32 32, %v3149
        %v3151 = vshll.u32 %v3142, %v3149
        %v3152 = vshrl.u32 %v3134, %v3150
        %v3153 = vor.u32 %v3151, %v3152
        %v3154 = vsub.s32 4294967266, %v3149
        %v3155 = vadd.s32 %v3154, 127
        %v3156 = vshll.u32 %v3155, 23
        %v3157 = vor.u32 4788187, %v3156
        %v3158 = vand.u32 2147483647, %v3157
        %v3160 = vcvt.s32.f32 %v3153
        %v3161 = vmul.f32 %v3160, %v3158
        %v3162 = vxor.u32 %v3161, 2147483648
        %v3163 = vsel %vm3042, %v3162, %v3161
        %v3164 = vsub.s32 4, %v3140
        %v3165 = vsel %vm3042, %v3164, %v3140
        %v3166 = vsel %vm3041, %v222, %v3163
        %v3167 = vsel %vm3041, 0, %v3165
        %v3168 = vmul.f32 %v3166, %v3166
        %v3169 = vmul.f32 %v3168, -0.001358992
        %v3170 = vadd.f32 %v3169, 0.041655596
        %v3171 = vmul.f32 %v3168, %v3170
        %v3172 = vadd.f32 %v3171, -0.4999988
        %v3173 = vmul.f32 %v3168, %v3172
        %v3174 = vadd.f32 1.0, %v3173
        %v3175 = vmul.f32 %v3166, %v3166
        %v3176 = vmul.f32 %v3175, -0.00019511016
        %v3177 = vadd.f32 %v3176, 0.008332121
        %v3178 = vmul.f32 %v3175, %v3177
        %v3179 = vadd.f32 %v3178, -0.16666654
        %v3180 = vmul.f32 %v3175, %v3179
        %v3181 = vadd.f32 %v3180, 1.0
        %v3182 = vmul.f32 %v3181, %v3166
        %vm3183 = vweird.f32 %v222
        %v3184 = vand.u32 %v3167, 3
        %vm3185 = vcmp.lt.s32.totalorder %v3184, 2
        %vm3186 = vcmp.eq.s32.totalorder %v3184, 0
        %v3187 = vxor.u32 %v3182, 2147483648
        %v3188 = vsel %vm3186, %v3174, %v3187
        %vm3189 = vcmp.eq.s32.totalorder %v3184, 2
        %v3190 = vxor.u32 %v3174, 2147483648
        %v3191 = vsel %vm3189, %v3190, %v3182
        %v3192 = vsel %vm3185, %v3188, %v3191
        %v3193 = vsel %vm3183, nan, %v3192
        %v3194 = vand.u32 2147483647, %v223
        %vm3195 = vcmp.le.f32.partialorder %v3194, 0.7853982
        %vm3196 = vcmp.lt.s32.totalorder %v223, 0
        %v3197 = vand.u32 %v223, 2139095040
        %v3198 = vshrl.u32 %v3197, 23
        %v3199 = vsub.s32 %v3198, 127
        %v3200 = vand.u32 2147483647, %v223
        %v3201 = vand.u32 %v3200, 8388607
        %v3202 = vor.u32 %v3201, 8388608
        %v3203 = vsub.s32 0, %v3202
        %v3204 = vadd.s32 %v3199, 1
        %vm3205 = vcmp.gt.s32.totalorder %v3204, 0
        %v3206 = vsel %vm3205, %v3204, 0
        %v3207 = vshrl.u32 %v3206, 5
        %v3208 = vand.u32 %v3206, 31
        %v3209 = vsub.s32 32, %v3208
        %v3210 = vshrl.u32 683565275, %v3209
        %v3211 = vshll.u32 683565275, %v3208
        %v3212 = vshrl.u32 2475754826, %v3209
        %v3213 = vor.u32 %v3211, %v3212
        %v3214 = vshll.u32 2475754826, %v3208
        %v3215 = vshrl.u32 2131351028, %v3209
        %v3216 = vor.u32 %v3214, %v3215
        %v3217 = vshll.u32 2131351028, %v3208
        %v3218 = vshrl.u32 2102212464, %v3209
        %v3219 = vor.u32 %v3217, %v3218
        %v3220 = vshll.u32 2102212464, %v3208
        %v3221 = vshrl.u32 920167782, %v3209
        %v3222 = vor.u32 %v3220, %v3221
        %v3223 = vshll.u32 920167782, %v3208
        %v3224 = vshrl.u32 1326507024, %v3209
        %v3225 = vor.u32 %v3223, %v3224
        %vm3226 = vcmp.lt.s32.totalorder %v3207, 1
        %vm3227 = vcmp.lt.s32.totalorder %v3207, 2
        %vm3228 = vcmp.lt.s32.totalorder %v3207, 3
        %vm3229 = vcmp.lt.s32.totalorder %v3207, 4
        %v3230 = vsel %vm3226, %v3210, %v3213
        %v3231 = vsel %vm3229, %v3219, 2102212464
        %v3232 = vsel %vm3228, %v3216, %v3231
        %v3233 = vsel %vm3227, %v3230, %v3232
        %v3234 = vsel %vm3226, %v3213, %v3216
        %v3235 = vsel %vm3229, %v3222, 920167782
        %v3236 = vsel %vm3228, %v3219, %v3235
        %v3237 = vsel %vm3227, %v3234, %v3236
        %v3238 = vsel %vm3226, %v3216, %v3219
        %v3239 = vsel %vm3229, %v3225, 1326507024
        %v3240 = vsel %vm3228, %v3222, %v3239
        %v3241 = vsel %vm3227, %v3238, %v3240
        %v3242 = vshll.u32 %v3202, 8
        %v3243 = vand.u32 %v3242, 65535
        %v3244 = vshrl.u32 %v3242, 16
        %v3245 = vand.u32 %v3241, 65535
        %v3246 = vshrl.u32 %v3241, 16
        %v3247 = vmul.u32 %v3243, %v3245
        %v3248 = vmul.u32 %v3243, %v3246
        %v3249 = vmul.u32 %v3244, %v3245
        %v3250 = vmul.u32 %v3244, %v3246
        %v3251 = vshll.u32 %v3248, 16
        %v3252 = vshrl.u32 %v3248, 16
        %v3253 = vshll.u32 %v3249, 16
        %v3254 = vshrl.u32 %v3249, 16
        %vm3255 = vc.u32 %v3247, %v3251
        %v3256 = vsel %vm3255, 1, 0
        %v3257 = vadd.s32 %v3247, %v3251
        %v3258 = vadd.s32 %v3250, %v3256
        %vm3259 = vc.u32 %v3257, %v3253
        %v3260 = vsel %vm3259, 1, 0
        %v3261 = vadd.s32 %v3257, %v3253
        %v3262 = vadd.s32 %v3258, %v3260
        %v3263 = vadd.s32 %v3262, %v3252
        %v3264 = vadd.s32 %v3263, %v3254
        %v3265 = vand.u32 %v3242, 65535
        %v3266 = vshrl.u32 %v3242, 16
        %v3267 = vand.u32 %v3237, 65535
        %v3268 = vshrl.u32 %v3237, 16
        %v3269 = vmul.u32 %v3265, %v3267
        %v3270 = vmul.u32 %v3265, %v3268
        %v3271 = vmul.u32 %v3266, %v3267
        %v3272 = vmul.u32 %v3266, %v3268
        %v3273 = vshll.u32 %v3270, 16
        %v3274 = vshrl.u32 %v3270, 16
        %v3275 = vshll.u32 %v3271, 16
        %v3276 = vshrl.u32 %v3271, 16
        %vm3277 = vc.u32 %v3269, %v3273
        %v3278 = vsel %vm3277, 1, 0
        %v3279 = vadd.s32 %v3269, %v3273
        %v3280 = vadd.s32 %v3272, %v3278
        %vm3281 = vc.u32 %v3279, %v3275
        %v3282 = vsel %vm3281, 1, 0
        %v3283 = vadd.s32 %v3279, %v3275
        %v3284 = vadd.s32 %v3280, %v3282
        %v3285 = vadd.s32 %v3284, %v3274
        %v3286 = vadd.s32 %v3285, %v3276
        %v3287 = vmul.u32 %v3242, %v3233
        %v3288 = vadd.s32 %v3264, %v3283
        %vm3289 = vc.u32 %v3264, %v3283
        %v3290 = vadd.s32 %v3286, 1
        %v3291 = vsel %vm3289, %v3290, %v3286
        %v3292 = vadd.s32 %v3287, %v3291
        %v3293 = vadd.s32 %v3292, 536870912
        %v3294 = vshrl.u32 %v3293, 30
        %v3295 = vshll.u32 %v3294, 30
        %v3296 = vsub.s32 %v3292, %v3295
        %vm3297 = vcmp.lt.s32.totalorder %v3296, 0
        %v3298 = vsub.s32 0, %v3296
        %v3299 = vsel %vm3297, %v3298, %v3296
        %v3300 = vclz %v3299
        %v3301 = vsub.s32 %v3300, 2
        %vm3302 = vcmp.gt.s32.totalorder 0, %v3301
        %v3303 = vsel %vm3302, 0, %v3301
        %v3304 = vsub.s32 32, %v3303
        %v3305 = vshll.u32 %v3296, %v3303
        %v3306 = vshrl.u32 %v3288, %v3304
        %v3307 = vor.u32 %v3305, %v3306
        %v3308 = vsub.s32 4294967266, %v3303
        %v3309 = vadd.s32 %v3308, 127
        %v3310 = vshll.u32 %v3309, 23
        %v3311 = vor.u32 4788187, %v3310
        %v3312 = vand.u32 2147483647, %v3311
        %v3314 = vcvt.s32.f32 %v3307
        %v3315 = vmul.f32 %v3314, %v3312
        %v3316 = vxor.u32 %v3315, 2147483648
        %v3317 = vsel %vm3196, %v3316, %v3315
        %v3318 = vsub.s32 4, %v3294
        %v3319 = vsel %vm3196, %v3318, %v3294
        %v3320 = vsel %vm3195, %v223, %v3317
        %v3321 = vsel %vm3195, 0, %v3319
        %v3322 = vmul.f32 %v3320, %v3320
        %v3323 = vmul.f32 %v3322, -0.001358992
        %v3324 = vadd.f32 %v3323, 0.041655596
        %v3325 = vmul.f32 %v3322, %v3324
        %v3326 = vadd.f32 %v3325, -0.4999988
        %v3327 = vmul.f32 %v3322, %v3326
        %v3328 = vadd.f32 1.0, %v3327
        %v3329 = vmul.f32 %v3320, %v3320
        %v3330 = vmul.f32 %v3329, -0.00019511016
        %v3331 = vadd.f32 %v3330, 0.008332121
        %v3332 = vmul.f32 %v3329, %v3331
        %v3333 = vadd.f32 %v3332, -0.16666654
        %v3334 = vmul.f32 %v3329, %v3333
        %v3335 = vadd.f32 %v3334, 1.0
        %v3336 = vmul.f32 %v3335, %v3320
        %vm3337 = vweird.f32 %v223
        %v3338 = vand.u32 %v3321, 3
        %vm3339 = vcmp.lt.s32.totalorder %v3338, 2
        %vm3340 = vcmp.eq.s32.totalorder %v3338, 0
        %v3341 = vxor.u32 %v3336, 2147483648
        %v3342 = vsel %vm3340, %v3328, %v3341
        %vm3343 = vcmp.eq.s32.totalorder %v3338, 2
        %v3344 = vxor.u32 %v3328, 2147483648
        %v3345 = vsel %vm3343, %v3344, %v3336
        %v3346 = vsel %vm3339, %v3342, %v3345
        %v3347 = vsel %vm3337, nan, %v3346
        %v3348 = vand.u32 2147483647, %v224
        %vm3349 = vcmp.le.f32.partialorder %v3348, 0.7853982
        %vm3350 = vcmp.lt.s32.totalorder %v224, 0
        %v3351 = vand.u32 %v224, 2139095040
        %v3352 = vshrl.u32 %v3351, 23
        %v3353 = vsub.s32 %v3352, 127
        %v3354 = vand.u32 2147483647, %v224
        %v3355 = vand.u32 %v3354, 8388607
        %v3356 = vor.u32 %v3355, 8388608
        %v3357 = vsub.s32 0, %v3356
        %v3358 = vadd.s32 %v3353, 1
        %vm3359 = vcmp.gt.s32.totalorder %v3358, 0
        %v3360 = vsel %vm3359, %v3358, 0
        %v3361 = vshrl.u32 %v3360, 5
        %v3362 = vand.u32 %v3360, 31
        %v3363 = vsub.s32 32, %v3362
        %v3364 = vshrl.u32 683565275, %v3363
        %v3365 = vshll.u32 683565275, %v3362
        %v3366 = vshrl.u32 2475754826, %v3363
        %v3367 = vor.u32 %v3365, %v3366
        %v3368 = vshll.u32 2475754826, %v3362
        %v3369 = vshrl.u32 2131351028, %v3363
        %v3370 = vor.u32 %v3368, %v3369
        %v3371 = vshll.u32 2131351028, %v3362
        %v3372 = vshrl.u32 2102212464, %v3363
        %v3373 = vor.u32 %v3371, %v3372
        %v3374 = vshll.u32 2102212464, %v3362
        %v3375 = vshrl.u32 920167782, %v3363
        %v3376 = vor.u32 %v3374, %v3375
        %v3377 = vshll.u32 920167782, %v3362
        %v3378 = vshrl.u32 1326507024, %v3363
        %v3379 = vor.u32 %v3377, %v3378
        %vm3380 = vcmp.lt.s32.totalorder %v3361, 1
        %vm3381 = vcmp.lt.s32.totalorder %v3361, 2
        %vm3382 = vcmp.lt.s32.totalorder %v3361, 3
        %vm3383 = vcmp.lt.s32.totalorder %v3361, 4
        %v3384 = vsel %vm3380, %v3364, %v3367
        %v3385 = vsel %vm3383, %v3373, 2102212464
        %v3386 = vsel %vm3382, %v3370, %v3385
        %v3387 = vsel %vm3381, %v3384, %v3386
        %v3388 = vsel %vm3380, %v3367, %v3370
        %v3389 = vsel %vm3383, %v3376, 920167782
        %v3390 = vsel %vm3382, %v3373, %v3389
        %v3391 = vsel %vm3381, %v3388, %v3390
        %v3392 = vsel %vm3380, %v3370, %v3373
        %v3393 = vsel %vm3383, %v3379, 1326507024
        %v3394 = vsel %vm3382, %v3376, %v3393
        %v3395 = vsel %vm3381, %v3392, %v3394
        %v3396 = vshll.u32 %v3356, 8
        %v3397 = vand.u32 %v3396, 65535
        %v3398 = vshrl.u32 %v3396, 16
        %v3399 = vand.u32 %v3395, 65535
        %v3400 = vshrl.u32 %v3395, 16
        %v3401 = vmul.u32 %v3397, %v3399
        %v3402 = vmul.u32 %v3397, %v3400
        %v3403 = vmul.u32 %v3398, %v3399
        %v3404 = vmul.u32 %v3398, %v3400
        %v3405 = vshll.u32 %v3402, 16
        %v3406 = vshrl.u32 %v3402, 16
        %v3407 = vshll.u32 %v3403, 16
        %v3408 = vshrl.u32 %v3403, 16
        %vm3409 = vc.u32 %v3401, %v3405
        %v3410 = vsel %vm3409, 1, 0
        %v3411 = vadd.s32 %v3401, %v3405
        %v3412 = vadd.s32 %v3404, %v3410
        %vm3413 = vc.u32 %v3411, %v3407
        %v3414 = vsel %vm3413, 1, 0
        %v3415 = vadd.s32 %v3411, %v3407
        %v3416 = vadd.s32 %v3412, %v3414
        %v3417 = vadd.s32 %v3416, %v3406
        %v3418 = vadd.s32 %v3417, %v3408
        %v3419 = vand.u32 %v3396, 65535
        %v3420 = vshrl.u32 %v3396, 16
        %v3421 = vand.u32 %v3391, 65535
        %v3422 = vshrl.u32 %v3391, 16
        %v3423 = vmul.u32 %v3419, %v3421
        %v3424 = vmul.u32 %v3419, %v3422
        %v3425 = vmul.u32 %v3420, %v3421
        %v3426 = vmul.u32 %v3420, %v3422
        %v3427 = vshll.u32 %v3424, 16
        %v3428 = vshrl.u32 %v3424, 16
        %v3429 = vshll.u32 %v3425, 16
        %v3430 = vshrl.u32 %v3425, 16
        %vm3431 = vc.u32 %v3423, %v3427
        %v3432 = vsel %vm3431, 1, 0
        %v3433 = vadd.s32 %v3423, %v3427
        %v3434 = vadd.s32 %v3426, %v3432
        %vm3435 = vc.u32 %v3433, %v3429
        %v3436 = vsel %vm3435, 1, 0
        %v3437 = vadd.s32 %v3433, %v3429
        %v3438 = vadd.s32 %v3434, %v3436
        %v3439 = vadd.s32 %v3438, %v3428
        %v3440 = vadd.s32 %v3439, %v3430
        %v3441 = vmul.u32 %v3396, %v3387
        %v3442 = vadd.s32 %v3418, %v3437
        %vm3443 = vc.u32 %v3418, %v3437
        %v3444 = vadd.s32 %v3440, 1
        %v3445 = vsel %vm3443, %v3444, %v3440
        %v3446 = vadd.s32 %v3441, %v3445
        %v3447 = vadd.s32 %v3446, 536870912
        %v3448 = vshrl.u32 %v3447, 30
        %v3449 = vshll.u32 %v3448, 30
        %v3450 = vsub.s32 %v3446, %v3449
        %vm3451 = vcmp.lt.s32.totalorder %v3450, 0
        %v3452 = vsub.s32 0, %v3450
        %v3453 = vsel %vm3451, %v3452, %v3450
        %v3454 = vclz %v3453
        %v3455 = vsub.s32 %v3454, 2
        %vm3456 = vcmp.gt.s32.totalorder 0, %v3455
        %v3457 = vsel %vm3456, 0, %v3455
        %v3458 = vsub.s32 32, %v3457
        %v3459 = vshll.u32 %v3450, %v3457
        %v3460 = vshrl.u32 %v3442, %v3458
        %v3461 = vor.u32 %v3459, %v3460
        %v3462 = vsub.s32 4294967266, %v3457
        %v3463 = vadd.s32 %v3462, 127
        %v3464 = vshll.u32 %v3463, 23
        %v3465 = vor.u32 4788187, %v3464
        %v3466 = vand.u32 2147483647, %v3465
        %v3468 = vcvt.s32.f32 %v3461
        %v3469 = vmul.f32 %v3468, %v3466
        %v3470 = vxor.u32 %v3469, 2147483648
        %v3471 = vsel %vm3350, %v3470, %v3469
        %v3472 = vsub.s32 4, %v3448
        %v3473 = vsel %vm3350, %v3472, %v3448
        %v3474 = vsel %vm3349, %v224, %v3471
        %v3475 = vsel %vm3349, 0, %v3473
        %v3476 = vmul.f32 %v3474, %v3474
        %v3477 = vmul.f32 %v3476, -0.001358992
        %v3478 = vadd.f32 %v3477, 0.041655596
        %v3479 = vmul.f32 %v3476, %v3478
        %v3480 = vadd.f32 %v3479, -0.4999988
        %v3481 = vmul.f32 %v3476, %v3480
        %v3482 = vadd.f32 1.0, %v3481
        %v3483 = vmul.f32 %v3474, %v3474
        %v3484 = vmul.f32 %v3483, -0.00019511016
        %v3485 = vadd.f32 %v3484, 0.008332121
        %v3486 = vmul.f32 %v3483, %v3485
        %v3487 = vadd.f32 %v3486, -0.16666654
        %v3488 = vmul.f32 %v3483, %v3487
        %v3489 = vadd.f32 %v3488, 1.0
        %v3490 = vmul.f32 %v3489, %v3474
        %vm3491 = vweird.f32 %v224
        %v3492 = vand.u32 %v3475, 3
        %vm3493 = vcmp.lt.s32.totalorder %v3492, 2
        %vm3494 = vcmp.eq.s32.totalorder %v3492, 0
        %v3495 = vxor.u32 %v3490, 2147483648
        %v3496 = vsel %vm3494, %v3482, %v3495
        %vm3497 = vcmp.eq.s32.totalorder %v3492, 2
        %v3498 = vxor.u32 %v3482, 2147483648
        %v3499 = vsel %vm3497, %v3498, %v3490
        %v3500 = vsel %vm3493, %v3496, %v3499
        %v3501 = vsel %vm3491, nan, %v3500
        %v3502 = vand.u32 2147483647, %v225
        %vm3503 = vcmp.le.f32.partialorder %v3502, 0.7853982
        %vm3504 = vcmp.lt.s32.totalorder %v225, 0
        %v3505 = vand.u32 %v225, 2139095040
        %v3506 = vshrl.u32 %v3505, 23
        %v3507 = vsub.s32 %v3506, 127
        %v3508 = vand.u32 2147483647, %v225
        %v3509 = vand.u32 %v3508, 8388607
        %v3510 = vor.u32 %v3509, 8388608
        %v3511 = vsub.s32 0, %v3510
        %v3512 = vadd.s32 %v3507, 1
        %vm3513 = vcmp.gt.s32.totalorder %v3512, 0
        %v3514 = vsel %vm3513, %v3512, 0
        %v3515 = vshrl.u32 %v3514, 5
        %v3516 = vand.u32 %v3514, 31
        %v3517 = vsub.s32 32, %v3516
        %v3518 = vshrl.u32 683565275, %v3517
        %v3519 = vshll.u32 683565275, %v3516
        %v3520 = vshrl.u32 2475754826, %v3517
        %v3521 = vor.u32 %v3519, %v3520
        %v3522 = vshll.u32 2475754826, %v3516
        %v3523 = vshrl.u32 2131351028, %v3517
        %v3524 = vor.u32 %v3522, %v3523
        %v3525 = vshll.u32 2131351028, %v3516
        %v3526 = vshrl.u32 2102212464, %v3517
        %v3527 = vor.u32 %v3525, %v3526
        %v3528 = vshll.u32 2102212464, %v3516
        %v3529 = vshrl.u32 920167782, %v3517
        %v3530 = vor.u32 %v3528, %v3529
        %v3531 = vshll.u32 920167782, %v3516
        %v3532 = vshrl.u32 1326507024, %v3517
        %v3533 = vor.u32 %v3531, %v3532
        %vm3534 = vcmp.lt.s32.totalorder %v3515, 1
        %vm3535 = vcmp.lt.s32.totalorder %v3515, 2
        %vm3536 = vcmp.lt.s32.totalorder %v3515, 3
        %vm3537 = vcmp.lt.s32.totalorder %v3515, 4
        %v3538 = vsel %vm3534, %v3518, %v3521
        %v3539 = vsel %vm3537, %v3527, 2102212464
        %v3540 = vsel %vm3536, %v3524, %v3539
        %v3541 = vsel %vm3535, %v3538, %v3540
        %v3542 = vsel %vm3534, %v3521, %v3524
        %v3543 = vsel %vm3537, %v3530, 920167782
        %v3544 = vsel %vm3536, %v3527, %v3543
        %v3545 = vsel %vm3535, %v3542, %v3544
        %v3546 = vsel %vm3534, %v3524, %v3527
        %v3547 = vsel %vm3537, %v3533, 1326507024
        %v3548 = vsel %vm3536, %v3530, %v3547
        %v3549 = vsel %vm3535, %v3546, %v3548
        %v3550 = vshll.u32 %v3510, 8
        %v3551 = vand.u32 %v3550, 65535
        %v3552 = vshrl.u32 %v3550, 16
        %v3553 = vand.u32 %v3549, 65535
        %v3554 = vshrl.u32 %v3549, 16
        %v3555 = vmul.u32 %v3551, %v3553
        %v3556 = vmul.u32 %v3551, %v3554
        %v3557 = vmul.u32 %v3552, %v3553
        %v3558 = vmul.u32 %v3552, %v3554
        %v3559 = vshll.u32 %v3556, 16
        %v3560 = vshrl.u32 %v3556, 16
        %v3561 = vshll.u32 %v3557, 16
        %v3562 = vshrl.u32 %v3557, 16
        %vm3563 = vc.u32 %v3555, %v3559
        %v3564 = vsel %vm3563, 1, 0
        %v3565 = vadd.s32 %v3555, %v3559
        %v3566 = vadd.s32 %v3558, %v3564
        %vm3567 = vc.u32 %v3565, %v3561
        %v3568 = vsel %vm3567, 1, 0
        %v3569 = vadd.s32 %v3565, %v3561
        %v3570 = vadd.s32 %v3566, %v3568
        %v3571 = vadd.s32 %v3570, %v3560
        %v3572 = vadd.s32 %v3571, %v3562
        %v3573 = vand.u32 %v3550, 65535
        %v3574 = vshrl.u32 %v3550, 16
        %v3575 = vand.u32 %v3545, 65535
        %v3576 = vshrl.u32 %v3545, 16
        %v3577 = vmul.u32 %v3573, %v3575
        %v3578 = vmul.u32 %v3573, %v3576
        %v3579 = vmul.u32 %v3574, %v3575
        %v3580 = vmul.u32 %v3574, %v3576
        %v3581 = vshll.u32 %v3578, 16
        %v3582 = vshrl.u32 %v3578, 16
        %v3583 = vshll.u32 %v3579, 16
        %v3584 = vshrl.u32 %v3579, 16
        %vm3585 = vc.u32 %v3577, %v3581
        %v3586 = vsel %vm3585, 1, 0
        %v3587 = vadd.s32 %v3577, %v3581
        %v3588 = vadd.s32 %v3580, %v3586
        %vm3589 = vc.u32 %v3587, %v3583
        %v3590 = vsel %vm3589, 1, 0
        %v3591 = vadd.s32 %v3587, %v3583
        %v3592 = vadd.s32 %v3588, %v3590
        %v3593 = vadd.s32 %v3592, %v3582
        %v3594 = vadd.s32 %v3593, %v3584
        %v3595 = vmul.u32 %v3550, %v3541
        %v3596 = vadd.s32 %v3572, %v3591
        %vm3597 = vc.u32 %v3572, %v3591
        %v3598 = vadd.s32 %v3594, 1
        %v3599 = vsel %vm3597, %v3598, %v3594
        %v3600 = vadd.s32 %v3595, %v3599
        %v3601 = vadd.s32 %v3600, 536870912
        %v3602 = vshrl.u32 %v3601, 30
        %v3603 = vshll.u32 %v3602, 30
        %v3604 = vsub.s32 %v3600, %v3603
        %vm3605 = vcmp.lt.s32.totalorder %v3604, 0
        %v3606 = vsub.s32 0, %v3604
        %v3607 = vsel %vm3605, %v3606, %v3604
        %v3608 = vclz %v3607
        %v3609 = vsub.s32 %v3608, 2
        %vm3610 = vcmp.gt.s32.totalorder 0, %v3609
        %v3611 = vsel %vm3610, 0, %v3609
        %v3612 = vsub.s32 32, %v3611
        %v3613 = vshll.u32 %v3604, %v3611
        %v3614 = vshrl.u32 %v3596, %v3612
        %v3615 = vor.u32 %v3613, %v3614
        %v3616 = vsub.s32 4294967266, %v3611
        %v3617 = vadd.s32 %v3616, 127
        %v3618 = vshll.u32 %v3617, 23
        %v3619 = vor.u32 4788187, %v3618
        %v3620 = vand.u32 2147483647, %v3619
        %v3622 = vcvt.s32.f32 %v3615
        %v3623 = vmul.f32 %v3622, %v3620
        %v3624 = vxor.u32 %v3623, 2147483648
        %v3625 = vsel %vm3504, %v3624, %v3623
        %v3626 = vsub.s32 4, %v3602
        %v3627 = vsel %vm3504, %v3626, %v3602
        %v3628 = vsel %vm3503, %v225, %v3625
        %v3629 = vsel %vm3503, 0, %v3627
        %v3630 = vmul.f32 %v3628, %v3628
        %v3631 = vmul.f32 %v3630, -0.001358992
        %v3632 = vadd.f32 %v3631, 0.041655596
        %v3633 = vmul.f32 %v3630, %v3632
        %v3634 = vadd.f32 %v3633, -0.4999988
        %v3635 = vmul.f32 %v3630, %v3634
        %v3636 = vadd.f32 1.0, %v3635
        %v3637 = vmul.f32 %v3628, %v3628
        %v3638 = vmul.f32 %v3637, -0.00019511016
        %v3639 = vadd.f32 %v3638, 0.008332121
        %v3640 = vmul.f32 %v3637, %v3639
        %v3641 = vadd.f32 %v3640, -0.16666654
        %v3642 = vmul.f32 %v3637, %v3641
        %v3643 = vadd.f32 %v3642, 1.0
        %v3644 = vmul.f32 %v3643, %v3628
        %vm3645 = vweird.f32 %v225
        %v3646 = vand.u32 %v3629, 3
        %vm3647 = vcmp.lt.s32.totalorder %v3646, 2
        %vm3648 = vcmp.eq.s32.totalorder %v3646, 0
        %v3649 = vxor.u32 %v3644, 2147483648
        %v3650 = vsel %vm3648, %v3636, %v3649
        %vm3651 = vcmp.eq.s32.totalorder %v3646, 2
        %v3652 = vxor.u32 %v3636, 2147483648
        %v3653 = vsel %vm3651, %v3652, %v3644
        %v3654 = vsel %vm3647, %v3650, %v3653
        %v3655 = vsel %vm3645, nan, %v3654
        %v3656 = vand.u32 2147483647, %v226
        %vm3657 = vcmp.le.f32.partialorder %v3656, 0.7853982
        %vm3658 = vcmp.lt.s32.totalorder %v226, 0
        %v3659 = vand.u32 %v226, 2139095040
        %v3660 = vshrl.u32 %v3659, 23
        %v3661 = vsub.s32 %v3660, 127
        %v3662 = vand.u32 2147483647, %v226
        %v3663 = vand.u32 %v3662, 8388607
        %v3664 = vor.u32 %v3663, 8388608
        %v3665 = vsub.s32 0, %v3664
        %v3666 = vadd.s32 %v3661, 1
        %vm3667 = vcmp.gt.s32.totalorder %v3666, 0
        %v3668 = vsel %vm3667, %v3666, 0
        %v3669 = vshrl.u32 %v3668, 5
        %v3670 = vand.u32 %v3668, 31
        %v3671 = vsub.s32 32, %v3670
        %v3672 = vshrl.u32 683565275, %v3671
        %v3673 = vshll.u32 683565275, %v3670
        %v3674 = vshrl.u32 2475754826, %v3671
        %v3675 = vor.u32 %v3673, %v3674
        %v3676 = vshll.u32 2475754826, %v3670
        %v3677 = vshrl.u32 2131351028, %v3671
        %v3678 = vor.u32 %v3676, %v3677
        %v3679 = vshll.u32 2131351028, %v3670
        %v3680 = vshrl.u32 2102212464, %v3671
        %v3681 = vor.u32 %v3679, %v3680
        %v3682 = vshll.u32 2102212464, %v3670
        %v3683 = vshrl.u32 920167782, %v3671
        %v3684 = vor.u32 %v3682, %v3683
        %v3685 = vshll.u32 920167782, %v3670
        %v3686 = vshrl.u32 1326507024, %v3671
        %v3687 = vor.u32 %v3685, %v3686
        %vm3688 = vcmp.lt.s32.totalorder %v3669, 1
        %vm3689 = vcmp.lt.s32.totalorder %v3669, 2
        %vm3690 = vcmp.lt.s32.totalorder %v3669, 3
        %vm3691 = vcmp.lt.s32.totalorder %v3669, 4
        %v3692 = vsel %vm3688, %v3672, %v3675
        %v3693 = vsel %vm3691, %v3681, 2102212464
        %v3694 = vsel %vm3690, %v3678, %v3693
        %v3695 = vsel %vm3689, %v3692, %v3694
        %v3696 = vsel %vm3688, %v3675, %v3678
        %v3697 = vsel %vm3691, %v3684, 920167782
        %v3698 = vsel %vm3690, %v3681, %v3697
        %v3699 = vsel %vm3689, %v3696, %v3698
        %v3700 = vsel %vm3688, %v3678, %v3681
        %v3701 = vsel %vm3691, %v3687, 1326507024
        %v3702 = vsel %vm3690, %v3684, %v3701
        %v3703 = vsel %vm3689, %v3700, %v3702
        %v3704 = vshll.u32 %v3664, 8
        %v3705 = vand.u32 %v3704, 65535
        %v3706 = vshrl.u32 %v3704, 16
        %v3707 = vand.u32 %v3703, 65535
        %v3708 = vshrl.u32 %v3703, 16
        %v3709 = vmul.u32 %v3705, %v3707
        %v3710 = vmul.u32 %v3705, %v3708
        %v3711 = vmul.u32 %v3706, %v3707
        %v3712 = vmul.u32 %v3706, %v3708
        %v3713 = vshll.u32 %v3710, 16
        %v3714 = vshrl.u32 %v3710, 16
        %v3715 = vshll.u32 %v3711, 16
        %v3716 = vshrl.u32 %v3711, 16
        %vm3717 = vc.u32 %v3709, %v3713
        %v3718 = vsel %vm3717, 1, 0
        %v3719 = vadd.s32 %v3709, %v3713
        %v3720 = vadd.s32 %v3712, %v3718
        %vm3721 = vc.u32 %v3719, %v3715
        %v3722 = vsel %vm3721, 1, 0
        %v3723 = vadd.s32 %v3719, %v3715
        %v3724 = vadd.s32 %v3720, %v3722
        %v3725 = vadd.s32 %v3724, %v3714
        %v3726 = vadd.s32 %v3725, %v3716
        %v3727 = vand.u32 %v3704, 65535
        %v3728 = vshrl.u32 %v3704, 16
        %v3729 = vand.u32 %v3699, 65535
        %v3730 = vshrl.u32 %v3699, 16
        %v3731 = vmul.u32 %v3727, %v3729
        %v3732 = vmul.u32 %v3727, %v3730
        %v3733 = vmul.u32 %v3728, %v3729
        %v3734 = vmul.u32 %v3728, %v3730
        %v3735 = vshll.u32 %v3732, 16
        %v3736 = vshrl.u32 %v3732, 16
        %v3737 = vshll.u32 %v3733, 16
        %v3738 = vshrl.u32 %v3733, 16
        %vm3739 = vc.u32 %v3731, %v3735
        %v3740 = vsel %vm3739, 1, 0
        %v3741 = vadd.s32 %v3731, %v3735
        %v3742 = vadd.s32 %v3734, %v3740
        %vm3743 = vc.u32 %v3741, %v3737
        %v3744 = vsel %vm3743, 1, 0
        %v3745 = vadd.s32 %v3741, %v3737
        %v3746 = vadd.s32 %v3742, %v3744
        %v3747 = vadd.s32 %v3746, %v3736
        %v3748 = vadd.s32 %v3747, %v3738
        %v3749 = vmul.u32 %v3704, %v3695
        %v3750 = vadd.s32 %v3726, %v3745
        %vm3751 = vc.u32 %v3726, %v3745
        %v3752 = vadd.s32 %v3748, 1
        %v3753 = vsel %vm3751, %v3752, %v3748
        %v3754 = vadd.s32 %v3749, %v3753
        %v3755 = vadd.s32 %v3754, 536870912
        %v3756 = vshrl.u32 %v3755, 30
        %v3757 = vshll.u32 %v3756, 30
        %v3758 = vsub.s32 %v3754, %v3757
        %vm3759 = vcmp.lt.s32.totalorder %v3758, 0
        %v3760 = vsub.s32 0, %v3758
        %v3761 = vsel %vm3759, %v3760, %v3758
        %v3762 = vclz %v3761
        %v3763 = vsub.s32 %v3762, 2
        %vm3764 = vcmp.gt.s32.totalorder 0, %v3763
        %v3765 = vsel %vm3764, 0, %v3763
        %v3766 = vsub.s32 32, %v3765
        %v3767 = vshll.u32 %v3758, %v3765
        %v3768 = vshrl.u32 %v3750, %v3766
        %v3769 = vor.u32 %v3767, %v3768
        %v3770 = vsub.s32 4294967266, %v3765
        %v3771 = vadd.s32 %v3770, 127
        %v3772 = vshll.u32 %v3771, 23
        %v3773 = vor.u32 4788187, %v3772
        %v3774 = vand.u32 2147483647, %v3773
        %v3776 = vcvt.s32.f32 %v3769
        %v3777 = vmul.f32 %v3776, %v3774
        %v3778 = vxor.u32 %v3777, 2147483648
        %v3779 = vsel %vm3658, %v3778, %v3777
        %v3780 = vsub.s32 4, %v3756
        %v3781 = vsel %vm3658, %v3780, %v3756
        %v3782 = vsel %vm3657, %v226, %v3779
        %v3783 = vsel %vm3657, 0, %v3781
        %v3784 = vmul.f32 %v3782, %v3782
        %v3785 = vmul.f32 %v3784, -0.001358992
        %v3786 = vadd.f32 %v3785, 0.041655596
        %v3787 = vmul.f32 %v3784, %v3786
        %v3788 = vadd.f32 %v3787, -0.4999988
        %v3789 = vmul.f32 %v3784, %v3788
        %v3790 = vadd.f32 1.0, %v3789
        %v3791 = vmul.f32 %v3782, %v3782
        %v3792 = vmul.f32 %v3791, -0.00019511016
        %v3793 = vadd.f32 %v3792, 0.008332121
        %v3794 = vmul.f32 %v3791, %v3793
        %v3795 = vadd.f32 %v3794, -0.16666654
        %v3796 = vmul.f32 %v3791, %v3795
        %v3797 = vadd.f32 %v3796, 1.0
        %v3798 = vmul.f32 %v3797, %v3782
        %vm3799 = vweird.f32 %v226
        %v3800 = vand.u32 %v3783, 3
        %vm3801 = vcmp.lt.s32.totalorder %v3800, 2
        %vm3802 = vcmp.eq.s32.totalorder %v3800, 0
        %v3803 = vxor.u32 %v3798, 2147483648
        %v3804 = vsel %vm3802, %v3790, %v3803
        %vm3805 = vcmp.eq.s32.totalorder %v3800, 2
        %v3806 = vxor.u32 %v3790, 2147483648
        %v3807 = vsel %vm3805, %v3806, %v3798
        %v3808 = vsel %vm3801, %v3804, %v3807
        %v3809 = vsel %vm3799, nan, %v3808
        %v3810 = vand.u32 2147483647, %v227
        %vm3811 = vcmp.le.f32.partialorder %v3810, 0.7853982
        %vm3812 = vcmp.lt.s32.totalorder %v227, 0
        %v3813 = vand.u32 %v227, 2139095040
        %v3814 = vshrl.u32 %v3813, 23
        %v3815 = vsub.s32 %v3814, 127
        %v3816 = vand.u32 2147483647, %v227
        %v3817 = vand.u32 %v3816, 8388607
        %v3818 = vor.u32 %v3817, 8388608
        %v3819 = vsub.s32 0, %v3818
        %v3820 = vadd.s32 %v3815, 1
        %vm3821 = vcmp.gt.s32.totalorder %v3820, 0
        %v3822 = vsel %vm3821, %v3820, 0
        %v3823 = vshrl.u32 %v3822, 5
        %v3824 = vand.u32 %v3822, 31
        %v3825 = vsub.s32 32, %v3824
        %v3826 = vshrl.u32 683565275, %v3825
        %v3827 = vshll.u32 683565275, %v3824
        %v3828 = vshrl.u32 2475754826, %v3825
        %v3829 = vor.u32 %v3827, %v3828
        %v3830 = vshll.u32 2475754826, %v3824
        %v3831 = vshrl.u32 2131351028, %v3825
        %v3832 = vor.u32 %v3830, %v3831
        %v3833 = vshll.u32 2131351028, %v3824
        %v3834 = vshrl.u32 2102212464, %v3825
        %v3835 = vor.u32 %v3833, %v3834
        %v3836 = vshll.u32 2102212464, %v3824
        %v3837 = vshrl.u32 920167782, %v3825
        %v3838 = vor.u32 %v3836, %v3837
        %v3839 = vshll.u32 920167782, %v3824
        %v3840 = vshrl.u32 1326507024, %v3825
        %v3841 = vor.u32 %v3839, %v3840
        %vm3842 = vcmp.lt.s32.totalorder %v3823, 1
        %vm3843 = vcmp.lt.s32.totalorder %v3823, 2
        %vm3844 = vcmp.lt.s32.totalorder %v3823, 3
        %vm3845 = vcmp.lt.s32.totalorder %v3823, 4
        %v3846 = vsel %vm3842, %v3826, %v3829
        %v3847 = vsel %vm3845, %v3835, 2102212464
        %v3848 = vsel %vm3844, %v3832, %v3847
        %v3849 = vsel %vm3843, %v3846, %v3848
        %v3850 = vsel %vm3842, %v3829, %v3832
        %v3851 = vsel %vm3845, %v3838, 920167782
        %v3852 = vsel %vm3844, %v3835, %v3851
        %v3853 = vsel %vm3843, %v3850, %v3852
        %v3854 = vsel %vm3842, %v3832, %v3835
        %v3855 = vsel %vm3845, %v3841, 1326507024
        %v3856 = vsel %vm3844, %v3838, %v3855
        %v3857 = vsel %vm3843, %v3854, %v3856
        %v3858 = vshll.u32 %v3818, 8
        %v3859 = vand.u32 %v3858, 65535
        %v3860 = vshrl.u32 %v3858, 16
        %v3861 = vand.u32 %v3857, 65535
        %v3862 = vshrl.u32 %v3857, 16
        %v3863 = vmul.u32 %v3859, %v3861
        %v3864 = vmul.u32 %v3859, %v3862
        %v3865 = vmul.u32 %v3860, %v3861
        %v3866 = vmul.u32 %v3860, %v3862
        %v3867 = vshll.u32 %v3864, 16
        %v3868 = vshrl.u32 %v3864, 16
        %v3869 = vshll.u32 %v3865, 16
        %v3870 = vshrl.u32 %v3865, 16
        %vm3871 = vc.u32 %v3863, %v3867
        %v3872 = vsel %vm3871, 1, 0
        %v3873 = vadd.s32 %v3863, %v3867
        %v3874 = vadd.s32 %v3866, %v3872
        %vm3875 = vc.u32 %v3873, %v3869
        %v3876 = vsel %vm3875, 1, 0
        %v3877 = vadd.s32 %v3873, %v3869
        %v3878 = vadd.s32 %v3874, %v3876
        %v3879 = vadd.s32 %v3878, %v3868
        %v3880 = vadd.s32 %v3879, %v3870
        %v3881 = vand.u32 %v3858, 65535
        %v3882 = vshrl.u32 %v3858, 16
        %v3883 = vand.u32 %v3853, 65535
        %v3884 = vshrl.u32 %v3853, 16
        %v3885 = vmul.u32 %v3881, %v3883
        %v3886 = vmul.u32 %v3881, %v3884
        %v3887 = vmul.u32 %v3882, %v3883
        %v3888 = vmul.u32 %v3882, %v3884
        %v3889 = vshll.u32 %v3886, 16
        %v3890 = vshrl.u32 %v3886, 16
        %v3891 = vshll.u32 %v3887, 16
        %v3892 = vshrl.u32 %v3887, 16
        %vm3893 = vc.u32 %v3885, %v3889
        %v3894 = vsel %vm3893, 1, 0
        %v3895 = vadd.s32 %v3885, %v3889
        %v3896 = vadd.s32 %v3888, %v3894
        %vm3897 = vc.u32 %v3895, %v3891
        %v3898 = vsel %vm3897, 1, 0
        %v3899 = vadd.s32 %v3895, %v3891
        %v3900 = vadd.s32 %v3896, %v3898
        %v3901 = vadd.s32 %v3900, %v3890
        %v3902 = vadd.s32 %v3901, %v3892
        %v3903 = vmul.u32 %v3858, %v3849
        %v3904 = vadd.s32 %v3880, %v3899
        %vm3905 = vc.u32 %v3880, %v3899
        %v3906 = vadd.s32 %v3902, 1
        %v3907 = vsel %vm3905, %v3906, %v3902
        %v3908 = vadd.s32 %v3903, %v3907
        %v3909 = vadd.s32 %v3908, 536870912
        %v3910 = vshrl.u32 %v3909, 30
        %v3911 = vshll.u32 %v3910, 30
        %v3912 = vsub.s32 %v3908, %v3911
        %vm3913 = vcmp.lt.s32.totalorder %v3912, 0
        %v3914 = vsub.s32 0, %v3912
        %v3915 = vsel %vm3913, %v3914, %v3912
        %v3916 = vclz %v3915
        %v3917 = vsub.s32 %v3916, 2
        %vm3918 = vcmp.gt.s32.totalorder 0, %v3917
        %v3919 = vsel %vm3918, 0, %v3917
        %v3920 = vsub.s32 32, %v3919
        %v3921 = vshll.u32 %v3912, %v3919
        %v3922 = vshrl.u32 %v3904, %v3920
        %v3923 = vor.u32 %v3921, %v3922
        %v3924 = vsub.s32 4294967266, %v3919
        %v3925 = vadd.s32 %v3924, 127
        %v3926 = vshll.u32 %v3925, 23
        %v3927 = vor.u32 4788187, %v3926
        %v3928 = vand.u32 2147483647, %v3927
        %v3930 = vcvt.s32.f32 %v3923
        %v3931 = vmul.f32 %v3930, %v3928
        %v3932 = vxor.u32 %v3931, 2147483648
        %v3933 = vsel %vm3812, %v3932, %v3931
        %v3934 = vsub.s32 4, %v3910
        %v3935 = vsel %vm3812, %v3934, %v3910
        %v3936 = vsel %vm3811, %v227, %v3933
        %v3937 = vsel %vm3811, 0, %v3935
        %v3938 = vmul.f32 %v3936, %v3936
        %v3939 = vmul.f32 %v3938, -0.001358992
        %v3940 = vadd.f32 %v3939, 0.041655596
        %v3941 = vmul.f32 %v3938, %v3940
        %v3942 = vadd.f32 %v3941, -0.4999988
        %v3943 = vmul.f32 %v3938, %v3942
        %v3944 = vadd.f32 1.0, %v3943
        %v3945 = vmul.f32 %v3936, %v3936
        %v3946 = vmul.f32 %v3945, -0.00019511016
        %v3947 = vadd.f32 %v3946, 0.008332121
        %v3948 = vmul.f32 %v3945, %v3947
        %v3949 = vadd.f32 %v3948, -0.16666654
        %v3950 = vmul.f32 %v3945, %v3949
        %v3951 = vadd.f32 %v3950, 1.0
        %v3952 = vmul.f32 %v3951, %v3936
        %vm3953 = vweird.f32 %v227
        %v3954 = vand.u32 %v3937, 3
        %vm3955 = vcmp.lt.s32.totalorder %v3954, 2
        %vm3956 = vcmp.eq.s32.totalorder %v3954, 0
        %v3957 = vxor.u32 %v3952, 2147483648
        %v3958 = vsel %vm3956, %v3944, %v3957
        %vm3959 = vcmp.eq.s32.totalorder %v3954, 2
        %v3960 = vxor.u32 %v3944, 2147483648
        %v3961 = vsel %vm3959, %v3960, %v3952
        %v3962 = vsel %vm3955, %v3958, %v3961
        %v3963 = vsel %vm3953, nan, %v3962
        %v3964 = vand.u32 2147483647, %v228
        %vm3965 = vcmp.le.f32.partialorder %v3964, 0.7853982
        %vm3966 = vcmp.lt.s32.totalorder %v228, 0
        %v3967 = vand.u32 %v228, 2139095040
        %v3968 = vshrl.u32 %v3967, 23
        %v3969 = vsub.s32 %v3968, 127
        %v3970 = vand.u32 2147483647, %v228
        %v3971 = vand.u32 %v3970, 8388607
        %v3972 = vor.u32 %v3971, 8388608
        %v3973 = vsub.s32 0, %v3972
        %v3974 = vadd.s32 %v3969, 1
        %vm3975 = vcmp.gt.s32.totalorder %v3974, 0
        %v3976 = vsel %vm3975, %v3974, 0
        %v3977 = vshrl.u32 %v3976, 5
        %v3978 = vand.u32 %v3976, 31
        %v3979 = vsub.s32 32, %v3978
        %v3980 = vshrl.u32 683565275, %v3979
        %v3981 = vshll.u32 683565275, %v3978
        %v3982 = vshrl.u32 2475754826, %v3979
        %v3983 = vor.u32 %v3981, %v3982
        %v3984 = vshll.u32 2475754826, %v3978
        %v3985 = vshrl.u32 2131351028, %v3979
        %v3986 = vor.u32 %v3984, %v3985
        %v3987 = vshll.u32 2131351028, %v3978
        %v3988 = vshrl.u32 2102212464, %v3979
        %v3989 = vor.u32 %v3987, %v3988
        %v3990 = vshll.u32 2102212464, %v3978
        %v3991 = vshrl.u32 920167782, %v3979
        %v3992 = vor.u32 %v3990, %v3991
        %v3993 = vshll.u32 920167782, %v3978
        %v3994 = vshrl.u32 1326507024, %v3979
        %v3995 = vor.u32 %v3993, %v3994
        %vm3996 = vcmp.lt.s32.totalorder %v3977, 1
        %vm3997 = vcmp.lt.s32.totalorder %v3977, 2
        %vm3998 = vcmp.lt.s32.totalorder %v3977, 3
        %vm3999 = vcmp.lt.s32.totalorder %v3977, 4
        %v4000 = vsel %vm3996, %v3980, %v3983
        %v4001 = vsel %vm3999, %v3989, 2102212464
        %v4002 = vsel %vm3998, %v3986, %v4001
        %v4003 = vsel %vm3997, %v4000, %v4002
        %v4004 = vsel %vm3996, %v3983, %v3986
        %v4005 = vsel %vm3999, %v3992, 920167782
        %v4006 = vsel %vm3998, %v3989, %v4005
        %v4007 = vsel %vm3997, %v4004, %v4006
        %v4008 = vsel %vm3996, %v3986, %v3989
        %v4009 = vsel %vm3999, %v3995, 1326507024
        %v4010 = vsel %vm3998, %v3992, %v4009
        %v4011 = vsel %vm3997, %v4008, %v4010
        %v4012 = vshll.u32 %v3972, 8
        %v4013 = vand.u32 %v4012, 65535
        %v4014 = vshrl.u32 %v4012, 16
        %v4015 = vand.u32 %v4011, 65535
        %v4016 = vshrl.u32 %v4011, 16
        %v4017 = vmul.u32 %v4013, %v4015
        %v4018 = vmul.u32 %v4013, %v4016
        %v4019 = vmul.u32 %v4014, %v4015
        %v4020 = vmul.u32 %v4014, %v4016
        %v4021 = vshll.u32 %v4018, 16
        %v4022 = vshrl.u32 %v4018, 16
        %v4023 = vshll.u32 %v4019, 16
        %v4024 = vshrl.u32 %v4019, 16
        %vm4025 = vc.u32 %v4017, %v4021
        %v4026 = vsel %vm4025, 1, 0
        %v4027 = vadd.s32 %v4017, %v4021
        %v4028 = vadd.s32 %v4020, %v4026
        %vm4029 = vc.u32 %v4027, %v4023
        %v4030 = vsel %vm4029, 1, 0
        %v4031 = vadd.s32 %v4027, %v4023
        %v4032 = vadd.s32 %v4028, %v4030
        %v4033 = vadd.s32 %v4032, %v4022
        %v4034 = vadd.s32 %v4033, %v4024
        %v4035 = vand.u32 %v4012, 65535
        %v4036 = vshrl.u32 %v4012, 16
        %v4037 = vand.u32 %v4007, 65535
        %v4038 = vshrl.u32 %v4007, 16
        %v4039 = vmul.u32 %v4035, %v4037
        %v4040 = vmul.u32 %v4035, %v4038
        %v4041 = vmul.u32 %v4036, %v4037
        %v4042 = vmul.u32 %v4036, %v4038
        %v4043 = vshll.u32 %v4040, 16
        %v4044 = vshrl.u32 %v4040, 16
        %v4045 = vshll.u32 %v4041, 16
        %v4046 = vshrl.u32 %v4041, 16
        %vm4047 = vc.u32 %v4039, %v4043
        %v4048 = vsel %vm4047, 1, 0
        %v4049 = vadd.s32 %v4039, %v4043
        %v4050 = vadd.s32 %v4042, %v4048
        %vm4051 = vc.u32 %v4049, %v4045
        %v4052 = vsel %vm4051, 1, 0
        %v4053 = vadd.s32 %v4049, %v4045
        %v4054 = vadd.s32 %v4050, %v4052
        %v4055 = vadd.s32 %v4054, %v4044
        %v4056 = vadd.s32 %v4055, %v4046
        %v4057 = vmul.u32 %v4012, %v4003
        %v4058 = vadd.s32 %v4034, %v4053
        %vm4059 = vc.u32 %v4034, %v4053
        %v4060 = vadd.s32 %v4056, 1
        %v4061 = vsel %vm4059, %v4060, %v4056
        %v4062 = vadd.s32 %v4057, %v4061
        %v4063 = vadd.s32 %v4062, 536870912
        %v4064 = vshrl.u32 %v4063, 30
        %v4065 = vshll.u32 %v4064, 30
        %v4066 = vsub.s32 %v4062, %v4065
        %vm4067 = vcmp.lt.s32.totalorder %v4066, 0
        %v4068 = vsub.s32 0, %v4066
        %v4069 = vsel %vm4067, %v4068, %v4066
        %v4070 = vclz %v4069
        %v4071 = vsub.s32 %v4070, 2
        %vm4072 = vcmp.gt.s32.totalorder 0, %v4071
        %v4073 = vsel %vm4072, 0, %v4071
        %v4074 = vsub.s32 32, %v4073
        %v4075 = vshll.u32 %v4066, %v4073
        %v4076 = vshrl.u32 %v4058, %v4074
        %v4077 = vor.u32 %v4075, %v4076
        %v4078 = vsub.s32 4294967266, %v4073
        %v4079 = vadd.s32 %v4078, 127
        %v4080 = vshll.u32 %v4079, 23
        %v4081 = vor.u32 4788187, %v4080
        %v4082 = vand.u32 2147483647, %v4081
        %v4084 = vcvt.s32.f32 %v4077
        %v4085 = vmul.f32 %v4084, %v4082
        %v4086 = vxor.u32 %v4085, 2147483648
        %v4087 = vsel %vm3966, %v4086, %v4085
        %v4088 = vsub.s32 4, %v4064
        %v4089 = vsel %vm3966, %v4088, %v4064
        %v4090 = vsel %vm3965, %v228, %v4087
        %v4091 = vsel %vm3965, 0, %v4089
        %v4092 = vmul.f32 %v4090, %v4090
        %v4093 = vmul.f32 %v4092, -0.001358992
        %v4094 = vadd.f32 %v4093, 0.041655596
        %v4095 = vmul.f32 %v4092, %v4094
        %v4096 = vadd.f32 %v4095, -0.4999988
        %v4097 = vmul.f32 %v4092, %v4096
        %v4098 = vadd.f32 1.0, %v4097
        %v4099 = vmul.f32 %v4090, %v4090
        %v4100 = vmul.f32 %v4099, -0.00019511016
        %v4101 = vadd.f32 %v4100, 0.008332121
        %v4102 = vmul.f32 %v4099, %v4101
        %v4103 = vadd.f32 %v4102, -0.16666654
        %v4104 = vmul.f32 %v4099, %v4103
        %v4105 = vadd.f32 %v4104, 1.0
        %v4106 = vmul.f32 %v4105, %v4090
        %vm4107 = vweird.f32 %v228
        %v4108 = vand.u32 %v4091, 3
        %vm4109 = vcmp.lt.s32.totalorder %v4108, 2
        %vm4110 = vcmp.eq.s32.totalorder %v4108, 0
        %v4111 = vxor.u32 %v4106, 2147483648
        %v4112 = vsel %vm4110, %v4098, %v4111
        %vm4113 = vcmp.eq.s32.totalorder %v4108, 2
        %v4114 = vxor.u32 %v4098, 2147483648
        %v4115 = vsel %vm4113, %v4114, %v4106
        %v4116 = vsel %vm4109, %v4112, %v4115
        %v4117 = vsel %vm4107, nan, %v4116
        %v4118 = vand.u32 2147483647, %v229
        %vm4119 = vcmp.le.f32.partialorder %v4118, 0.7853982
        %vm4120 = vcmp.lt.s32.totalorder %v229, 0
        %v4121 = vand.u32 %v229, 2139095040
        %v4122 = vshrl.u32 %v4121, 23
        %v4123 = vsub.s32 %v4122, 127
        %v4124 = vand.u32 2147483647, %v229
        %v4125 = vand.u32 %v4124, 8388607
        %v4126 = vor.u32 %v4125, 8388608
        %v4127 = vsub.s32 0, %v4126
        %v4128 = vadd.s32 %v4123, 1
        %vm4129 = vcmp.gt.s32.totalorder %v4128, 0
        %v4130 = vsel %vm4129, %v4128, 0
        %v4131 = vshrl.u32 %v4130, 5
        %v4132 = vand.u32 %v4130, 31
        %v4133 = vsub.s32 32, %v4132
        %v4134 = vshrl.u32 683565275, %v4133
        %v4135 = vshll.u32 683565275, %v4132
        %v4136 = vshrl.u32 2475754826, %v4133
        %v4137 = vor.u32 %v4135, %v4136
        %v4138 = vshll.u32 2475754826, %v4132
        %v4139 = vshrl.u32 2131351028, %v4133
        %v4140 = vor.u32 %v4138, %v4139
        %v4141 = vshll.u32 2131351028, %v4132
        %v4142 = vshrl.u32 2102212464, %v4133
        %v4143 = vor.u32 %v4141, %v4142
        %v4144 = vshll.u32 2102212464, %v4132
        %v4145 = vshrl.u32 920167782, %v4133
        %v4146 = vor.u32 %v4144, %v4145
        %v4147 = vshll.u32 920167782, %v4132
        %v4148 = vshrl.u32 1326507024, %v4133
        %v4149 = vor.u32 %v4147, %v4148
        %vm4150 = vcmp.lt.s32.totalorder %v4131, 1
        %vm4151 = vcmp.lt.s32.totalorder %v4131, 2
        %vm4152 = vcmp.lt.s32.totalorder %v4131, 3
        %vm4153 = vcmp.lt.s32.totalorder %v4131, 4
        %v4154 = vsel %vm4150, %v4134, %v4137
        %v4155 = vsel %vm4153, %v4143, 2102212464
        %v4156 = vsel %vm4152, %v4140, %v4155
        %v4157 = vsel %vm4151, %v4154, %v4156
        %v4158 = vsel %vm4150, %v4137, %v4140
        %v4159 = vsel %vm4153, %v4146, 920167782
        %v4160 = vsel %vm4152, %v4143, %v4159
        %v4161 = vsel %vm4151, %v4158, %v4160
        %v4162 = vsel %vm4150, %v4140, %v4143
        %v4163 = vsel %vm4153, %v4149, 1326507024
        %v4164 = vsel %vm4152, %v4146, %v4163
        %v4165 = vsel %vm4151, %v4162, %v4164
        %v4166 = vshll.u32 %v4126, 8
        %v4167 = vand.u32 %v4166, 65535
        %v4168 = vshrl.u32 %v4166, 16
        %v4169 = vand.u32 %v4165, 65535
        %v4170 = vshrl.u32 %v4165, 16
        %v4171 = vmul.u32 %v4167, %v4169
        %v4172 = vmul.u32 %v4167, %v4170
        %v4173 = vmul.u32 %v4168, %v4169
        %v4174 = vmul.u32 %v4168, %v4170
        %v4175 = vshll.u32 %v4172, 16
        %v4176 = vshrl.u32 %v4172, 16
        %v4177 = vshll.u32 %v4173, 16
        %v4178 = vshrl.u32 %v4173, 16
        %vm4179 = vc.u32 %v4171, %v4175
        %v4180 = vsel %vm4179, 1, 0
        %v4181 = vadd.s32 %v4171, %v4175
        %v4182 = vadd.s32 %v4174, %v4180
        %vm4183 = vc.u32 %v4181, %v4177
        %v4184 = vsel %vm4183, 1, 0
        %v4185 = vadd.s32 %v4181, %v4177
        %v4186 = vadd.s32 %v4182, %v4184
        %v4187 = vadd.s32 %v4186, %v4176
        %v4188 = vadd.s32 %v4187, %v4178
        %v4189 = vand.u32 %v4166, 65535
        %v4190 = vshrl.u32 %v4166, 16
        %v4191 = vand.u32 %v4161, 65535
        %v4192 = vshrl.u32 %v4161, 16
        %v4193 = vmul.u32 %v4189, %v4191
        %v4194 = vmul.u32 %v4189, %v4192
        %v4195 = vmul.u32 %v4190, %v4191
        %v4196 = vmul.u32 %v4190, %v4192
        %v4197 = vshll.u32 %v4194, 16
        %v4198 = vshrl.u32 %v4194, 16
        %v4199 = vshll.u32 %v4195, 16
        %v4200 = vshrl.u32 %v4195, 16
        %vm4201 = vc.u32 %v4193, %v4197
        %v4202 = vsel %vm4201, 1, 0
        %v4203 = vadd.s32 %v4193, %v4197
        %v4204 = vadd.s32 %v4196, %v4202
        %vm4205 = vc.u32 %v4203, %v4199
        %v4206 = vsel %vm4205, 1, 0
        %v4207 = vadd.s32 %v4203, %v4199
        %v4208 = vadd.s32 %v4204, %v4206
        %v4209 = vadd.s32 %v4208, %v4198
        %v4210 = vadd.s32 %v4209, %v4200
        %v4211 = vmul.u32 %v4166, %v4157
        %v4212 = vadd.s32 %v4188, %v4207
        %vm4213 = vc.u32 %v4188, %v4207
        %v4214 = vadd.s32 %v4210, 1
        %v4215 = vsel %vm4213, %v4214, %v4210
        %v4216 = vadd.s32 %v4211, %v4215
        %v4217 = vadd.s32 %v4216, 536870912
        %v4218 = vshrl.u32 %v4217, 30
        %v4219 = vshll.u32 %v4218, 30
        %v4220 = vsub.s32 %v4216, %v4219
        %vm4221 = vcmp.lt.s32.totalorder %v4220, 0
        %v4222 = vsub.s32 0, %v4220
        %v4223 = vsel %vm4221, %v4222, %v4220
        %v4224 = vclz %v4223
        %v4225 = vsub.s32 %v4224, 2
        %vm4226 = vcmp.gt.s32.totalorder 0, %v4225
        %v4227 = vsel %vm4226, 0, %v4225
        %v4228 = vsub.s32 32, %v4227
        %v4229 = vshll.u32 %v4220, %v4227
        %v4230 = vshrl.u32 %v4212, %v4228
        %v4231 = vor.u32 %v4229, %v4230
        %v4232 = vsub.s32 4294967266, %v4227
        %v4233 = vadd.s32 %v4232, 127
        %v4234 = vshll.u32 %v4233, 23
        %v4235 = vor.u32 4788187, %v4234
        %v4236 = vand.u32 2147483647, %v4235
        %v4238 = vcvt.s32.f32 %v4231
        %v4239 = vmul.f32 %v4238, %v4236
        %v4240 = vxor.u32 %v4239, 2147483648
        %v4241 = vsel %vm4120, %v4240, %v4239
        %v4242 = vsub.s32 4, %v4218
        %v4243 = vsel %vm4120, %v4242, %v4218
        %v4244 = vsel %vm4119, %v229, %v4241
        %v4245 = vsel %vm4119, 0, %v4243
        %v4246 = vmul.f32 %v4244, %v4244
        %v4247 = vmul.f32 %v4246, -0.001358992
        %v4248 = vadd.f32 %v4247, 0.041655596
        %v4249 = vmul.f32 %v4246, %v4248
        %v4250 = vadd.f32 %v4249, -0.4999988
        %v4251 = vmul.f32 %v4246, %v4250
        %v4252 = vadd.f32 1.0, %v4251
        %v4253 = vmul.f32 %v4244, %v4244
        %v4254 = vmul.f32 %v4253, -0.00019511016
        %v4255 = vadd.f32 %v4254, 0.008332121
        %v4256 = vmul.f32 %v4253, %v4255
        %v4257 = vadd.f32 %v4256, -0.16666654
        %v4258 = vmul.f32 %v4253, %v4257
        %v4259 = vadd.f32 %v4258, 1.0
        %v4260 = vmul.f32 %v4259, %v4244
        %vm4261 = vweird.f32 %v229
        %v4262 = vand.u32 %v4245, 3
        %vm4263 = vcmp.lt.s32.totalorder %v4262, 2
        %vm4264 = vcmp.eq.s32.totalorder %v4262, 0
        %v4265 = vxor.u32 %v4260, 2147483648
        %v4266 = vsel %vm4264, %v4252, %v4265
        %vm4267 = vcmp.eq.s32.totalorder %v4262, 2
        %v4268 = vxor.u32 %v4252, 2147483648
        %v4269 = vsel %vm4267, %v4268, %v4260
        %v4270 = vsel %vm4263, %v4266, %v4269
        %v4271 = vsel %vm4261, nan, %v4270
        %v4272 = vand.u32 2147483647, %v230
        %vm4273 = vcmp.le.f32.partialorder %v4272, 0.7853982
        %vm4274 = vcmp.lt.s32.totalorder %v230, 0
        %v4275 = vand.u32 %v230, 2139095040
        %v4276 = vshrl.u32 %v4275, 23
        %v4277 = vsub.s32 %v4276, 127
        %v4278 = vand.u32 2147483647, %v230
        %v4279 = vand.u32 %v4278, 8388607
        %v4280 = vor.u32 %v4279, 8388608
        %v4281 = vsub.s32 0, %v4280
        %v4282 = vadd.s32 %v4277, 1
        %vm4283 = vcmp.gt.s32.totalorder %v4282, 0
        %v4284 = vsel %vm4283, %v4282, 0
        %v4285 = vshrl.u32 %v4284, 5
        %v4286 = vand.u32 %v4284, 31
        %v4287 = vsub.s32 32, %v4286
        %v4288 = vshrl.u32 683565275, %v4287
        %v4289 = vshll.u32 683565275, %v4286
        %v4290 = vshrl.u32 2475754826, %v4287
        %v4291 = vor.u32 %v4289, %v4290
        %v4292 = vshll.u32 2475754826, %v4286
        %v4293 = vshrl.u32 2131351028, %v4287
        %v4294 = vor.u32 %v4292, %v4293
        %v4295 = vshll.u32 2131351028, %v4286
        %v4296 = vshrl.u32 2102212464, %v4287
        %v4297 = vor.u32 %v4295, %v4296
        %v4298 = vshll.u32 2102212464, %v4286
        %v4299 = vshrl.u32 920167782, %v4287
        %v4300 = vor.u32 %v4298, %v4299
        %v4301 = vshll.u32 920167782, %v4286
        %v4302 = vshrl.u32 1326507024, %v4287
        %v4303 = vor.u32 %v4301, %v4302
        %vm4304 = vcmp.lt.s32.totalorder %v4285, 1
        %vm4305 = vcmp.lt.s32.totalorder %v4285, 2
        %vm4306 = vcmp.lt.s32.totalorder %v4285, 3
        %vm4307 = vcmp.lt.s32.totalorder %v4285, 4
        %v4308 = vsel %vm4304, %v4288, %v4291
        %v4309 = vsel %vm4307, %v4297, 2102212464
        %v4310 = vsel %vm4306, %v4294, %v4309
        %v4311 = vsel %vm4305, %v4308, %v4310
        %v4312 = vsel %vm4304, %v4291, %v4294
        %v4313 = vsel %vm4307, %v4300, 920167782
        %v4314 = vsel %vm4306, %v4297, %v4313
        %v4315 = vsel %vm4305, %v4312, %v4314
        %v4316 = vsel %vm4304, %v4294, %v4297
        %v4317 = vsel %vm4307, %v4303, 1326507024
        %v4318 = vsel %vm4306, %v4300, %v4317
        %v4319 = vsel %vm4305, %v4316, %v4318
        %v4320 = vshll.u32 %v4280, 8
        %v4321 = vand.u32 %v4320, 65535
        %v4322 = vshrl.u32 %v4320, 16
        %v4323 = vand.u32 %v4319, 65535
        %v4324 = vshrl.u32 %v4319, 16
        %v4325 = vmul.u32 %v4321, %v4323
        %v4326 = vmul.u32 %v4321, %v4324
        %v4327 = vmul.u32 %v4322, %v4323
        %v4328 = vmul.u32 %v4322, %v4324
        %v4329 = vshll.u32 %v4326, 16
        %v4330 = vshrl.u32 %v4326, 16
        %v4331 = vshll.u32 %v4327, 16
        %v4332 = vshrl.u32 %v4327, 16
        %vm4333 = vc.u32 %v4325, %v4329
        %v4334 = vsel %vm4333, 1, 0
        %v4335 = vadd.s32 %v4325, %v4329
        %v4336 = vadd.s32 %v4328, %v4334
        %vm4337 = vc.u32 %v4335, %v4331
        %v4338 = vsel %vm4337, 1, 0
        %v4339 = vadd.s32 %v4335, %v4331
        %v4340 = vadd.s32 %v4336, %v4338
        %v4341 = vadd.s32 %v4340, %v4330
        %v4342 = vadd.s32 %v4341, %v4332
        %v4343 = vand.u32 %v4320, 65535
        %v4344 = vshrl.u32 %v4320, 16
        %v4345 = vand.u32 %v4315, 65535
        %v4346 = vshrl.u32 %v4315, 16
        %v4347 = vmul.u32 %v4343, %v4345
        %v4348 = vmul.u32 %v4343, %v4346
        %v4349 = vmul.u32 %v4344, %v4345
        %v4350 = vmul.u32 %v4344, %v4346
        %v4351 = vshll.u32 %v4348, 16
        %v4352 = vshrl.u32 %v4348, 16
        %v4353 = vshll.u32 %v4349, 16
        %v4354 = vshrl.u32 %v4349, 16
        %vm4355 = vc.u32 %v4347, %v4351
        %v4356 = vsel %vm4355, 1, 0
        %v4357 = vadd.s32 %v4347, %v4351
        %v4358 = vadd.s32 %v4350, %v4356
        %vm4359 = vc.u32 %v4357, %v4353
        %v4360 = vsel %vm4359, 1, 0
        %v4361 = vadd.s32 %v4357, %v4353
        %v4362 = vadd.s32 %v4358, %v4360
        %v4363 = vadd.s32 %v4362, %v4352
        %v4364 = vadd.s32 %v4363, %v4354
        %v4365 = vmul.u32 %v4320, %v4311
        %v4366 = vadd.s32 %v4342, %v4361
        %vm4367 = vc.u32 %v4342, %v4361
        %v4368 = vadd.s32 %v4364, 1
        %v4369 = vsel %vm4367, %v4368, %v4364
        %v4370 = vadd.s32 %v4365, %v4369
        %v4371 = vadd.s32 %v4370, 536870912
        %v4372 = vshrl.u32 %v4371, 30
        %v4373 = vshll.u32 %v4372, 30
        %v4374 = vsub.s32 %v4370, %v4373
        %vm4375 = vcmp.lt.s32.totalorder %v4374, 0
        %v4376 = vsub.s32 0, %v4374
        %v4377 = vsel %vm4375, %v4376, %v4374
        %v4378 = vclz %v4377
        %v4379 = vsub.s32 %v4378, 2
        %vm4380 = vcmp.gt.s32.totalorder 0, %v4379
        %v4381 = vsel %vm4380, 0, %v4379
        %v4382 = vsub.s32 32, %v4381
        %v4383 = vshll.u32 %v4374, %v4381
        %v4384 = vshrl.u32 %v4366, %v4382
        %v4385 = vor.u32 %v4383, %v4384
        %v4386 = vsub.s32 4294967266, %v4381
        %v4387 = vadd.s32 %v4386, 127
        %v4388 = vshll.u32 %v4387, 23
        %v4389 = vor.u32 4788187, %v4388
        %v4390 = vand.u32 2147483647, %v4389
        %v4392 = vcvt.s32.f32 %v4385
        %v4393 = vmul.f32 %v4392, %v4390
        %v4394 = vxor.u32 %v4393, 2147483648
        %v4395 = vsel %vm4274, %v4394, %v4393
        %v4396 = vsub.s32 4, %v4372
        %v4397 = vsel %vm4274, %v4396, %v4372
        %v4398 = vsel %vm4273, %v230, %v4395
        %v4399 = vsel %vm4273, 0, %v4397
        %v4400 = vmul.f32 %v4398, %v4398
        %v4401 = vmul.f32 %v4400, -0.001358992
        %v4402 = vadd.f32 %v4401, 0.041655596
        %v4403 = vmul.f32 %v4400, %v4402
        %v4404 = vadd.f32 %v4403, -0.4999988
        %v4405 = vmul.f32 %v4400, %v4404
        %v4406 = vadd.f32 1.0, %v4405
        %v4407 = vmul.f32 %v4398, %v4398
        %v4408 = vmul.f32 %v4407, -0.00019511016
        %v4409 = vadd.f32 %v4408, 0.008332121
        %v4410 = vmul.f32 %v4407, %v4409
        %v4411 = vadd.f32 %v4410, -0.16666654
        %v4412 = vmul.f32 %v4407, %v4411
        %v4413 = vadd.f32 %v4412, 1.0
        %v4414 = vmul.f32 %v4413, %v4398
        %vm4415 = vweird.f32 %v230
        %v4416 = vand.u32 %v4399, 3
        %vm4417 = vcmp.lt.s32.totalorder %v4416, 2
        %vm4418 = vcmp.eq.s32.totalorder %v4416, 0
        %v4419 = vxor.u32 %v4414, 2147483648
        %v4420 = vsel %vm4418, %v4406, %v4419
        %vm4421 = vcmp.eq.s32.totalorder %v4416, 2
        %v4422 = vxor.u32 %v4406, 2147483648
        %v4423 = vsel %vm4421, %v4422, %v4414
        %v4424 = vsel %vm4417, %v4420, %v4423
        %v4425 = vsel %vm4415, nan, %v4424
        %v4426 = vand.u32 2147483647, %v231
        %vm4427 = vcmp.le.f32.partialorder %v4426, 0.7853982
        %vm4428 = vcmp.lt.s32.totalorder %v231, 0
        %v4429 = vand.u32 %v231, 2139095040
        %v4430 = vshrl.u32 %v4429, 23
        %v4431 = vsub.s32 %v4430, 127
        %v4432 = vand.u32 2147483647, %v231
        %v4433 = vand.u32 %v4432, 8388607
        %v4434 = vor.u32 %v4433, 8388608
        %v4435 = vsub.s32 0, %v4434
        %v4436 = vadd.s32 %v4431, 1
        %vm4437 = vcmp.gt.s32.totalorder %v4436, 0
        %v4438 = vsel %vm4437, %v4436, 0
        %v4439 = vshrl.u32 %v4438, 5
        %v4440 = vand.u32 %v4438, 31
        %v4441 = vsub.s32 32, %v4440
        %v4442 = vshrl.u32 683565275, %v4441
        %v4443 = vshll.u32 683565275, %v4440
        %v4444 = vshrl.u32 2475754826, %v4441
        %v4445 = vor.u32 %v4443, %v4444
        %v4446 = vshll.u32 2475754826, %v4440
        %v4447 = vshrl.u32 2131351028, %v4441
        %v4448 = vor.u32 %v4446, %v4447
        %v4449 = vshll.u32 2131351028, %v4440
        %v4450 = vshrl.u32 2102212464, %v4441
        %v4451 = vor.u32 %v4449, %v4450
        %v4452 = vshll.u32 2102212464, %v4440
        %v4453 = vshrl.u32 920167782, %v4441
        %v4454 = vor.u32 %v4452, %v4453
        %v4455 = vshll.u32 920167782, %v4440
        %v4456 = vshrl.u32 1326507024, %v4441
        %v4457 = vor.u32 %v4455, %v4456
        %vm4458 = vcmp.lt.s32.totalorder %v4439, 1
        %vm4459 = vcmp.lt.s32.totalorder %v4439, 2
        %vm4460 = vcmp.lt.s32.totalorder %v4439, 3
        %vm4461 = vcmp.lt.s32.totalorder %v4439, 4
        %v4462 = vsel %vm4458, %v4442, %v4445
        %v4463 = vsel %vm4461, %v4451, 2102212464
        %v4464 = vsel %vm4460, %v4448, %v4463
        %v4465 = vsel %vm4459, %v4462, %v4464
        %v4466 = vsel %vm4458, %v4445, %v4448
        %v4467 = vsel %vm4461, %v4454, 920167782
        %v4468 = vsel %vm4460, %v4451, %v4467
        %v4469 = vsel %vm4459, %v4466, %v4468
        %v4470 = vsel %vm4458, %v4448, %v4451
        %v4471 = vsel %vm4461, %v4457, 1326507024
        %v4472 = vsel %vm4460, %v4454, %v4471
        %v4473 = vsel %vm4459, %v4470, %v4472
        %v4474 = vshll.u32 %v4434, 8
        %v4475 = vand.u32 %v4474, 65535
        %v4476 = vshrl.u32 %v4474, 16
        %v4477 = vand.u32 %v4473, 65535
        %v4478 = vshrl.u32 %v4473, 16
        %v4479 = vmul.u32 %v4475, %v4477
        %v4480 = vmul.u32 %v4475, %v4478
        %v4481 = vmul.u32 %v4476, %v4477
        %v4482 = vmul.u32 %v4476, %v4478
        %v4483 = vshll.u32 %v4480, 16
        %v4484 = vshrl.u32 %v4480, 16
        %v4485 = vshll.u32 %v4481, 16
        %v4486 = vshrl.u32 %v4481, 16
        %vm4487 = vc.u32 %v4479, %v4483
        %v4488 = vsel %vm4487, 1, 0
        %v4489 = vadd.s32 %v4479, %v4483
        %v4490 = vadd.s32 %v4482, %v4488
        %vm4491 = vc.u32 %v4489, %v4485
        %v4492 = vsel %vm4491, 1, 0
        %v4493 = vadd.s32 %v4489, %v4485
        %v4494 = vadd.s32 %v4490, %v4492
        %v4495 = vadd.s32 %v4494, %v4484
        %v4496 = vadd.s32 %v4495, %v4486
        %v4497 = vand.u32 %v4474, 65535
        %v4498 = vshrl.u32 %v4474, 16
        %v4499 = vand.u32 %v4469, 65535
        %v4500 = vshrl.u32 %v4469, 16
        %v4501 = vmul.u32 %v4497, %v4499
        %v4502 = vmul.u32 %v4497, %v4500
        %v4503 = vmul.u32 %v4498, %v4499
        %v4504 = vmul.u32 %v4498, %v4500
        %v4505 = vshll.u32 %v4502, 16
        %v4506 = vshrl.u32 %v4502, 16
        %v4507 = vshll.u32 %v4503, 16
        %v4508 = vshrl.u32 %v4503, 16
        %vm4509 = vc.u32 %v4501, %v4505
        %v4510 = vsel %vm4509, 1, 0
        %v4511 = vadd.s32 %v4501, %v4505
        %v4512 = vadd.s32 %v4504, %v4510
        %vm4513 = vc.u32 %v4511, %v4507
        %v4514 = vsel %vm4513, 1, 0
        %v4515 = vadd.s32 %v4511, %v4507
        %v4516 = vadd.s32 %v4512, %v4514
        %v4517 = vadd.s32 %v4516, %v4506
        %v4518 = vadd.s32 %v4517, %v4508
        %v4519 = vmul.u32 %v4474, %v4465
        %v4520 = vadd.s32 %v4496, %v4515
        %vm4521 = vc.u32 %v4496, %v4515
        %v4522 = vadd.s32 %v4518, 1
        %v4523 = vsel %vm4521, %v4522, %v4518
        %v4524 = vadd.s32 %v4519, %v4523
        %v4525 = vadd.s32 %v4524, 536870912
        %v4526 = vshrl.u32 %v4525, 30
        %v4527 = vshll.u32 %v4526, 30
        %v4528 = vsub.s32 %v4524, %v4527
        %vm4529 = vcmp.lt.s32.totalorder %v4528, 0
        %v4530 = vsub.s32 0, %v4528
        %v4531 = vsel %vm4529, %v4530, %v4528
        %v4532 = vclz %v4531
        %v4533 = vsub.s32 %v4532, 2
        %vm4534 = vcmp.gt.s32.totalorder 0, %v4533
        %v4535 = vsel %vm4534, 0, %v4533
        %v4536 = vsub.s32 32, %v4535
        %v4537 = vshll.u32 %v4528, %v4535
        %v4538 = vshrl.u32 %v4520, %v4536
        %v4539 = vor.u32 %v4537, %v4538
        %v4540 = vsub.s32 4294967266, %v4535
        %v4541 = vadd.s32 %v4540, 127
        %v4542 = vshll.u32 %v4541, 23
        %v4543 = vor.u32 4788187, %v4542
        %v4544 = vand.u32 2147483647, %v4543
        %v4546 = vcvt.s32.f32 %v4539
        %v4547 = vmul.f32 %v4546, %v4544
        %v4548 = vxor.u32 %v4547, 2147483648
        %v4549 = vsel %vm4428, %v4548, %v4547
        %v4550 = vsub.s32 4, %v4526
        %v4551 = vsel %vm4428, %v4550, %v4526
        %v4552 = vsel %vm4427, %v231, %v4549
        %v4553 = vsel %vm4427, 0, %v4551
        %v4554 = vmul.f32 %v4552, %v4552
        %v4555 = vmul.f32 %v4554, -0.001358992
        %v4556 = vadd.f32 %v4555, 0.041655596
        %v4557 = vmul.f32 %v4554, %v4556
        %v4558 = vadd.f32 %v4557, -0.4999988
        %v4559 = vmul.f32 %v4554, %v4558
        %v4560 = vadd.f32 1.0, %v4559
        %v4561 = vmul.f32 %v4552, %v4552
        %v4562 = vmul.f32 %v4561, -0.00019511016
        %v4563 = vadd.f32 %v4562, 0.008332121
        %v4564 = vmul.f32 %v4561, %v4563
        %v4565 = vadd.f32 %v4564, -0.16666654
        %v4566 = vmul.f32 %v4561, %v4565
        %v4567 = vadd.f32 %v4566, 1.0
        %v4568 = vmul.f32 %v4567, %v4552
        %vm4569 = vweird.f32 %v231
        %v4570 = vand.u32 %v4553, 3
        %vm4571 = vcmp.lt.s32.totalorder %v4570, 2
        %vm4572 = vcmp.eq.s32.totalorder %v4570, 0
        %v4573 = vxor.u32 %v4568, 2147483648
        %v4574 = vsel %vm4572, %v4560, %v4573
        %vm4575 = vcmp.eq.s32.totalorder %v4570, 2
        %v4576 = vxor.u32 %v4560, 2147483648
        %v4577 = vsel %vm4575, %v4576, %v4568
        %v4578 = vsel %vm4571, %v4574, %v4577
        %v4579 = vsel %vm4569, nan, %v4578
        %v4580 = vand.u32 2147483647, %v232
        %vm4581 = vcmp.le.f32.partialorder %v4580, 0.7853982
        %vm4582 = vcmp.lt.s32.totalorder %v232, 0
        %v4583 = vand.u32 %v232, 2139095040
        %v4584 = vshrl.u32 %v4583, 23
        %v4585 = vsub.s32 %v4584, 127
        %v4586 = vand.u32 2147483647, %v232
        %v4587 = vand.u32 %v4586, 8388607
        %v4588 = vor.u32 %v4587, 8388608
        %v4589 = vsub.s32 0, %v4588
        %v4590 = vadd.s32 %v4585, 1
        %vm4591 = vcmp.gt.s32.totalorder %v4590, 0
        %v4592 = vsel %vm4591, %v4590, 0
        %v4593 = vshrl.u32 %v4592, 5
        %v4594 = vand.u32 %v4592, 31
        %v4595 = vsub.s32 32, %v4594
        %v4596 = vshrl.u32 683565275, %v4595
        %v4597 = vshll.u32 683565275, %v4594
        %v4598 = vshrl.u32 2475754826, %v4595
        %v4599 = vor.u32 %v4597, %v4598
        %v4600 = vshll.u32 2475754826, %v4594
        %v4601 = vshrl.u32 2131351028, %v4595
        %v4602 = vor.u32 %v4600, %v4601
        %v4603 = vshll.u32 2131351028, %v4594
        %v4604 = vshrl.u32 2102212464, %v4595
        %v4605 = vor.u32 %v4603, %v4604
        %v4606 = vshll.u32 2102212464, %v4594
        %v4607 = vshrl.u32 920167782, %v4595
        %v4608 = vor.u32 %v4606, %v4607
        %v4609 = vshll.u32 920167782, %v4594
        %v4610 = vshrl.u32 1326507024, %v4595
        %v4611 = vor.u32 %v4609, %v4610
        %vm4612 = vcmp.lt.s32.totalorder %v4593, 1
        %vm4613 = vcmp.lt.s32.totalorder %v4593, 2
        %vm4614 = vcmp.lt.s32.totalorder %v4593, 3
        %vm4615 = vcmp.lt.s32.totalorder %v4593, 4
        %v4616 = vsel %vm4612, %v4596, %v4599
        %v4617 = vsel %vm4615, %v4605, 2102212464
        %v4618 = vsel %vm4614, %v4602, %v4617
        %v4619 = vsel %vm4613, %v4616, %v4618
        %v4620 = vsel %vm4612, %v4599, %v4602
        %v4621 = vsel %vm4615, %v4608, 920167782
        %v4622 = vsel %vm4614, %v4605, %v4621
        %v4623 = vsel %vm4613, %v4620, %v4622
        %v4624 = vsel %vm4612, %v4602, %v4605
        %v4625 = vsel %vm4615, %v4611, 1326507024
        %v4626 = vsel %vm4614, %v4608, %v4625
        %v4627 = vsel %vm4613, %v4624, %v4626
        %v4628 = vshll.u32 %v4588, 8
        %v4629 = vand.u32 %v4628, 65535
        %v4630 = vshrl.u32 %v4628, 16
        %v4631 = vand.u32 %v4627, 65535
        %v4632 = vshrl.u32 %v4627, 16
        %v4633 = vmul.u32 %v4629, %v4631
        %v4634 = vmul.u32 %v4629, %v4632
        %v4635 = vmul.u32 %v4630, %v4631
        %v4636 = vmul.u32 %v4630, %v4632
        %v4637 = vshll.u32 %v4634, 16
        %v4638 = vshrl.u32 %v4634, 16
        %v4639 = vshll.u32 %v4635, 16
        %v4640 = vshrl.u32 %v4635, 16
        %vm4641 = vc.u32 %v4633, %v4637
        %v4642 = vsel %vm4641, 1, 0
        %v4643 = vadd.s32 %v4633, %v4637
        %v4644 = vadd.s32 %v4636, %v4642
        %vm4645 = vc.u32 %v4643, %v4639
        %v4646 = vsel %vm4645, 1, 0
        %v4647 = vadd.s32 %v4643, %v4639
        %v4648 = vadd.s32 %v4644, %v4646
        %v4649 = vadd.s32 %v4648, %v4638
        %v4650 = vadd.s32 %v4649, %v4640
        %v4651 = vand.u32 %v4628, 65535
        %v4652 = vshrl.u32 %v4628, 16
        %v4653 = vand.u32 %v4623, 65535
        %v4654 = vshrl.u32 %v4623, 16
        %v4655 = vmul.u32 %v4651, %v4653
        %v4656 = vmul.u32 %v4651, %v4654
        %v4657 = vmul.u32 %v4652, %v4653
        %v4658 = vmul.u32 %v4652, %v4654
        %v4659 = vshll.u32 %v4656, 16
        %v4660 = vshrl.u32 %v4656, 16
        %v4661 = vshll.u32 %v4657, 16
        %v4662 = vshrl.u32 %v4657, 16
        %vm4663 = vc.u32 %v4655, %v4659
        %v4664 = vsel %vm4663, 1, 0
        %v4665 = vadd.s32 %v4655, %v4659
        %v4666 = vadd.s32 %v4658, %v4664
        %vm4667 = vc.u32 %v4665, %v4661
        %v4668 = vsel %vm4667, 1, 0
        %v4669 = vadd.s32 %v4665, %v4661
        %v4670 = vadd.s32 %v4666, %v4668
        %v4671 = vadd.s32 %v4670, %v4660
        %v4672 = vadd.s32 %v4671, %v4662
        %v4673 = vmul.u32 %v4628, %v4619
        %v4674 = vadd.s32 %v4650, %v4669
        %vm4675 = vc.u32 %v4650, %v4669
        %v4676 = vadd.s32 %v4672, 1
        %v4677 = vsel %vm4675, %v4676, %v4672
        %v4678 = vadd.s32 %v4673, %v4677
        %v4679 = vadd.s32 %v4678, 536870912
        %v4680 = vshrl.u32 %v4679, 30
        %v4681 = vshll.u32 %v4680, 30
        %v4682 = vsub.s32 %v4678, %v4681
        %vm4683 = vcmp.lt.s32.totalorder %v4682, 0
        %v4684 = vsub.s32 0, %v4682
        %v4685 = vsel %vm4683, %v4684, %v4682
        %v4686 = vclz %v4685
        %v4687 = vsub.s32 %v4686, 2
        %vm4688 = vcmp.gt.s32.totalorder 0, %v4687
        %v4689 = vsel %vm4688, 0, %v4687
        %v4690 = vsub.s32 32, %v4689
        %v4691 = vshll.u32 %v4682, %v4689
        %v4692 = vshrl.u32 %v4674, %v4690
        %v4693 = vor.u32 %v4691, %v4692
        %v4694 = vsub.s32 4294967266, %v4689
        %v4695 = vadd.s32 %v4694, 127
        %v4696 = vshll.u32 %v4695, 23
        %v4697 = vor.u32 4788187, %v4696
        %v4698 = vand.u32 2147483647, %v4697
        %v4700 = vcvt.s32.f32 %v4693
        %v4701 = vmul.f32 %v4700, %v4698
        %v4702 = vxor.u32 %v4701, 2147483648
        %v4703 = vsel %vm4582, %v4702, %v4701
        %v4704 = vsub.s32 4, %v4680
        %v4705 = vsel %vm4582, %v4704, %v4680
        %v4706 = vsel %vm4581, %v232, %v4703
        %v4707 = vsel %vm4581, 0, %v4705
        %v4708 = vmul.f32 %v4706, %v4706
        %v4709 = vmul.f32 %v4708, -0.001358992
        %v4710 = vadd.f32 %v4709, 0.041655596
        %v4711 = vmul.f32 %v4708, %v4710
        %v4712 = vadd.f32 %v4711, -0.4999988
        %v4713 = vmul.f32 %v4708, %v4712
        %v4714 = vadd.f32 1.0, %v4713
        %v4715 = vmul.f32 %v4706, %v4706
        %v4716 = vmul.f32 %v4715, -0.00019511016
        %v4717 = vadd.f32 %v4716, 0.008332121
        %v4718 = vmul.f32 %v4715, %v4717
        %v4719 = vadd.f32 %v4718, -0.16666654
        %v4720 = vmul.f32 %v4715, %v4719
        %v4721 = vadd.f32 %v4720, 1.0
        %v4722 = vmul.f32 %v4721, %v4706
        %vm4723 = vweird.f32 %v232
        %v4724 = vand.u32 %v4707, 3
        %vm4725 = vcmp.lt.s32.totalorder %v4724, 2
        %vm4726 = vcmp.eq.s32.totalorder %v4724, 0
        %v4727 = vxor.u32 %v4722, 2147483648
        %v4728 = vsel %vm4726, %v4714, %v4727
        %vm4729 = vcmp.eq.s32.totalorder %v4724, 2
        %v4730 = vxor.u32 %v4714, 2147483648
        %v4731 = vsel %vm4729, %v4730, %v4722
        %v4732 = vsel %vm4725, %v4728, %v4731
        %v4733 = vsel %vm4723, nan, %v4732
        %v4734 = vand.u32 2147483647, %v233
        %vm4735 = vcmp.le.f32.partialorder %v4734, 0.7853982
        %vm4736 = vcmp.lt.s32.totalorder %v233, 0
        %v4737 = vand.u32 %v233, 2139095040
        %v4738 = vshrl.u32 %v4737, 23
        %v4739 = vsub.s32 %v4738, 127
        %v4740 = vand.u32 2147483647, %v233
        %v4741 = vand.u32 %v4740, 8388607
        %v4742 = vor.u32 %v4741, 8388608
        %v4743 = vsub.s32 0, %v4742
        %v4744 = vadd.s32 %v4739, 1
        %vm4745 = vcmp.gt.s32.totalorder %v4744, 0
        %v4746 = vsel %vm4745, %v4744, 0
        %v4747 = vshrl.u32 %v4746, 5
        %v4748 = vand.u32 %v4746, 31
        %v4749 = vsub.s32 32, %v4748
        %v4750 = vshrl.u32 683565275, %v4749
        %v4751 = vshll.u32 683565275, %v4748
        %v4752 = vshrl.u32 2475754826, %v4749
        %v4753 = vor.u32 %v4751, %v4752
        %v4754 = vshll.u32 2475754826, %v4748
        %v4755 = vshrl.u32 2131351028, %v4749
        %v4756 = vor.u32 %v4754, %v4755
        %v4757 = vshll.u32 2131351028, %v4748
        %v4758 = vshrl.u32 2102212464, %v4749
        %v4759 = vor.u32 %v4757, %v4758
        %v4760 = vshll.u32 2102212464, %v4748
        %v4761 = vshrl.u32 920167782, %v4749
        %v4762 = vor.u32 %v4760, %v4761
        %v4763 = vshll.u32 920167782, %v4748
        %v4764 = vshrl.u32 1326507024, %v4749
        %v4765 = vor.u32 %v4763, %v4764
        %vm4766 = vcmp.lt.s32.totalorder %v4747, 1
        %vm4767 = vcmp.lt.s32.totalorder %v4747, 2
        %vm4768 = vcmp.lt.s32.totalorder %v4747, 3
        %vm4769 = vcmp.lt.s32.totalorder %v4747, 4
        %v4770 = vsel %vm4766, %v4750, %v4753
        %v4771 = vsel %vm4769, %v4759, 2102212464
        %v4772 = vsel %vm4768, %v4756, %v4771
        %v4773 = vsel %vm4767, %v4770, %v4772
        %v4774 = vsel %vm4766, %v4753, %v4756
        %v4775 = vsel %vm4769, %v4762, 920167782
        %v4776 = vsel %vm4768, %v4759, %v4775
        %v4777 = vsel %vm4767, %v4774, %v4776
        %v4778 = vsel %vm4766, %v4756, %v4759
        %v4779 = vsel %vm4769, %v4765, 1326507024
        %v4780 = vsel %vm4768, %v4762, %v4779
        %v4781 = vsel %vm4767, %v4778, %v4780
        %v4782 = vshll.u32 %v4742, 8
        %v4783 = vand.u32 %v4782, 65535
        %v4784 = vshrl.u32 %v4782, 16
        %v4785 = vand.u32 %v4781, 65535
        %v4786 = vshrl.u32 %v4781, 16
        %v4787 = vmul.u32 %v4783, %v4785
        %v4788 = vmul.u32 %v4783, %v4786
        %v4789 = vmul.u32 %v4784, %v4785
        %v4790 = vmul.u32 %v4784, %v4786
        %v4791 = vshll.u32 %v4788, 16
        %v4792 = vshrl.u32 %v4788, 16
        %v4793 = vshll.u32 %v4789, 16
        %v4794 = vshrl.u32 %v4789, 16
        %vm4795 = vc.u32 %v4787, %v4791
        %v4796 = vsel %vm4795, 1, 0
        %v4797 = vadd.s32 %v4787, %v4791
        %v4798 = vadd.s32 %v4790, %v4796
        %vm4799 = vc.u32 %v4797, %v4793
        %v4800 = vsel %vm4799, 1, 0
        %v4801 = vadd.s32 %v4797, %v4793
        %v4802 = vadd.s32 %v4798, %v4800
        %v4803 = vadd.s32 %v4802, %v4792
        %v4804 = vadd.s32 %v4803, %v4794
        %v4805 = vand.u32 %v4782, 65535
        %v4806 = vshrl.u32 %v4782, 16
        %v4807 = vand.u32 %v4777, 65535
        %v4808 = vshrl.u32 %v4777, 16
        %v4809 = vmul.u32 %v4805, %v4807
        %v4810 = vmul.u32 %v4805, %v4808
        %v4811 = vmul.u32 %v4806, %v4807
        %v4812 = vmul.u32 %v4806, %v4808
        %v4813 = vshll.u32 %v4810, 16
        %v4814 = vshrl.u32 %v4810, 16
        %v4815 = vshll.u32 %v4811, 16
        %v4816 = vshrl.u32 %v4811, 16
        %vm4817 = vc.u32 %v4809, %v4813
        %v4818 = vsel %vm4817, 1, 0
        %v4819 = vadd.s32 %v4809, %v4813
        %v4820 = vadd.s32 %v4812, %v4818
        %vm4821 = vc.u32 %v4819, %v4815
        %v4822 = vsel %vm4821, 1, 0
        %v4823 = vadd.s32 %v4819, %v4815
        %v4824 = vadd.s32 %v4820, %v4822
        %v4825 = vadd.s32 %v4824, %v4814
        %v4826 = vadd.s32 %v4825, %v4816
        %v4827 = vmul.u32 %v4782, %v4773
        %v4828 = vadd.s32 %v4804, %v4823
        %vm4829 = vc.u32 %v4804, %v4823
        %v4830 = vadd.s32 %v4826, 1
        %v4831 = vsel %vm4829, %v4830, %v4826
        %v4832 = vadd.s32 %v4827, %v4831
        %v4833 = vadd.s32 %v4832, 536870912
        %v4834 = vshrl.u32 %v4833, 30
        %v4835 = vshll.u32 %v4834, 30
        %v4836 = vsub.s32 %v4832, %v4835
        %vm4837 = vcmp.lt.s32.totalorder %v4836, 0
        %v4838 = vsub.s32 0, %v4836
        %v4839 = vsel %vm4837, %v4838, %v4836
        %v4840 = vclz %v4839
        %v4841 = vsub.s32 %v4840, 2
        %vm4842 = vcmp.gt.s32.totalorder 0, %v4841
        %v4843 = vsel %vm4842, 0, %v4841
        %v4844 = vsub.s32 32, %v4843
        %v4845 = vshll.u32 %v4836, %v4843
        %v4846 = vshrl.u32 %v4828, %v4844
        %v4847 = vor.u32 %v4845, %v4846
        %v4848 = vsub.s32 4294967266, %v4843
        %v4849 = vadd.s32 %v4848, 127
        %v4850 = vshll.u32 %v4849, 23
        %v4851 = vor.u32 4788187, %v4850
        %v4852 = vand.u32 2147483647, %v4851
        %v4854 = vcvt.s32.f32 %v4847
        %v4855 = vmul.f32 %v4854, %v4852
        %v4856 = vxor.u32 %v4855, 2147483648
        %v4857 = vsel %vm4736, %v4856, %v4855
        %v4858 = vsub.s32 4, %v4834
        %v4859 = vsel %vm4736, %v4858, %v4834
        %v4860 = vsel %vm4735, %v233, %v4857
        %v4861 = vsel %vm4735, 0, %v4859
        %v4862 = vmul.f32 %v4860, %v4860
        %v4863 = vmul.f32 %v4862, -0.001358992
        %v4864 = vadd.f32 %v4863, 0.041655596
        %v4865 = vmul.f32 %v4862, %v4864
        %v4866 = vadd.f32 %v4865, -0.4999988
        %v4867 = vmul.f32 %v4862, %v4866
        %v4868 = vadd.f32 1.0, %v4867
        %v4869 = vmul.f32 %v4860, %v4860
        %v4870 = vmul.f32 %v4869, -0.00019511016
        %v4871 = vadd.f32 %v4870, 0.008332121
        %v4872 = vmul.f32 %v4869, %v4871
        %v4873 = vadd.f32 %v4872, -0.16666654
        %v4874 = vmul.f32 %v4869, %v4873
        %v4875 = vadd.f32 %v4874, 1.0
        %v4876 = vmul.f32 %v4875, %v4860
        %vm4877 = vweird.f32 %v233
        %v4878 = vand.u32 %v4861, 3
        %vm4879 = vcmp.lt.s32.totalorder %v4878, 2
        %vm4880 = vcmp.eq.s32.totalorder %v4878, 0
        %v4881 = vxor.u32 %v4876, 2147483648
        %v4882 = vsel %vm4880, %v4868, %v4881
        %vm4883 = vcmp.eq.s32.totalorder %v4878, 2
        %v4884 = vxor.u32 %v4868, 2147483648
        %v4885 = vsel %vm4883, %v4884, %v4876
        %v4886 = vsel %vm4879, %v4882, %v4885
        %v4887 = vsel %vm4877, nan, %v4886
        %v4888 = vand.u32 2147483647, %v234
        %vm4889 = vcmp.le.f32.partialorder %v4888, 0.7853982
        %vm4890 = vcmp.lt.s32.totalorder %v234, 0
        %v4891 = vand.u32 %v234, 2139095040
        %v4892 = vshrl.u32 %v4891, 23
        %v4893 = vsub.s32 %v4892, 127
        %v4894 = vand.u32 2147483647, %v234
        %v4895 = vand.u32 %v4894, 8388607
        %v4896 = vor.u32 %v4895, 8388608
        %v4897 = vsub.s32 0, %v4896
        %v4898 = vadd.s32 %v4893, 1
        %vm4899 = vcmp.gt.s32.totalorder %v4898, 0
        %v4900 = vsel %vm4899, %v4898, 0
        %v4901 = vshrl.u32 %v4900, 5
        %v4902 = vand.u32 %v4900, 31
        %v4903 = vsub.s32 32, %v4902
        %v4904 = vshrl.u32 683565275, %v4903
        %v4905 = vshll.u32 683565275, %v4902
        %v4906 = vshrl.u32 2475754826, %v4903
        %v4907 = vor.u32 %v4905, %v4906
        %v4908 = vshll.u32 2475754826, %v4902
        %v4909 = vshrl.u32 2131351028, %v4903
        %v4910 = vor.u32 %v4908, %v4909
        %v4911 = vshll.u32 2131351028, %v4902
        %v4912 = vshrl.u32 2102212464, %v4903
        %v4913 = vor.u32 %v4911, %v4912
        %v4914 = vshll.u32 2102212464, %v4902
        %v4915 = vshrl.u32 920167782, %v4903
        %v4916 = vor.u32 %v4914, %v4915
        %v4917 = vshll.u32 920167782, %v4902
        %v4918 = vshrl.u32 1326507024, %v4903
        %v4919 = vor.u32 %v4917, %v4918
        %vm4920 = vcmp.lt.s32.totalorder %v4901, 1
        %vm4921 = vcmp.lt.s32.totalorder %v4901, 2
        %vm4922 = vcmp.lt.s32.totalorder %v4901, 3
        %vm4923 = vcmp.lt.s32.totalorder %v4901, 4
        %v4924 = vsel %vm4920, %v4904, %v4907
        %v4925 = vsel %vm4923, %v4913, 2102212464
        %v4926 = vsel %vm4922, %v4910, %v4925
        %v4927 = vsel %vm4921, %v4924, %v4926
        %v4928 = vsel %vm4920, %v4907, %v4910
        %v4929 = vsel %vm4923, %v4916, 920167782
        %v4930 = vsel %vm4922, %v4913, %v4929
        %v4931 = vsel %vm4921, %v4928, %v4930
        %v4932 = vsel %vm4920, %v4910, %v4913
        %v4933 = vsel %vm4923, %v4919, 1326507024
        %v4934 = vsel %vm4922, %v4916, %v4933
        %v4935 = vsel %vm4921, %v4932, %v4934
        %v4936 = vshll.u32 %v4896, 8
        %v4937 = vand.u32 %v4936, 65535
        %v4938 = vshrl.u32 %v4936, 16
        %v4939 = vand.u32 %v4935, 65535
        %v4940 = vshrl.u32 %v4935, 16
        %v4941 = vmul.u32 %v4937, %v4939
        %v4942 = vmul.u32 %v4937, %v4940
        %v4943 = vmul.u32 %v4938, %v4939
        %v4944 = vmul.u32 %v4938, %v4940
        %v4945 = vshll.u32 %v4942, 16
        %v4946 = vshrl.u32 %v4942, 16
        %v4947 = vshll.u32 %v4943, 16
        %v4948 = vshrl.u32 %v4943, 16
        %vm4949 = vc.u32 %v4941, %v4945
        %v4950 = vsel %vm4949, 1, 0
        %v4951 = vadd.s32 %v4941, %v4945
        %v4952 = vadd.s32 %v4944, %v4950
        %vm4953 = vc.u32 %v4951, %v4947
        %v4954 = vsel %vm4953, 1, 0
        %v4955 = vadd.s32 %v4951, %v4947
        %v4956 = vadd.s32 %v4952, %v4954
        %v4957 = vadd.s32 %v4956, %v4946
        %v4958 = vadd.s32 %v4957, %v4948
        %v4959 = vand.u32 %v4936, 65535
        %v4960 = vshrl.u32 %v4936, 16
        %v4961 = vand.u32 %v4931, 65535
        %v4962 = vshrl.u32 %v4931, 16
        %v4963 = vmul.u32 %v4959, %v4961
        %v4964 = vmul.u32 %v4959, %v4962
        %v4965 = vmul.u32 %v4960, %v4961
        %v4966 = vmul.u32 %v4960, %v4962
        %v4967 = vshll.u32 %v4964, 16
        %v4968 = vshrl.u32 %v4964, 16
        %v4969 = vshll.u32 %v4965, 16
        %v4970 = vshrl.u32 %v4965, 16
        %vm4971 = vc.u32 %v4963, %v4967
        %v4972 = vsel %vm4971, 1, 0
        %v4973 = vadd.s32 %v4963, %v4967
        %v4974 = vadd.s32 %v4966, %v4972
        %vm4975 = vc.u32 %v4973, %v4969
        %v4976 = vsel %vm4975, 1, 0
        %v4977 = vadd.s32 %v4973, %v4969
        %v4978 = vadd.s32 %v4974, %v4976
        %v4979 = vadd.s32 %v4978, %v4968
        %v4980 = vadd.s32 %v4979, %v4970
        %v4981 = vmul.u32 %v4936, %v4927
        %v4982 = vadd.s32 %v4958, %v4977
        %vm4983 = vc.u32 %v4958, %v4977
        %v4984 = vadd.s32 %v4980, 1
        %v4985 = vsel %vm4983, %v4984, %v4980
        %v4986 = vadd.s32 %v4981, %v4985
        %v4987 = vadd.s32 %v4986, 536870912
        %v4988 = vshrl.u32 %v4987, 30
        %v4989 = vshll.u32 %v4988, 30
        %v4990 = vsub.s32 %v4986, %v4989
        %vm4991 = vcmp.lt.s32.totalorder %v4990, 0
        %v4992 = vsub.s32 0, %v4990
        %v4993 = vsel %vm4991, %v4992, %v4990
        %v4994 = vclz %v4993
        %v4995 = vsub.s32 %v4994, 2
        %vm4996 = vcmp.gt.s32.totalorder 0, %v4995
        %v4997 = vsel %vm4996, 0, %v4995
        %v4998 = vsub.s32 32, %v4997
        %v4999 = vshll.u32 %v4990, %v4997
        %v5000 = vshrl.u32 %v4982, %v4998
        %v5001 = vor.u32 %v4999, %v5000
        %v5002 = vsub.s32 4294967266, %v4997
        %v5003 = vadd.s32 %v5002, 127
        %v5004 = vshll.u32 %v5003, 23
        %v5005 = vor.u32 4788187, %v5004
        %v5006 = vand.u32 2147483647, %v5005
        %v5008 = vcvt.s32.f32 %v5001
        %v5009 = vmul.f32 %v5008, %v5006
        %v5010 = vxor.u32 %v5009, 2147483648
        %v5011 = vsel %vm4890, %v5010, %v5009
        %v5012 = vsub.s32 4, %v4988
        %v5013 = vsel %vm4890, %v5012, %v4988
        %v5014 = vsel %vm4889, %v234, %v5011
        %v5015 = vsel %vm4889, 0, %v5013
        %v5016 = vmul.f32 %v5014, %v5014
        %v5017 = vmul.f32 %v5016, -0.001358992
        %v5018 = vadd.f32 %v5017, 0.041655596
        %v5019 = vmul.f32 %v5016, %v5018
        %v5020 = vadd.f32 %v5019, -0.4999988
        %v5021 = vmul.f32 %v5016, %v5020
        %v5022 = vadd.f32 1.0, %v5021
        %v5023 = vmul.f32 %v5014, %v5014
        %v5024 = vmul.f32 %v5023, -0.00019511016
        %v5025 = vadd.f32 %v5024, 0.008332121
        %v5026 = vmul.f32 %v5023, %v5025
        %v5027 = vadd.f32 %v5026, -0.16666654
        %v5028 = vmul.f32 %v5023, %v5027
        %v5029 = vadd.f32 %v5028, 1.0
        %v5030 = vmul.f32 %v5029, %v5014
        %vm5031 = vweird.f32 %v234
        %v5032 = vand.u32 %v5015, 3
        %vm5033 = vcmp.lt.s32.totalorder %v5032, 2
        %vm5034 = vcmp.eq.s32.totalorder %v5032, 0
        %v5035 = vxor.u32 %v5030, 2147483648
        %v5036 = vsel %vm5034, %v5022, %v5035
        %vm5037 = vcmp.eq.s32.totalorder %v5032, 2
        %v5038 = vxor.u32 %v5022, 2147483648
        %v5039 = vsel %vm5037, %v5038, %v5030
        %v5040 = vsel %vm5033, %v5036, %v5039
        %v5041 = vsel %vm5031, nan, %v5040
        %v5042 = vand.u32 2147483647, %v235
        %vm5043 = vcmp.le.f32.partialorder %v5042, 0.7853982
        %vm5044 = vcmp.lt.s32.totalorder %v235, 0
        %v5045 = vand.u32 %v235, 2139095040
        %v5046 = vshrl.u32 %v5045, 23
        %v5047 = vsub.s32 %v5046, 127
        %v5048 = vand.u32 2147483647, %v235
        %v5049 = vand.u32 %v5048, 8388607
        %v5050 = vor.u32 %v5049, 8388608
        %v5051 = vsub.s32 0, %v5050
        %v5052 = vadd.s32 %v5047, 1
        %vm5053 = vcmp.gt.s32.totalorder %v5052, 0
        %v5054 = vsel %vm5053, %v5052, 0
        %v5055 = vshrl.u32 %v5054, 5
        %v5056 = vand.u32 %v5054, 31
        %v5057 = vsub.s32 32, %v5056
        %v5058 = vshrl.u32 683565275, %v5057
        %v5059 = vshll.u32 683565275, %v5056
        %v5060 = vshrl.u32 2475754826, %v5057
        %v5061 = vor.u32 %v5059, %v5060
        %v5062 = vshll.u32 2475754826, %v5056
        %v5063 = vshrl.u32 2131351028, %v5057
        %v5064 = vor.u32 %v5062, %v5063
        %v5065 = vshll.u32 2131351028, %v5056
        %v5066 = vshrl.u32 2102212464, %v5057
        %v5067 = vor.u32 %v5065, %v5066
        %v5068 = vshll.u32 2102212464, %v5056
        %v5069 = vshrl.u32 920167782, %v5057
        %v5070 = vor.u32 %v5068, %v5069
        %v5071 = vshll.u32 920167782, %v5056
        %v5072 = vshrl.u32 1326507024, %v5057
        %v5073 = vor.u32 %v5071, %v5072
        %vm5074 = vcmp.lt.s32.totalorder %v5055, 1
        %vm5075 = vcmp.lt.s32.totalorder %v5055, 2
        %vm5076 = vcmp.lt.s32.totalorder %v5055, 3
        %vm5077 = vcmp.lt.s32.totalorder %v5055, 4
        %v5078 = vsel %vm5074, %v5058, %v5061
        %v5079 = vsel %vm5077, %v5067, 2102212464
        %v5080 = vsel %vm5076, %v5064, %v5079
        %v5081 = vsel %vm5075, %v5078, %v5080
        %v5082 = vsel %vm5074, %v5061, %v5064
        %v5083 = vsel %vm5077, %v5070, 920167782
        %v5084 = vsel %vm5076, %v5067, %v5083
        %v5085 = vsel %vm5075, %v5082, %v5084
        %v5086 = vsel %vm5074, %v5064, %v5067
        %v5087 = vsel %vm5077, %v5073, 1326507024
        %v5088 = vsel %vm5076, %v5070, %v5087
        %v5089 = vsel %vm5075, %v5086, %v5088
        %v5090 = vshll.u32 %v5050, 8
        %v5091 = vand.u32 %v5090, 65535
        %v5092 = vshrl.u32 %v5090, 16
        %v5093 = vand.u32 %v5089, 65535
        %v5094 = vshrl.u32 %v5089, 16
        %v5095 = vmul.u32 %v5091, %v5093
        %v5096 = vmul.u32 %v5091, %v5094
        %v5097 = vmul.u32 %v5092, %v5093
        %v5098 = vmul.u32 %v5092, %v5094
        %v5099 = vshll.u32 %v5096, 16
        %v5100 = vshrl.u32 %v5096, 16
        %v5101 = vshll.u32 %v5097, 16
        %v5102 = vshrl.u32 %v5097, 16
        %vm5103 = vc.u32 %v5095, %v5099
        %v5104 = vsel %vm5103, 1, 0
        %v5105 = vadd.s32 %v5095, %v5099
        %v5106 = vadd.s32 %v5098, %v5104
        %vm5107 = vc.u32 %v5105, %v5101
        %v5108 = vsel %vm5107, 1, 0
        %v5109 = vadd.s32 %v5105, %v5101
        %v5110 = vadd.s32 %v5106, %v5108
        %v5111 = vadd.s32 %v5110, %v5100
        %v5112 = vadd.s32 %v5111, %v5102
        %v5113 = vand.u32 %v5090, 65535
        %v5114 = vshrl.u32 %v5090, 16
        %v5115 = vand.u32 %v5085, 65535
        %v5116 = vshrl.u32 %v5085, 16
        %v5117 = vmul.u32 %v5113, %v5115
        %v5118 = vmul.u32 %v5113, %v5116
        %v5119 = vmul.u32 %v5114, %v5115
        %v5120 = vmul.u32 %v5114, %v5116
        %v5121 = vshll.u32 %v5118, 16
        %v5122 = vshrl.u32 %v5118, 16
        %v5123 = vshll.u32 %v5119, 16
        %v5124 = vshrl.u32 %v5119, 16
        %vm5125 = vc.u32 %v5117, %v5121
        %v5126 = vsel %vm5125, 1, 0
        %v5127 = vadd.s32 %v5117, %v5121
        %v5128 = vadd.s32 %v5120, %v5126
        %vm5129 = vc.u32 %v5127, %v5123
        %v5130 = vsel %vm5129, 1, 0
        %v5131 = vadd.s32 %v5127, %v5123
        %v5132 = vadd.s32 %v5128, %v5130
        %v5133 = vadd.s32 %v5132, %v5122
        %v5134 = vadd.s32 %v5133, %v5124
        %v5135 = vmul.u32 %v5090, %v5081
        %v5136 = vadd.s32 %v5112, %v5131
        %vm5137 = vc.u32 %v5112, %v5131
        %v5138 = vadd.s32 %v5134, 1
        %v5139 = vsel %vm5137, %v5138, %v5134
        %v5140 = vadd.s32 %v5135, %v5139
        %v5141 = vadd.s32 %v5140, 536870912
        %v5142 = vshrl.u32 %v5141, 30
        %v5143 = vshll.u32 %v5142, 30
        %v5144 = vsub.s32 %v5140, %v5143
        %vm5145 = vcmp.lt.s32.totalorder %v5144, 0
        %v5146 = vsub.s32 0, %v5144
        %v5147 = vsel %vm5145, %v5146, %v5144
        %v5148 = vclz %v5147
        %v5149 = vsub.s32 %v5148, 2
        %vm5150 = vcmp.gt.s32.totalorder 0, %v5149
        %v5151 = vsel %vm5150, 0, %v5149
        %v5152 = vsub.s32 32, %v5151
        %v5153 = vshll.u32 %v5144, %v5151
        %v5154 = vshrl.u32 %v5136, %v5152
        %v5155 = vor.u32 %v5153, %v5154
        %v5156 = vsub.s32 4294967266, %v5151
        %v5157 = vadd.s32 %v5156, 127
        %v5158 = vshll.u32 %v5157, 23
        %v5159 = vor.u32 4788187, %v5158
        %v5160 = vand.u32 2147483647, %v5159
        %v5162 = vcvt.s32.f32 %v5155
        %v5163 = vmul.f32 %v5162, %v5160
        %v5164 = vxor.u32 %v5163, 2147483648
        %v5165 = vsel %vm5044, %v5164, %v5163
        %v5166 = vsub.s32 4, %v5142
        %v5167 = vsel %vm5044, %v5166, %v5142
        %v5168 = vsel %vm5043, %v235, %v5165
        %v5169 = vsel %vm5043, 0, %v5167
        %v5170 = vmul.f32 %v5168, %v5168
        %v5171 = vmul.f32 %v5170, -0.001358992
        %v5172 = vadd.f32 %v5171, 0.041655596
        %v5173 = vmul.f32 %v5170, %v5172
        %v5174 = vadd.f32 %v5173, -0.4999988
        %v5175 = vmul.f32 %v5170, %v5174
        %v5176 = vadd.f32 1.0, %v5175
        %v5177 = vmul.f32 %v5168, %v5168
        %v5178 = vmul.f32 %v5177, -0.00019511016
        %v5179 = vadd.f32 %v5178, 0.008332121
        %v5180 = vmul.f32 %v5177, %v5179
        %v5181 = vadd.f32 %v5180, -0.16666654
        %v5182 = vmul.f32 %v5177, %v5181
        %v5183 = vadd.f32 %v5182, 1.0
        %v5184 = vmul.f32 %v5183, %v5168
        %vm5185 = vweird.f32 %v235
        %v5186 = vand.u32 %v5169, 3
        %vm5187 = vcmp.lt.s32.totalorder %v5186, 2
        %vm5188 = vcmp.eq.s32.totalorder %v5186, 0
        %v5189 = vxor.u32 %v5184, 2147483648
        %v5190 = vsel %vm5188, %v5176, %v5189
        %vm5191 = vcmp.eq.s32.totalorder %v5186, 2
        %v5192 = vxor.u32 %v5176, 2147483648
        %v5193 = vsel %vm5191, %v5192, %v5184
        %v5194 = vsel %vm5187, %v5190, %v5193
        %v5195 = vsel %vm5185, nan, %v5194
        %5196 = vst [vmem:[%s110 + $0x8] sm:$0xff] %v2885
        %5197 = vst [vmem:[%s110 + $0x18] sm:$0xff] %v3039
        %5198 = vst [vmem:[%s110 + $0x28] sm:$0xff] %v3193
        %5199 = vst [vmem:[%s110 + $0x38] sm:$0xff] %v3347
        %5200 = vst [vmem:[%s110 + $0x48] sm:$0xff] %v3501
        %5201 = vst [vmem:[%s110 + $0x58] sm:$0xff] %v3655
        %5202 = vst [vmem:[%s110 + $0x68] sm:$0xff] %v3809
        %5203 = vst [vmem:[%s110 + $0x78] sm:$0xff] %v3963
        %5204 = vst [vmem:[%s110 + $0x88] sm:$0xff] %v4117
        %5205 = vst [vmem:[%s110 + $0x98] sm:$0xff] %v4271
        %5206 = vst [vmem:[%s110 + $0xa8] sm:$0xff] %v4425
        %5207 = vst [vmem:[%s110 + $0xb8] sm:$0xff] %v4579
        %5208 = vst [vmem:[%s110 + $0xc8] sm:$0xff] %v4733
        %5209 = vst [vmem:[%s110 + $0xd8] sm:$0xff] %v4887
        %5210 = vst [vmem:[%s110 + $0xe8] sm:$0xff] %v5041
        %5211 = vst [vmem:[%s110 + $0xf8] sm:$0xff] %v5195
        %s5212 = sand.u32 %s49, 1
        %s5213 = scalar_lea.sflag [#allocation3], %s5212
        %s5214 = sand.u32 %s49, 1
        %s5215 = smul.addr %s5214, 256
        %s5216 = scalar_lea.vmem [#allocation2], %s5215
        // Predicated region
        $region25: #{tpu_custom_call.1} parent=23 // pred_check
          %p5217 = pneg %p59
        $region26: #{tpu_custom_call.1} parent=23 // pred_check_branch
          %5219 = sbr.rel (%p5217) target = $region28
        $region27: #{tpu_custom_call.1} parent=23 // pred_region
          %s5220 = smul.u32 16, %s15
          %5222 = vsyncadd %s5213, 0
          %s5223 = smul.addr %s5220, 2
          %s5224 = smul.addr %s5223, 8
          %s5225 = scalar_lea.hbm %s1, %s5224
          %s5226 = sshll.u32 %s5216, 4
          %s5227 = int_to_ptr.vmem [resolvable:$true] %s5226
          %s5228 = sshll.u32 %s5225, 4
          %s5229 = int_to_ptr.hbm [resolvable:$true] %s5228
          %5234 = dma.vmem_to_hbm [thread:$0]  %s5227, 4096, %s5229, %s5213, 256, 256, 16
        $region28: #{tpu_custom_call.1} parent=23 // pred_fallthru
          _
      $region24: #{tpu_custom_call.1} parent=5 // pred_fallthru
        _
      %p5235 = scmp.le.s32.totalorder 2, %s10
      // Predicated region
      $region29: #{tpu_custom_call.1} parent=5 // pred_check
        %p5236 = pneg %p5235
      $region30: #{tpu_custom_call.1} parent=5 // pred_check_branch
        %5238 = sbr.rel (%p5236) target = $region32
      $region31: #{tpu_custom_call.1} parent=5 // pred_region
        %s5239 = ssub.s32 %s10, 2
        // Predicated region
        $region33: #{tpu_custom_call.1} parent=31 // pred_check
          %p5240 = pneg %p65
        $region34: #{tpu_custom_call.1} parent=31 // pred_check_branch
          %5242 = sbr.rel (%p5240) target = $region36
        $region35: #{tpu_custom_call.1} parent=31 // pred_region
          %s5243 = sand.u32 %s50, 1
          %s5244 = scalar_lea.sflag [#allocation3], %s5243
          %s5245 = sand.u32 %s50, 1
          %s5246 = smul.addr %s5245, 256
          %s5247 = scalar_lea.vmem [#allocation2], %s5246
          %5249 = dma.done %s5244, 4096
        $region36: #{tpu_custom_call.1} parent=31 // pred_fallthru
          _
      $region32: #{tpu_custom_call.1} parent=5 // pred_fallthru
        _
    $region6: #{tpu_custom_call.1} parent=1 // loop_footer
      %s14 = sadd.s32 1, %s10
    $region7: #{tpu_custom_call.1} parent=1 // loop_footer_branch
      %9 = sbr.rel target = $region3
    $region8: #{tpu_custom_call.1} parent=1 // loop_exit
      _
    %5250 = vsyncpa [#allocation3], 1
    %s5251 = scalar_lea.sflag [#allocation3], 1
    %5252 = vsyncpa %s5251, 1

</llo_original>
